<compile_context>
chip_gen: v6e
topology: v6e:2x2x1
jax: 0.10.0
libtpu: 0.0.40
codegen_flags: <defaults>
</compile_context>

<pallas_src>
import jax
import jax.numpy as jnp
import numpy as np
from jax.experimental import pallas as pl
from jax.experimental.pallas import tpu as pltpu

NUM_HEADS = 8
LN_EPS = 1e-5

# Set to jnp.bfloat16 on v6e/v7x to halve weight traffic and double MXU rate (accumulation
# stays f32 via preferred_element_type).  LayerNorm / softmax math stays f32 regardless
# (v5e has no bf16 VPU/EUP).  Default f32 keeps the numerical check against the reference tight.
MXU_INPUT_DTYPE = jnp.float32


def _mx(x):
    return x.astype(MXU_INPUT_DTYPE)


def _layernorm(x, w, b):
    mu = jnp.mean(x, axis=-1, keepdims=True)
    var = jnp.mean((x - mu) ** 2, axis=-1, keepdims=True)
    return (x - mu) * jax.lax.rsqrt(var + LN_EPS) * w + b


def _attn_core(q, k, v, wo, bo, ln1w, ln1b, ln2w, ln2b, head_mask):
    """BANP MultiHeadAttn core on already-projected q (Nt,D), k/v (Nc,D)."""
    # TODO(synk): mask support (masked_fill before softmax) not implemented; forward uses mask=None.
    Nt, D = q.shape
    Nc = k.shape[0]
    H = NUM_HEADS
    scale = 1.0 / float(np.sqrt(D))                     # BANP scales by sqrt(dim_out)

    # Lane-dense per-head attention: mask q and v per head instead of slicing 16-lane chunks.
    qm = (q * scale)[None, :, :] * head_mask            # (H, Nt, D)
    kb = jnp.broadcast_to(k[None, :, :], (H, Nc, D))    # (H, Nc, D)
    vm = v[None, :, :] * head_mask                      # (H, Nc, D)

    logits = jnp.einsum("hqd,hkd->hqk", qm, kb, preferred_element_type=jnp.float32)
    m = jnp.max(logits, axis=-1, keepdims=True)
    e = jnp.exp(logits - m)
    probs = e * pl.reciprocal(jnp.sum(e, axis=-1, keepdims=True), approx=True)
    ctx = jnp.einsum("hqk,hkd->hqd", probs, vm, preferred_element_type=jnp.float32)  # (H,Nt,D)
    attn = jnp.sum(ctx, axis=0)                         # disjoint head lane blocks -> sum == concat

    out = _layernorm(q + attn, ln1w, ln1b)
    ff = jnp.maximum(jnp.dot(_mx(out), _mx(wo), preferred_element_type=jnp.float32) + bo, 0.0)
    return _layernorm(out + ff, ln2w, ln2b)


def _encoder_kernel(
    xc_ref, yc_ref, xt_ref,
    qk_w1_ref, qk_b1_ref, qk_w2_ref, qk_b2_ref,
    v_w1x_ref, v_w1y_ref, v_b1_ref, v_w2_ref, v_b2_ref,
    sa_wqkv_ref, sa_wo_ref, sa_bo_ref, sa_ln1w_ref, sa_ln1b_ref, sa_ln2w_ref, sa_ln2b_ref,
    ca_wq_ref, ca_wk_ref, ca_wv_ref, ca_wo_ref, ca_bo_ref, ca_ln1w_ref, ca_ln1b_ref, ca_ln2w_ref, ca_ln2b_ref,
    o_ref,
):
    D = qk_w2_ref.shape[1]
    dh = D // NUM_HEADS

    # Per-head lane masks (H, 1, D); hoisted once and reused by both attention blocks.
    h_ids = jax.lax.broadcasted_iota(jnp.int32, (NUM_HEADS, 1, D), 0)
    l_ids = jax.lax.broadcasted_iota(jnp.int32, (NUM_HEADS, 1, D), 2)
    head_mask = ((l_ids >= h_ids * dh) & (l_ids < (h_ids + 1) * dh)).astype(jnp.float32)

    xc = xc_ref[...]                                    # (Nc, 1)
    yc = yc_ref[...]                                    # (Nc, 1)
    xt = xt_ref[...]                                    # (Nt, 1)

    # net_qk: Linear(1,D) as a VPU broadcast MAD (no K=1 MXU dot) -> ReLU -> Linear(D,D).
    def net_qk(x):
        h = jnp.maximum(x * qk_w1_ref[...] + qk_b1_ref[...], 0.0)
        return jnp.dot(_mx(h), _mx(qk_w2_ref[...]), preferred_element_type=jnp.float32) + qk_b2_ref[...]

    q_feat = net_qk(xt)                                 # (Nt, D)
    k_feat = net_qk(xc)                                 # (Nc, D)

    # net_v on concat([xc, yc], -1): two broadcast MADs (no wrapper concat, no K=2 dot).
    hv = jnp.maximum(xc * v_w1x_ref[...] + yc * v_w1y_ref[...] + v_b1_ref[...], 0.0)
    v_feat = jnp.dot(_mx(hv), _mx(v_w2_ref[...]), preferred_element_type=jnp.float32) + v_b2_ref[...]

    # --- self-attention on v (q_in == k_in == v_in): fused (Nc,D)@(D,3D) qkv projection ---
    qkv = jnp.dot(_mx(v_feat), _mx(sa_wqkv_ref[...]), preferred_element_type=jnp.float32)  # (Nc, 3D)
    v_sa = _attn_core(
        qkv[:, 0:D], qkv[:, D:2 * D], qkv[:, 2 * D:3 * D],
        sa_wo_ref[...], sa_bo_ref[...],
        sa_ln1w_ref[...], sa_ln1b_ref[...], sa_ln2w_ref[...], sa_ln2b_ref[...],
        head_mask,
    )

    # --- cross-attention: q/k/v come from three different tensors -> separate projections ---
    q_p = jnp.dot(_mx(q_feat), _mx(ca_wq_ref[...]), preferred_element_type=jnp.float32)
    k_p = jnp.dot(_mx(k_feat), _mx(ca_wk_ref[...]), preferred_element_type=jnp.float32)
    v_p = jnp.dot(_mx(v_sa), _mx(ca_wv_ref[...]), preferred_element_type=jnp.float32)
    out = _attn_core(
        q_p, k_p, v_p,
        ca_wo_ref[...], ca_bo_ref[...],
        ca_ln1w_ref[...], ca_ln1b_ref[...], ca_ln2w_ref[...], ca_ln2b_ref[...],
        head_mask,
    )
    o_ref[...] = out.astype(o_ref.dtype)


# ---------------------------------------------------------------------------
# Wrapper: single fused pallas_call over the batch grid
# ---------------------------------------------------------------------------
def cross_attn_encoder(params, xc, yc, xt):
    """Forward pass of CrossAttnEncoder (use_lat=False, self_attn=True, mask=None)."""
    B, Nc, dim_x = xc.shape
    dim_y = yc.shape[-1]
    Nt = xt.shape[1]
    assert dim_x == 1 and dim_y == 1, "kernel implements the module defaults dim_x=dim_y=1"

    qk_w1, qk_b1, qk_w2, qk_b2 = params["net_qk"]
    v_w1, v_b1, v_w2, v_b2 = params["net_v"]
    sa_wq, sa_wk, sa_wv, sa_wo, sa_bo, sa_ln1w, sa_ln1b, sa_ln2w, sa_ln2b = params["self_attn"]
    ca_wq, ca_wk, ca_wv, ca_wo, ca_bo, ca_ln1w, ca_ln1b, ca_ln2w, ca_ln2b = params["attn"]
    D = qk_w2.shape[1]

    # Host-side weight packing (fused qkv projection for the self-attention; split net_v's
    # first-layer weight so xc/yc can be fed separately without a wrapper concat).
    sa_wqkv = jnp.concatenate([sa_wq, sa_wk, sa_wv], axis=1)        # (D, 3D)
    v_w1x = v_w1[:dim_x, :]                                         # (1, D)
    v_w1y = v_w1[dim_x:, :]                                         # (1, D)

    weights = (
        qk_w1, qk_b1, qk_w2, qk_b2,
        v_w1x, v_w1y, v_b1, v_w2, v_b2,
        sa_wqkv, sa_wo, sa_bo, sa_ln1w, sa_ln1b, sa_ln2w, sa_ln2b,
        ca_wq, ca_wk, ca_wv, ca_wo, ca_bo, ca_ln1w, ca_ln1b, ca_ln2w, ca_ln2b,
    )

    in_specs = [
        pl.BlockSpec((None, Nc, dim_x), lambda b: (b, 0, 0)),       # xc  -> kernel sees (Nc, 1)
        pl.BlockSpec((None, Nc, dim_y), lambda b: (b, 0, 0)),       # yc  -> (Nc, 1)
        pl.BlockSpec((None, Nt, dim_x), lambda b: (b, 0, 0)),       # xt  -> (Nt, 1)
    ] + [pl.BlockSpec(w.shape, lambda b: (0, 0)) for w in weights]  # broadcast weight blocks

    return pl.pallas_call(
        _encoder_kernel,
        out_shape=jax.ShapeDtypeStruct((B, Nt, D), jnp.float32),
        grid=(B,),
        in_specs=in_specs,
        out_specs=pl.BlockSpec((None, Nt, D), lambda b: (b, 0, 0)),
        compiler_params=pltpu.CompilerParams(dimension_semantics=("parallel",)),
    )(xc, yc, xt, *weights)


# ---------------------------------------------------------------------------
# Deterministic parameter init (PyTorch-Linear-style uniform, via JAX PRNG)
# ---------------------------------------------------------------------------
def _init_linear(key, din, dout, bias=True):
    kw, kb = jax.random.split(key)
    lim = 1.0 / np.sqrt(din)
    w = jax.random.uniform(kw, (din, dout), jnp.float32, -lim, lim)
    if bias:
        b = jax.random.uniform(kb, (1, dout), jnp.float32, -lim, lim)
        return w, b
    return (w,)


def _init_mlp2(key, din, dhid, dout):
    k1, k2 = jax.random.split(key)
    w1, b1 = _init_linear(k1, din, dhid)
    w2, b2 = _init_linear(k2, dhid, dout)
    return (w1, b1, w2, b2)


def _init_mha(key, d):
    kq, kk, kv, ko = jax.random.split(key, 4)
    (wq,) = _init_linear(kq, d, d, bias=False)
    (wk,) = _init_linear(kk, d, d, bias=False)
    (wv,) = _init_linear(kv, d, d, bias=False)
    wo, bo = _init_linear(ko, d, d)
    ones = jnp.ones((1, d), jnp.float32)
    zeros = jnp.zeros((1, d), jnp.float32)
    return (wq, wk, wv, wo, bo, ones, zeros, ones, zeros)


# ---------------------------------------------------------------------------
# Pure-JAX reference (for correctness check)
# ---------------------------------------------------------------------------
def _ref_mlp2(x, p):
    w1, b1, w2, b2 = p
    return jax.nn.relu(x @ w1 + b1) @ w2 + b2


def _ref_ln(x, w, b):
    mu = jnp.mean(x, -1, keepdims=True)
    var = jnp.mean((x - mu) ** 2, -1, keepdims=True)
    return (x - mu) / jnp.sqrt(var + LN_EPS) * w + b


def _ref_mha(q_in, k_in, v_in, p):
    wq, wk, wv, wo, bo, ln1w, ln1b, ln2w, ln2b = p
    q, k, v = q_in @ wq, k_in @ wk, v_in @ wv
    B, Nt, D = q.shape
    Nc = k.shape[1]
    H, dh = NUM_HEADS, D // NUM_HEADS
    qh = q.reshape(B, Nt, H, dh).transpose(0, 2, 1, 3)
    kh = k.reshape(B, Nc, H, dh).transpose(0, 2, 1, 3)
    vh = v.reshape(B, Nc, H, dh).transpose(0, 2, 1, 3)
    logits = jnp.einsum("bhqd,bhkd->bhqk", qh, kh) / jnp.sqrt(jnp.float32(D))
    a = jax.nn.softmax(logits, -1)
    o = jnp.einsum("bhqk,bhkd->bhqd", a, vh).transpose(0, 2, 1, 3).reshape(B, Nt, D)
    out = _ref_ln(q + o, ln1w, ln1b)
    out = _ref_ln(out + jax.nn.relu(out @ wo + bo), ln2w, ln2b)
    return out


def _ref_forward(params, xc, yc, xt):
    q = _ref_mlp2(xt, params["net_qk"])
    k = _ref_mlp2(xc, params["net_qk"])
    v = _ref_mlp2(jnp.concatenate([xc, yc], -1), params["net_v"])
    v = _ref_mha(v, v, v, params["self_attn"])
    return _ref_mha(q, k, v, params["attn"])


# ---------------------------------------------------------------------------
if __name__ == "__main__":
    B, Nc, Nt = 2, 8, 8
    dim_x, dim_y, dim_hid = 1, 1, 128

    key = jax.random.PRNGKey(0)
    k_qk, k_v, k_sa, k_ca, k_xc, k_yc, k_xt = jax.random.split(key, 7)

    params = {
        "net_qk": _init_mlp2(k_qk, dim_x, dim_hid, dim_hid),
        "net_v": _init_mlp2(k_v, dim_x + dim_y, dim_hid, dim_hid),
        "self_attn": _init_mha(k_sa, dim_hid),
        "attn": _init_mha(k_ca, dim_hid),
    }

    xc = jax.random.normal(k_xc, (B, Nc, dim_x), jnp.float32)
    yc = jax.random.normal(k_yc, (B, Nc, dim_y), jnp.float32)
    xt = jax.random.normal(k_xt, (B, Nt, dim_x), jnp.float32)

    fwd = jax.jit(cross_attn_encoder)
    out = jax.block_until_ready(fwd(params, xc, yc, xt))
    assert out.shape == (B, Nt, dim_hid)

    # Tolerance accounts for the EUP approximate reciprocal in the softmax normalization
    # (everything else is f32 with f32 MXU accumulation).
    ref = _ref_forward(params, xc, yc, xt)
    np.testing.assert_allclose(np.asarray(out), np.asarray(ref), rtol=5e-3, atol=5e-3)

    print("KERNEL_OK")
</pallas_src>

<mosaic_0001>
module attributes {stable_mosaic.version = 11 : i64} {
  func.func @_encoder_kernel(%arg0: i32, %arg1: memref<1x8x1xf32, #tpu.memory_space<vmem>>, %arg2: memref<1x8x1xf32, #tpu.memory_space<vmem>>, %arg3: memref<1x8x1xf32, #tpu.memory_space<vmem>>, %arg4: memref<1x128xf32, #tpu.memory_space<vmem>>, %arg5: memref<1x128xf32, #tpu.memory_space<vmem>>, %arg6: memref<128x128xf32, #tpu.memory_space<vmem>>, %arg7: memref<1x128xf32, #tpu.memory_space<vmem>>, %arg8: memref<1x128xf32, #tpu.memory_space<vmem>>, %arg9: memref<1x128xf32, #tpu.memory_space<vmem>>, %arg10: memref<1x128xf32, #tpu.memory_space<vmem>>, %arg11: memref<128x128xf32, #tpu.memory_space<vmem>>, %arg12: memref<1x128xf32, #tpu.memory_space<vmem>>, %arg13: memref<128x384xf32, #tpu.memory_space<vmem>>, %arg14: memref<128x128xf32, #tpu.memory_space<vmem>>, %arg15: memref<1x128xf32, #tpu.memory_space<vmem>>, %arg16: memref<1x128xf32, #tpu.memory_space<vmem>>, %arg17: memref<1x128xf32, #tpu.memory_space<vmem>>, %arg18: memref<1x128xf32, #tpu.memory_space<vmem>>, %arg19: memref<1x128xf32, #tpu.memory_space<vmem>>, %arg20: memref<128x128xf32, #tpu.memory_space<vmem>>, %arg21: memref<128x128xf32, #tpu.memory_space<vmem>>, %arg22: memref<128x128xf32, #tpu.memory_space<vmem>>, %arg23: memref<128x128xf32, #tpu.memory_space<vmem>>, %arg24: memref<1x128xf32, #tpu.memory_space<vmem>>, %arg25: memref<1x128xf32, #tpu.memory_space<vmem>>, %arg26: memref<1x128xf32, #tpu.memory_space<vmem>>, %arg27: memref<1x128xf32, #tpu.memory_space<vmem>>, %arg28: memref<1x128xf32, #tpu.memory_space<vmem>>, %arg29: memref<1x8x128xf32, #tpu.memory_space<vmem>>) attributes {dimension_semantics = [#tpu.dimension_semantics<parallel>], iteration_bounds = array<i64: 2>, scalar_prefetch = 0 : i64, scratch_operands = 0 : i64, tpu.core_type = #tpu.core_type<tc>, window_params = [{transform_indices = @transform_0, window_bounds = array<i64: 1, 8, 1>}, {transform_indices = @transform_1, window_bounds = array<i64: 1, 8, 1>}, {transform_indices = @transform_2, window_bounds = array<i64: 1, 8, 1>}, {pipeline_mode = #tpu.pipeline_mode<synchronous>, transform_indices = @transform_3, window_bounds = array<i64: 1, 128>}, {pipeline_mode = #tpu.pipeline_mode<synchronous>, transform_indices = @transform_4, window_bounds = array<i64: 1, 128>}, {pipeline_mode = #tpu.pipeline_mode<synchronous>, transform_indices = @transform_5, window_bounds = array<i64: 128, 128>}, {pipeline_mode = #tpu.pipeline_mode<synchronous>, transform_indices = @transform_6, window_bounds = array<i64: 1, 128>}, {pipeline_mode = #tpu.pipeline_mode<synchronous>, transform_indices = @transform_7, window_bounds = array<i64: 1, 128>}, {pipeline_mode = #tpu.pipeline_mode<synchronous>, transform_indices = @transform_8, window_bounds = array<i64: 1, 128>}, {pipeline_mode = #tpu.pipeline_mode<synchronous>, transform_indices = @transform_9, window_bounds = array<i64: 1, 128>}, {pipeline_mode = #tpu.pipeline_mode<synchronous>, transform_indices = @transform_10, window_bounds = array<i64: 128, 128>}, {pipeline_mode = #tpu.pipeline_mode<synchronous>, transform_indices = @transform_11, window_bounds = array<i64: 1, 128>}, {pipeline_mode = #tpu.pipeline_mode<synchronous>, transform_indices = @transform_12, window_bounds = array<i64: 128, 384>}, {pipeline_mode = #tpu.pipeline_mode<synchronous>, transform_indices = @transform_13, window_bounds = array<i64: 128, 128>}, {pipeline_mode = #tpu.pipeline_mode<synchronous>, transform_indices = @transform_14, window_bounds = array<i64: 1, 128>}, {pipeline_mode = #tpu.pipeline_mode<synchronous>, transform_indices = @transform_15, window_bounds = array<i64: 1, 128>}, {pipeline_mode = #tpu.pipeline_mode<synchronous>, transform_indices = @transform_16, window_bounds = array<i64: 1, 128>}, {pipeline_mode = #tpu.pipeline_mode<synchronous>, transform_indices = @transform_17, window_bounds = array<i64: 1, 128>}, {pipeline_mode = #tpu.pipeline_mode<synchronous>, transform_indices = @transform_18, window_bounds = array<i64: 1, 128>}, {pipeline_mode = #tpu.pipeline_mode<synchronous>, transform_indices = @transform_19, window_bounds = array<i64: 128, 128>}, {pipeline_mode = #tpu.pipeline_mode<synchronous>, transform_indices = @transform_20, window_bounds = array<i64: 128, 128>}, {pipeline_mode = #tpu.pipeline_mode<synchronous>, transform_indices = @transform_21, window_bounds = array<i64: 128, 128>}, {pipeline_mode = #tpu.pipeline_mode<synchronous>, transform_indices = @transform_22, window_bounds = array<i64: 128, 128>}, {pipeline_mode = #tpu.pipeline_mode<synchronous>, transform_indices = @transform_23, window_bounds = array<i64: 1, 128>}, {pipeline_mode = #tpu.pipeline_mode<synchronous>, transform_indices = @transform_24, window_bounds = array<i64: 1, 128>}, {pipeline_mode = #tpu.pipeline_mode<synchronous>, transform_indices = @transform_25, window_bounds = array<i64: 1, 128>}, {pipeline_mode = #tpu.pipeline_mode<synchronous>, transform_indices = @transform_26, window_bounds = array<i64: 1, 128>}, {pipeline_mode = #tpu.pipeline_mode<synchronous>, transform_indices = @transform_27, window_bounds = array<i64: 1, 128>}, {transform_indices = @transform_28, window_bounds = array<i64: 1, 8, 128>}]} {
    %0 = tpu.iota {dimensions = array<i32: 0>} : vector<8x1x128xi32>
    %1 = tpu.iota {dimensions = array<i32: 2>} : vector<8x1x128xi32>
    %c16_i32 = arith.constant 16 : i32
    %2 = vector.broadcast %c16_i32 : i32 to vector<8x1x128xi32>
    %3 = arith.muli %0, %2 : vector<8x1x128xi32>
    %4 = arith.cmpi sge, %1, %3 : vector<8x1x128xi32>
    %c1_i32 = arith.constant 1 : i32
    %5 = vector.broadcast %c1_i32 : i32 to vector<8x1x128xi32>
    %6 = arith.addi %0, %5 : vector<8x1x128xi32>
    %c16_i32_0 = arith.constant 16 : i32
    %7 = vector.broadcast %c16_i32_0 : i32 to vector<8x1x128xi32>
    %8 = arith.muli %6, %7 : vector<8x1x128xi32>
    %9 = arith.cmpi slt, %1, %8 : vector<8x1x128xi32>
    %10 = arith.andi %4, %9 : vector<8x1x128xi1>
    %11 = arith.extui %10 : vector<8x1x128xi1> to vector<8x1x128xi32>
    %12 = arith.sitofp %11 : vector<8x1x128xi32> to vector<8x1x128xf32>
    %c0 = arith.constant 0 : index
    %c0_1 = arith.constant 0 : index
    %c0_2 = arith.constant 0 : index
    %13 = vector.load %arg1[%c0, %c0_1, %c0_2] : memref<1x8x1xf32, #tpu.memory_space<vmem>>, vector<1x8x1xf32>
    %14 = vector.shape_cast %13 : vector<1x8x1xf32> to vector<8x1xf32>
    %c0_3 = arith.constant 0 : index
    %c0_4 = arith.constant 0 : index
    %c0_5 = arith.constant 0 : index
    %15 = vector.load %arg2[%c0_3, %c0_4, %c0_5] : memref<1x8x1xf32, #tpu.memory_space<vmem>>, vector<1x8x1xf32>
    %16 = vector.shape_cast %15 : vector<1x8x1xf32> to vector<8x1xf32>
    %c0_6 = arith.constant 0 : index
    %c0_7 = arith.constant 0 : index
    %c0_8 = arith.constant 0 : index
    %17 = vector.load %arg3[%c0_6, %c0_7, %c0_8] : memref<1x8x1xf32, #tpu.memory_space<vmem>>, vector<1x8x1xf32>
    %18 = vector.shape_cast %17 : vector<1x8x1xf32> to vector<8x1xf32>
    %c0_9 = arith.constant 0 : index
    %c0_10 = arith.constant 0 : index
    %19 = vector.load %arg4[%c0_9, %c0_10] : memref<1x128xf32, #tpu.memory_space<vmem>>, vector<1x128xf32>
    %20 = vector.broadcast %18 : vector<8x1xf32> to vector<8x128xf32>
    %21 = vector.broadcast %19 : vector<1x128xf32> to vector<8x128xf32>
    %22 = arith.mulf %20, %21 : vector<8x128xf32>
    %c0_11 = arith.constant 0 : index
    %c0_12 = arith.constant 0 : index
    %23 = vector.load %arg5[%c0_11, %c0_12] : memref<1x128xf32, #tpu.memory_space<vmem>>, vector<1x128xf32>
    %24 = vector.broadcast %23 : vector<1x128xf32> to vector<8x128xf32>
    %25 = arith.addf %22, %24 : vector<8x128xf32>
    %cst = arith.constant 0.000000e+00 : f32
    %26 = vector.broadcast %cst : f32 to vector<8x128xf32>
    %27 = arith.maximumf %25, %26 : vector<8x128xf32>
    %c0_13 = arith.constant 0 : index
    %c0_14 = arith.constant 0 : index
    %28 = vector.load %arg6[%c0_13, %c0_14] : memref<128x128xf32, #tpu.memory_space<vmem>>, vector<128x128xf32>
    %cst_15 = arith.constant dense<0.000000e+00> : vector<8x128xf32>
    %29 = tpu.matmul %27, %28, %cst_15 {dimension_numbers = #tpu.dot_dimension_numbers<[1], [0], [0], [1], [0, 0, 1, 1], [], []>} : vector<8x128xf32>, vector<128x128xf32>, vector<8x128xf32> -> vector<8x128xf32>
    %c0_16 = arith.constant 0 : index
    %c0_17 = arith.constant 0 : index
    %30 = vector.load %arg7[%c0_16, %c0_17] : memref<1x128xf32, #tpu.memory_space<vmem>>, vector<1x128xf32>
    %31 = vector.broadcast %30 : vector<1x128xf32> to vector<8x128xf32>
    %32 = arith.addf %29, %31 : vector<8x128xf32>
    %c0_18 = arith.constant 0 : index
    %c0_19 = arith.constant 0 : index
    %33 = vector.load %arg4[%c0_18, %c0_19] : memref<1x128xf32, #tpu.memory_space<vmem>>, vector<1x128xf32>
    %34 = vector.broadcast %14 : vector<8x1xf32> to vector<8x128xf32>
    %35 = vector.broadcast %33 : vector<1x128xf32> to vector<8x128xf32>
    %36 = arith.mulf %34, %35 : vector<8x128xf32>
    %c0_20 = arith.constant 0 : index
    %c0_21 = arith.constant 0 : index
    %37 = vector.load %arg5[%c0_20, %c0_21] : memref<1x128xf32, #tpu.memory_space<vmem>>, vector<1x128xf32>
    %38 = vector.broadcast %37 : vector<1x128xf32> to vector<8x128xf32>
    %39 = arith.addf %36, %38 : vector<8x128xf32>
    %cst_22 = arith.constant 0.000000e+00 : f32
    %40 = vector.broadcast %cst_22 : f32 to vector<8x128xf32>
    %41 = arith.maximumf %39, %40 : vector<8x128xf32>
    %c0_23 = arith.constant 0 : index
    %c0_24 = arith.constant 0 : index
    %42 = vector.load %arg6[%c0_23, %c0_24] : memref<128x128xf32, #tpu.memory_space<vmem>>, vector<128x128xf32>
    %cst_25 = arith.constant dense<0.000000e+00> : vector<8x128xf32>
    %43 = tpu.matmul %41, %42, %cst_25 {dimension_numbers = #tpu.dot_dimension_numbers<[1], [0], [0], [1], [0, 0, 1, 1], [], []>} : vector<8x128xf32>, vector<128x128xf32>, vector<8x128xf32> -> vector<8x128xf32>
    %c0_26 = arith.constant 0 : index
    %c0_27 = arith.constant 0 : index
    %44 = vector.load %arg7[%c0_26, %c0_27] : memref<1x128xf32, #tpu.memory_space<vmem>>, vector<1x128xf32>
    %45 = vector.broadcast %44 : vector<1x128xf32> to vector<8x128xf32>
    %46 = arith.addf %43, %45 : vector<8x128xf32>
    %c0_28 = arith.constant 0 : index
    %c0_29 = arith.constant 0 : index
    %47 = vector.load %arg8[%c0_28, %c0_29] : memref<1x128xf32, #tpu.memory_space<vmem>>, vector<1x128xf32>
    %48 = vector.broadcast %14 : vector<8x1xf32> to vector<8x128xf32>
    %49 = vector.broadcast %47 : vector<1x128xf32> to vector<8x128xf32>
    %50 = arith.mulf %48, %49 : vector<8x128xf32>
    %c0_30 = arith.constant 0 : index
    %c0_31 = arith.constant 0 : index
    %51 = vector.load %arg9[%c0_30, %c0_31] : memref<1x128xf32, #tpu.memory_space<vmem>>, vector<1x128xf32>
    %52 = vector.broadcast %16 : vector<8x1xf32> to vector<8x128xf32>
    %53 = vector.broadcast %51 : vector<1x128xf32> to vector<8x128xf32>
    %54 = arith.mulf %52, %53 : vector<8x128xf32>
    %55 = arith.addf %50, %54 : vector<8x128xf32>
    %c0_32 = arith.constant 0 : index
    %c0_33 = arith.constant 0 : index
    %56 = vector.load %arg10[%c0_32, %c0_33] : memref<1x128xf32, #tpu.memory_space<vmem>>, vector<1x128xf32>
    %57 = vector.broadcast %56 : vector<1x128xf32> to vector<8x128xf32>
    %58 = arith.addf %55, %57 : vector<8x128xf32>
    %cst_34 = arith.constant 0.000000e+00 : f32
    %59 = vector.broadcast %cst_34 : f32 to vector<8x128xf32>
    %60 = arith.maximumf %58, %59 : vector<8x128xf32>
    %c0_35 = arith.constant 0 : index
    %c0_36 = arith.constant 0 : index
    %61 = vector.load %arg11[%c0_35, %c0_36] : memref<128x128xf32, #tpu.memory_space<vmem>>, vector<128x128xf32>
    %cst_37 = arith.constant dense<0.000000e+00> : vector<8x128xf32>
    %62 = tpu.matmul %60, %61, %cst_37 {dimension_numbers = #tpu.dot_dimension_numbers<[1], [0], [0], [1], [0, 0, 1, 1], [], []>} : vector<8x128xf32>, vector<128x128xf32>, vector<8x128xf32> -> vector<8x128xf32>
    %c0_38 = arith.constant 0 : index
    %c0_39 = arith.constant 0 : index
    %63 = vector.load %arg12[%c0_38, %c0_39] : memref<1x128xf32, #tpu.memory_space<vmem>>, vector<1x128xf32>
    %64 = vector.broadcast %63 : vector<1x128xf32> to vector<8x128xf32>
    %65 = arith.addf %62, %64 : vector<8x128xf32>
    %c0_40 = arith.constant 0 : index
    %c0_41 = arith.constant 0 : index
    %66 = vector.load %arg13[%c0_40, %c0_41] : memref<128x384xf32, #tpu.memory_space<vmem>>, vector<128x384xf32>
    %cst_42 = arith.constant dense<0.000000e+00> : vector<8x384xf32>
    %67 = tpu.matmul %65, %66, %cst_42 {dimension_numbers = #tpu.dot_dimension_numbers<[1], [0], [0], [1], [0, 0, 1, 1], [], []>} : vector<8x128xf32>, vector<128x384xf32>, vector<8x384xf32> -> vector<8x384xf32>
    %68 = vector.extract_strided_slice %67 {offsets = [0, 0], sizes = [8, 128], strides = [1, 1]} : vector<8x384xf32> to vector<8x128xf32>
    %69 = vector.extract_strided_slice %67 {offsets = [0, 128], sizes = [8, 128], strides = [1, 1]} : vector<8x384xf32> to vector<8x128xf32>
    %70 = vector.extract_strided_slice %67 {offsets = [0, 256], sizes = [8, 128], strides = [1, 1]} : vector<8x384xf32> to vector<8x128xf32>
    %c0_43 = arith.constant 0 : index
    %c0_44 = arith.constant 0 : index
    %71 = vector.load %arg14[%c0_43, %c0_44] : memref<128x128xf32, #tpu.memory_space<vmem>>, vector<128x128xf32>
    %c0_45 = arith.constant 0 : index
    %c0_46 = arith.constant 0 : index
    %72 = vector.load %arg15[%c0_45, %c0_46] : memref<1x128xf32, #tpu.memory_space<vmem>>, vector<1x128xf32>
    %c0_47 = arith.constant 0 : index
    %c0_48 = arith.constant 0 : index
    %73 = vector.load %arg16[%c0_47, %c0_48] : memref<1x128xf32, #tpu.memory_space<vmem>>, vector<1x128xf32>
    %c0_49 = arith.constant 0 : index
    %c0_50 = arith.constant 0 : index
    %74 = vector.load %arg17[%c0_49, %c0_50] : memref<1x128xf32, #tpu.memory_space<vmem>>, vector<1x128xf32>
    %c0_51 = arith.constant 0 : index
    %c0_52 = arith.constant 0 : index
    %75 = vector.load %arg18[%c0_51, %c0_52] : memref<1x128xf32, #tpu.memory_space<vmem>>, vector<1x128xf32>
    %c0_53 = arith.constant 0 : index
    %c0_54 = arith.constant 0 : index
    %76 = vector.load %arg19[%c0_53, %c0_54] : memref<1x128xf32, #tpu.memory_space<vmem>>, vector<1x128xf32>
    %cst_55 = arith.constant 0.0883883461 : f32
    %77 = vector.broadcast %cst_55 : f32 to vector<8x128xf32>
    %78 = arith.mulf %68, %77 : vector<8x128xf32>
    %79 = vector.shape_cast %78 : vector<8x128xf32> to vector<1x8x128xf32>
    %80 = vector.broadcast %79 : vector<1x8x128xf32> to vector<8x8x128xf32>
    %81 = vector.broadcast %12 : vector<8x1x128xf32> to vector<8x8x128xf32>
    %82 = arith.mulf %80, %81 : vector<8x8x128xf32>
    %83 = vector.shape_cast %69 : vector<8x128xf32> to vector<1x8x128xf32>
    %84 = vector.shape_cast %83 : vector<1x8x128xf32> to vector<1x8x128xf32>
    %85 = vector.broadcast %84 : vector<1x8x128xf32> to vector<8x8x128xf32>
    %86 = vector.shape_cast %70 : vector<8x128xf32> to vector<1x8x128xf32>
    %87 = vector.broadcast %86 : vector<1x8x128xf32> to vector<8x8x128xf32>
    %88 = vector.broadcast %12 : vector<8x1x128xf32> to vector<8x8x128xf32>
    %89 = arith.mulf %87, %88 : vector<8x8x128xf32>
    "tpu.trace_start"() <{level = 10 : i32, message = "hqd,hkd->hqk"}> : () -> ()
    %cst_56 = arith.constant dense<0.000000e+00> : vector<8x8x8xf32>
    %90 = tpu.matmul %82, %85, %cst_56 {dimension_numbers = #tpu.dot_dimension_numbers<[2], [2], [1], [1], [0, 0, 0, 1, 1, 1], [0], [0]>} : vector<8x8x128xf32>, vector<8x8x128xf32>, vector<8x8x8xf32> -> vector<8x8x8xf32>
    "tpu.trace_stop"() : () -> ()
    %cst_57 = arith.constant dense<0xFF800000> : vector<8x8xf32>
    %91 = vector.multi_reduction <maximumf>, %90, %cst_57 [2] : vector<8x8x8xf32> to vector<8x8xf32>
    %92 = vector.shape_cast %91 : vector<8x8xf32> to vector<8x8x1xf32>
    %93 = vector.broadcast %92 : vector<8x8x1xf32> to vector<8x8x8xf32>
    %94 = arith.subf %90, %93 : vector<8x8x8xf32>
    %95 = math.exp %94 : vector<8x8x8xf32>
    %cst_58 = arith.constant dense<0.000000e+00> : vector<8x8xf32>
    %96 = vector.multi_reduction <add>, %95, %cst_58 [2] : vector<8x8x8xf32> to vector<8x8xf32>
    %97 = vector.shape_cast %96 : vector<8x8xf32> to vector<8x8x1xf32>
    %98 = tpu.reciprocal %97 {approx = true} : vector<8x8x1xf32> -> vector<8x8x1xf32>
    %99 = vector.broadcast %98 : vector<8x8x1xf32> to vector<8x8x8xf32>
    %100 = arith.mulf %95, %99 : vector<8x8x8xf32>
    "tpu.trace_start"() <{level = 10 : i32, message = "hqk,hkd->hqd"}> : () -> ()
    %cst_59 = arith.constant dense<0.000000e+00> : vector<8x8x128xf32>
    %101 = tpu.matmul %100, %89, %cst_59 {dimension_numbers = #tpu.dot_dimension_numbers<[2], [1], [1], [2], [0, 0, 0, 1, 1, 2], [0], [0]>} : vector<8x8x8xf32>, vector<8x8x128xf32>, vector<8x8x128xf32> -> vector<8x8x128xf32>
    "tpu.trace_stop"() : () -> ()
    %cst_60 = arith.constant dense<0.000000e+00> : vector<8x128xf32>
    %102 = vector.multi_reduction <add>, %101, %cst_60 [0] : vector<8x8x128xf32> to vector<8x128xf32>
    %103 = arith.addf %68, %102 : vector<8x128xf32>
    %cst_61 = arith.constant dense<0.000000e+00> : vector<8xf32>
    %104 = vector.multi_reduction <add>, %103, %cst_61 [1] : vector<8x128xf32> to vector<8xf32>
    %105 = vector.shape_cast %104 : vector<8xf32> to vector<8x1xf32>
    %cst_62 = arith.constant 1.280000e+02 : f32
    %106 = vector.broadcast %cst_62 : f32 to vector<8x1xf32>
    %107 = arith.divf %105, %106 : vector<8x1xf32>
    %108 = vector.broadcast %107 : vector<8x1xf32> to vector<8x128xf32>
    %109 = arith.subf %103, %108 : vector<8x128xf32>
    %110 = arith.mulf %109, %109 : vector<8x128xf32>
    %cst_63 = arith.constant dense<0.000000e+00> : vector<8xf32>
    %111 = vector.multi_reduction <add>, %110, %cst_63 [1] : vector<8x128xf32> to vector<8xf32>
    %112 = vector.shape_cast %111 : vector<8xf32> to vector<8x1xf32>
    %cst_64 = arith.constant 1.280000e+02 : f32
    %113 = vector.broadcast %cst_64 : f32 to vector<8x1xf32>
    %114 = arith.divf %112, %113 : vector<8x1xf32>
    %115 = vector.broadcast %107 : vector<8x1xf32> to vector<8x128xf32>
    %116 = arith.subf %103, %115 : vector<8x128xf32>
    %cst_65 = arith.constant 9.99999974E-6 : f32
    %117 = vector.broadcast %cst_65 : f32 to vector<8x1xf32>
    %118 = arith.addf %114, %117 : vector<8x1xf32>
    %119 = math.rsqrt %118 : vector<8x1xf32>
    %120 = vector.broadcast %119 : vector<8x1xf32> to vector<8x128xf32>
    %121 = arith.mulf %116, %120 : vector<8x128xf32>
    %122 = vector.broadcast %73 : vector<1x128xf32> to vector<8x128xf32>
    %123 = arith.mulf %121, %122 : vector<8x128xf32>
    %124 = vector.broadcast %74 : vector<1x128xf32> to vector<8x128xf32>
    %125 = arith.addf %123, %124 : vector<8x128xf32>
    %cst_66 = arith.constant dense<0.000000e+00> : vector<8x128xf32>
    %126 = tpu.matmul %125, %71, %cst_66 {dimension_numbers = #tpu.dot_dimension_numbers<[1], [0], [0], [1], [0, 0, 1, 1], [], []>} : vector<8x128xf32>, vector<128x128xf32>, vector<8x128xf32> -> vector<8x128xf32>
    %127 = vector.broadcast %72 : vector<1x128xf32> to vector<8x128xf32>
    %128 = arith.addf %126, %127 : vector<8x128xf32>
    %cst_67 = arith.constant 0.000000e+00 : f32
    %129 = vector.broadcast %cst_67 : f32 to vector<8x128xf32>
    %130 = arith.maximumf %128, %129 : vector<8x128xf32>
    %131 = arith.addf %125, %130 : vector<8x128xf32>
    %cst_68 = arith.constant dense<0.000000e+00> : vector<8xf32>
    %132 = vector.multi_reduction <add>, %131, %cst_68 [1] : vector<8x128xf32> to vector<8xf32>
    %133 = vector.shape_cast %132 : vector<8xf32> to vector<8x1xf32>
    %cst_69 = arith.constant 1.280000e+02 : f32
    %134 = vector.broadcast %cst_69 : f32 to vector<8x1xf32>
    %135 = arith.divf %133, %134 : vector<8x1xf32>
    %136 = vector.broadcast %135 : vector<8x1xf32> to vector<8x128xf32>
    %137 = arith.subf %131, %136 : vector<8x128xf32>
    %138 = arith.mulf %137, %137 : vector<8x128xf32>
    %cst_70 = arith.constant dense<0.000000e+00> : vector<8xf32>
    %139 = vector.multi_reduction <add>, %138, %cst_70 [1] : vector<8x128xf32> to vector<8xf32>
    %140 = vector.shape_cast %139 : vector<8xf32> to vector<8x1xf32>
    %cst_71 = arith.constant 1.280000e+02 : f32
    %141 = vector.broadcast %cst_71 : f32 to vector<8x1xf32>
    %142 = arith.divf %140, %141 : vector<8x1xf32>
    %143 = vector.broadcast %135 : vector<8x1xf32> to vector<8x128xf32>
    %144 = arith.subf %131, %143 : vector<8x128xf32>
    %cst_72 = arith.constant 9.99999974E-6 : f32
    %145 = vector.broadcast %cst_72 : f32 to vector<8x1xf32>
    %146 = arith.addf %142, %145 : vector<8x1xf32>
    %147 = math.rsqrt %146 : vector<8x1xf32>
    %148 = vector.broadcast %147 : vector<8x1xf32> to vector<8x128xf32>
    %149 = arith.mulf %144, %148 : vector<8x128xf32>
    %150 = vector.broadcast %75 : vector<1x128xf32> to vector<8x128xf32>
    %151 = arith.mulf %149, %150 : vector<8x128xf32>
    %152 = vector.broadcast %76 : vector<1x128xf32> to vector<8x128xf32>
    %153 = arith.addf %151, %152 : vector<8x128xf32>
    %c0_73 = arith.constant 0 : index
    %c0_74 = arith.constant 0 : index
    %154 = vector.load %arg20[%c0_73, %c0_74] : memref<128x128xf32, #tpu.memory_space<vmem>>, vector<128x128xf32>
    %cst_75 = arith.constant dense<0.000000e+00> : vector<8x128xf32>
    %155 = tpu.matmul %32, %154, %cst_75 {dimension_numbers = #tpu.dot_dimension_numbers<[1], [0], [0], [1], [0, 0, 1, 1], [], []>} : vector<8x128xf32>, vector<128x128xf32>, vector<8x128xf32> -> vector<8x128xf32>
    %c0_76 = arith.constant 0 : index
    %c0_77 = arith.constant 0 : index
    %156 = vector.load %arg21[%c0_76, %c0_77] : memref<128x128xf32, #tpu.memory_space<vmem>>, vector<128x128xf32>
    %cst_78 = arith.constant dense<0.000000e+00> : vector<8x128xf32>
    %157 = tpu.matmul %46, %156, %cst_78 {dimension_numbers = #tpu.dot_dimension_numbers<[1], [0], [0], [1], [0, 0, 1, 1], [], []>} : vector<8x128xf32>, vector<128x128xf32>, vector<8x128xf32> -> vector<8x128xf32>
    %c0_79 = arith.constant 0 : index
    %c0_80 = arith.constant 0 : index
    %158 = vector.load %arg22[%c0_79, %c0_80] : memref<128x128xf32, #tpu.memory_space<vmem>>, vector<128x128xf32>
    %cst_81 = arith.constant dense<0.000000e+00> : vector<8x128xf32>
    %159 = tpu.matmul %153, %158, %cst_81 {dimension_numbers = #tpu.dot_dimension_numbers<[1], [0], [0], [1], [0, 0, 1, 1], [], []>} : vector<8x128xf32>, vector<128x128xf32>, vector<8x128xf32> -> vector<8x128xf32>
    %c0_82 = arith.constant 0 : index
    %c0_83 = arith.constant 0 : index
    %160 = vector.load %arg23[%c0_82, %c0_83] : memref<128x128xf32, #tpu.memory_space<vmem>>, vector<128x128xf32>
    %c0_84 = arith.constant 0 : index
    %c0_85 = arith.constant 0 : index
    %161 = vector.load %arg24[%c0_84, %c0_85] : memref<1x128xf32, #tpu.memory_space<vmem>>, vector<1x128xf32>
    %c0_86 = arith.constant 0 : index
    %c0_87 = arith.constant 0 : index
    %162 = vector.load %arg25[%c0_86, %c0_87] : memref<1x128xf32, #tpu.memory_space<vmem>>, vector<1x128xf32>
    %c0_88 = arith.constant 0 : index
    %c0_89 = arith.constant 0 : index
    %163 = vector.load %arg26[%c0_88, %c0_89] : memref<1x128xf32, #tpu.memory_space<vmem>>, vector<1x128xf32>
    %c0_90 = arith.constant 0 : index
    %c0_91 = arith.constant 0 : index
    %164 = vector.load %arg27[%c0_90, %c0_91] : memref<1x128xf32, #tpu.memory_space<vmem>>, vector<1x128xf32>
    %c0_92 = arith.constant 0 : index
    %c0_93 = arith.constant 0 : index
    %165 = vector.load %arg28[%c0_92, %c0_93] : memref<1x128xf32, #tpu.memory_space<vmem>>, vector<1x128xf32>
    %cst_94 = arith.constant 0.0883883461 : f32
    %166 = vector.broadcast %cst_94 : f32 to vector<8x128xf32>
    %167 = arith.mulf %155, %166 : vector<8x128xf32>
    %168 = vector.shape_cast %167 : vector<8x128xf32> to vector<1x8x128xf32>
    %169 = vector.broadcast %168 : vector<1x8x128xf32> to vector<8x8x128xf32>
    %170 = vector.broadcast %12 : vector<8x1x128xf32> to vector<8x8x128xf32>
    %171 = arith.mulf %169, %170 : vector<8x8x128xf32>
    %172 = vector.shape_cast %157 : vector<8x128xf32> to vector<1x8x128xf32>
    %173 = vector.shape_cast %172 : vector<1x8x128xf32> to vector<1x8x128xf32>
    %174 = vector.broadcast %173 : vector<1x8x128xf32> to vector<8x8x128xf32>
    %175 = vector.shape_cast %159 : vector<8x128xf32> to vector<1x8x128xf32>
    %176 = vector.broadcast %175 : vector<1x8x128xf32> to vector<8x8x128xf32>
    %177 = vector.broadcast %12 : vector<8x1x128xf32> to vector<8x8x128xf32>
    %178 = arith.mulf %176, %177 : vector<8x8x128xf32>
    "tpu.trace_start"() <{level = 10 : i32, message = "hqd,hkd->hqk"}> : () -> ()
    %cst_95 = arith.constant dense<0.000000e+00> : vector<8x8x8xf32>
    %179 = tpu.matmul %171, %174, %cst_95 {dimension_numbers = #tpu.dot_dimension_numbers<[2], [2], [1], [1], [0, 0, 0, 1, 1, 1], [0], [0]>} : vector<8x8x128xf32>, vector<8x8x128xf32>, vector<8x8x8xf32> -> vector<8x8x8xf32>
    "tpu.trace_stop"() : () -> ()
    %cst_96 = arith.constant dense<0xFF800000> : vector<8x8xf32>
    %180 = vector.multi_reduction <maximumf>, %179, %cst_96 [2] : vector<8x8x8xf32> to vector<8x8xf32>
    %181 = vector.shape_cast %180 : vector<8x8xf32> to vector<8x8x1xf32>
    %182 = vector.broadcast %181 : vector<8x8x1xf32> to vector<8x8x8xf32>
    %183 = arith.subf %179, %182 : vector<8x8x8xf32>
    %184 = math.exp %183 : vector<8x8x8xf32>
    %cst_97 = arith.constant dense<0.000000e+00> : vector<8x8xf32>
    %185 = vector.multi_reduction <add>, %184, %cst_97 [2] : vector<8x8x8xf32> to vector<8x8xf32>
    %186 = vector.shape_cast %185 : vector<8x8xf32> to vector<8x8x1xf32>
    %187 = tpu.reciprocal %186 {approx = true} : vector<8x8x1xf32> -> vector<8x8x1xf32>
    %188 = vector.broadcast %187 : vector<8x8x1xf32> to vector<8x8x8xf32>
    %189 = arith.mulf %184, %188 : vector<8x8x8xf32>
    "tpu.trace_start"() <{level = 10 : i32, message = "hqk,hkd->hqd"}> : () -> ()
    %cst_98 = arith.constant dense<0.000000e+00> : vector<8x8x128xf32>
    %190 = tpu.matmul %189, %178, %cst_98 {dimension_numbers = #tpu.dot_dimension_numbers<[2], [1], [1], [2], [0, 0, 0, 1, 1, 2], [0], [0]>} : vector<8x8x8xf32>, vector<8x8x128xf32>, vector<8x8x128xf32> -> vector<8x8x128xf32>
    "tpu.trace_stop"() : () -> ()
    %cst_99 = arith.constant dense<0.000000e+00> : vector<8x128xf32>
    %191 = vector.multi_reduction <add>, %190, %cst_99 [0] : vector<8x8x128xf32> to vector<8x128xf32>
    %192 = arith.addf %155, %191 : vector<8x128xf32>
    %cst_100 = arith.constant dense<0.000000e+00> : vector<8xf32>
    %193 = vector.multi_reduction <add>, %192, %cst_100 [1] : vector<8x128xf32> to vector<8xf32>
    %194 = vector.shape_cast %193 : vector<8xf32> to vector<8x1xf32>
    %cst_101 = arith.constant 1.280000e+02 : f32
    %195 = vector.broadcast %cst_101 : f32 to vector<8x1xf32>
    %196 = arith.divf %194, %195 : vector<8x1xf32>
    %197 = vector.broadcast %196 : vector<8x1xf32> to vector<8x128xf32>
    %198 = arith.subf %192, %197 : vector<8x128xf32>
    %199 = arith.mulf %198, %198 : vector<8x128xf32>
    %cst_102 = arith.constant dense<0.000000e+00> : vector<8xf32>
    %200 = vector.multi_reduction <add>, %199, %cst_102 [1] : vector<8x128xf32> to vector<8xf32>
    %201 = vector.shape_cast %200 : vector<8xf32> to vector<8x1xf32>
    %cst_103 = arith.constant 1.280000e+02 : f32
    %202 = vector.broadcast %cst_103 : f32 to vector<8x1xf32>
    %203 = arith.divf %201, %202 : vector<8x1xf32>
    %204 = vector.broadcast %196 : vector<8x1xf32> to vector<8x128xf32>
    %205 = arith.subf %192, %204 : vector<8x128xf32>
    %cst_104 = arith.constant 9.99999974E-6 : f32
    %206 = vector.broadcast %cst_104 : f32 to vector<8x1xf32>
    %207 = arith.addf %203, %206 : vector<8x1xf32>
    %208 = math.rsqrt %207 : vector<8x1xf32>
    %209 = vector.broadcast %208 : vector<8x1xf32> to vector<8x128xf32>
    %210 = arith.mulf %205, %209 : vector<8x128xf32>
    %211 = vector.broadcast %162 : vector<1x128xf32> to vector<8x128xf32>
    %212 = arith.mulf %210, %211 : vector<8x128xf32>
    %213 = vector.broadcast %163 : vector<1x128xf32> to vector<8x128xf32>
    %214 = arith.addf %212, %213 : vector<8x128xf32>
    %cst_105 = arith.constant dense<0.000000e+00> : vector<8x128xf32>
    %215 = tpu.matmul %214, %160, %cst_105 {dimension_numbers = #tpu.dot_dimension_numbers<[1], [0], [0], [1], [0, 0, 1, 1], [], []>} : vector<8x128xf32>, vector<128x128xf32>, vector<8x128xf32> -> vector<8x128xf32>
    %216 = vector.broadcast %161 : vector<1x128xf32> to vector<8x128xf32>
    %217 = arith.addf %215, %216 : vector<8x128xf32>
    %cst_106 = arith.constant 0.000000e+00 : f32
    %218 = vector.broadcast %cst_106 : f32 to vector<8x128xf32>
    %219 = arith.maximumf %217, %218 : vector<8x128xf32>
    %220 = arith.addf %214, %219 : vector<8x128xf32>
    %cst_107 = arith.constant dense<0.000000e+00> : vector<8xf32>
    %221 = vector.multi_reduction <add>, %220, %cst_107 [1] : vector<8x128xf32> to vector<8xf32>
    %222 = vector.shape_cast %221 : vector<8xf32> to vector<8x1xf32>
    %cst_108 = arith.constant 1.280000e+02 : f32
    %223 = vector.broadcast %cst_108 : f32 to vector<8x1xf32>
    %224 = arith.divf %222, %223 : vector<8x1xf32>
    %225 = vector.broadcast %224 : vector<8x1xf32> to vector<8x128xf32>
    %226 = arith.subf %220, %225 : vector<8x128xf32>
    %227 = arith.mulf %226, %226 : vector<8x128xf32>
    %cst_109 = arith.constant dense<0.000000e+00> : vector<8xf32>
    %228 = vector.multi_reduction <add>, %227, %cst_109 [1] : vector<8x128xf32> to vector<8xf32>
    %229 = vector.shape_cast %228 : vector<8xf32> to vector<8x1xf32>
    %cst_110 = arith.constant 1.280000e+02 : f32
    %230 = vector.broadcast %cst_110 : f32 to vector<8x1xf32>
    %231 = arith.divf %229, %230 : vector<8x1xf32>
    %232 = vector.broadcast %224 : vector<8x1xf32> to vector<8x128xf32>
    %233 = arith.subf %220, %232 : vector<8x128xf32>
    %cst_111 = arith.constant 9.99999974E-6 : f32
    %234 = vector.broadcast %cst_111 : f32 to vector<8x1xf32>
    %235 = arith.addf %231, %234 : vector<8x1xf32>
    %236 = math.rsqrt %235 : vector<8x1xf32>
    %237 = vector.broadcast %236 : vector<8x1xf32> to vector<8x128xf32>
    %238 = arith.mulf %233, %237 : vector<8x128xf32>
    %239 = vector.broadcast %164 : vector<1x128xf32> to vector<8x128xf32>
    %240 = arith.mulf %238, %239 : vector<8x128xf32>
    %241 = vector.broadcast %165 : vector<1x128xf32> to vector<8x128xf32>
    %242 = arith.addf %240, %241 : vector<8x128xf32>
    %c0_112 = arith.constant 0 : index
    %c0_113 = arith.constant 0 : index
    %c0_114 = arith.constant 0 : index
    %243 = vector.load %arg29[%c0_112, %c0_113, %c0_114] : memref<1x8x128xf32, #tpu.memory_space<vmem>>, vector<1x8x128xf32>
    %244 = vector.shape_cast %243 : vector<1x8x128xf32> to vector<8x128xf32>
    %245 = vector.shape_cast %242 : vector<8x128xf32> to vector<1x8x128xf32>
    tpu.vector_store %arg29[%c0_112, %c0_113, %c0_114], %245 {strides = array<i32>} : memref<1x8x128xf32, #tpu.memory_space<vmem>>, vector<1x8x128xf32>,
    return
  }
  func.func @transform_0(%arg0: i32) -> (i32, i32, i32) {
    %c0_i32 = arith.constant 0 : i32
    %c0_i32_0 = arith.constant 0 : i32
    %c0_i32_1 = arith.constant 0 : i32
    return %arg0, %c0_i32, %c0_i32_0 : i32, i32, i32
  }
  func.func @transform_1(%arg0: i32) -> (i32, i32, i32) {
    %c0_i32 = arith.constant 0 : i32
    %c0_i32_0 = arith.constant 0 : i32
    %c0_i32_1 = arith.constant 0 : i32
    return %arg0, %c0_i32, %c0_i32_0 : i32, i32, i32
  }
  func.func @transform_2(%arg0: i32) -> (i32, i32, i32) {
    %c0_i32 = arith.constant 0 : i32
    %c0_i32_0 = arith.constant 0 : i32
    %c0_i32_1 = arith.constant 0 : i32
    return %arg0, %c0_i32, %c0_i32_0 : i32, i32, i32
  }
  func.func @transform_3(%arg0: i32) -> (i32, i32) {
    %c0_i32 = arith.constant 0 : i32
    %c0_i32_0 = arith.constant 0 : i32
    %c0_i32_1 = arith.constant 0 : i32
    return %c0_i32, %c0_i32_0 : i32, i32
  }
  func.func @transform_4(%arg0: i32) -> (i32, i32) {
    %c0_i32 = arith.constant 0 : i32
    %c0_i32_0 = arith.constant 0 : i32
    %c0_i32_1 = arith.constant 0 : i32
    return %c0_i32, %c0_i32_0 : i32, i32
  }
  func.func @transform_5(%arg0: i32) -> (i32, i32) {
    %c0_i32 = arith.constant 0 : i32
    %c0_i32_0 = arith.constant 0 : i32
    %c0_i32_1 = arith.constant 0 : i32
    return %c0_i32, %c0_i32_0 : i32, i32
  }
  func.func @transform_6(%arg0: i32) -> (i32, i32) {
    %c0_i32 = arith.constant 0 : i32
    %c0_i32_0 = arith.constant 0 : i32
    %c0_i32_1 = arith.constant 0 : i32
    return %c0_i32, %c0_i32_0 : i32, i32
  }
  func.func @transform_7(%arg0: i32) -> (i32, i32) {
    %c0_i32 = arith.constant 0 : i32
    %c0_i32_0 = arith.constant 0 : i32
    %c0_i32_1 = arith.constant 0 : i32
    return %c0_i32, %c0_i32_0 : i32, i32
  }
  func.func @transform_8(%arg0: i32) -> (i32, i32) {
    %c0_i32 = arith.constant 0 : i32
    %c0_i32_0 = arith.constant 0 : i32
    %c0_i32_1 = arith.constant 0 : i32
    return %c0_i32, %c0_i32_0 : i32, i32
  }
  func.func @transform_9(%arg0: i32) -> (i32, i32) {
    %c0_i32 = arith.constant 0 : i32
    %c0_i32_0 = arith.constant 0 : i32
    %c0_i32_1 = arith.constant 0 : i32
    return %c0_i32, %c0_i32_0 : i32, i32
  }
  func.func @transform_10(%arg0: i32) -> (i32, i32) {
    %c0_i32 = arith.constant 0 : i32
    %c0_i32_0 = arith.constant 0 : i32
    %c0_i32_1 = arith.constant 0 : i32
    return %c0_i32, %c0_i32_0 : i32, i32
  }
  func.func @transform_11(%arg0: i32) -> (i32, i32) {
    %c0_i32 = arith.constant 0 : i32
    %c0_i32_0 = arith.constant 0 : i32
    %c0_i32_1 = arith.constant 0 : i32
    return %c0_i32, %c0_i32_0 : i32, i32
  }
  func.func @transform_12(%arg0: i32) -> (i32, i32) {
    %c0_i32 = arith.constant 0 : i32
    %c0_i32_0 = arith.constant 0 : i32
    %c0_i32_1 = arith.constant 0 : i32
    return %c0_i32, %c0_i32_0 : i32, i32
  }
  func.func @transform_13(%arg0: i32) -> (i32, i32) {
    %c0_i32 = arith.constant 0 : i32
    %c0_i32_0 = arith.constant 0 : i32
    %c0_i32_1 = arith.constant 0 : i32
    return %c0_i32, %c0_i32_0 : i32, i32
  }
  func.func @transform_14(%arg0: i32) -> (i32, i32) {
    %c0_i32 = arith.constant 0 : i32
    %c0_i32_0 = arith.constant 0 : i32
    %c0_i32_1 = arith.constant 0 : i32
    return %c0_i32, %c0_i32_0 : i32, i32
  }
  func.func @transform_15(%arg0: i32) -> (i32, i32) {
    %c0_i32 = arith.constant 0 : i32
    %c0_i32_0 = arith.constant 0 : i32
    %c0_i32_1 = arith.constant 0 : i32
    return %c0_i32, %c0_i32_0 : i32, i32
  }
  func.func @transform_16(%arg0: i32) -> (i32, i32) {
    %c0_i32 = arith.constant 0 : i32
    %c0_i32_0 = arith.constant 0 : i32
    %c0_i32_1 = arith.constant 0 : i32
    return %c0_i32, %c0_i32_0 : i32, i32
  }
  func.func @transform_17(%arg0: i32) -> (i32, i32) {
    %c0_i32 = arith.constant 0 : i32
    %c0_i32_0 = arith.constant 0 : i32
    %c0_i32_1 = arith.constant 0 : i32
    return %c0_i32, %c0_i32_0 : i32, i32
  }
  func.func @transform_18(%arg0: i32) -> (i32, i32) {
    %c0_i32 = arith.constant 0 : i32
    %c0_i32_0 = arith.constant 0 : i32
    %c0_i32_1 = arith.constant 0 : i32
    return %c0_i32, %c0_i32_0 : i32, i32
  }
  func.func @transform_19(%arg0: i32) -> (i32, i32) {
    %c0_i32 = arith.constant 0 : i32
    %c0_i32_0 = arith.constant 0 : i32
    %c0_i32_1 = arith.constant 0 : i32
    return %c0_i32, %c0_i32_0 : i32, i32
  }
  func.func @transform_20(%arg0: i32) -> (i32, i32) {
    %c0_i32 = arith.constant 0 : i32
    %c0_i32_0 = arith.constant 0 : i32
    %c0_i32_1 = arith.constant 0 : i32
    return %c0_i32, %c0_i32_0 : i32, i32
  }
  func.func @transform_21(%arg0: i32) -> (i32, i32) {
    %c0_i32 = arith.constant 0 : i32
    %c0_i32_0 = arith.constant 0 : i32
    %c0_i32_1 = arith.constant 0 : i32
    return %c0_i32, %c0_i32_0 : i32, i32
  }
  func.func @transform_22(%arg0: i32) -> (i32, i32) {
    %c0_i32 = arith.constant 0 : i32
    %c0_i32_0 = arith.constant 0 : i32
    %c0_i32_1 = arith.constant 0 : i32
    return %c0_i32, %c0_i32_0 : i32, i32
  }
  func.func @transform_23(%arg0: i32) -> (i32, i32) {
    %c0_i32 = arith.constant 0 : i32
    %c0_i32_0 = arith.constant 0 : i32
    %c0_i32_1 = arith.constant 0 : i32
    return %c0_i32, %c0_i32_0 : i32, i32
  }
  func.func @transform_24(%arg0: i32) -> (i32, i32) {
    %c0_i32 = arith.constant 0 : i32
    %c0_i32_0 = arith.constant 0 : i32
    %c0_i32_1 = arith.constant 0 : i32
    return %c0_i32, %c0_i32_0 : i32, i32
  }
  func.func @transform_25(%arg0: i32) -> (i32, i32) {
    %c0_i32 = arith.constant 0 : i32
    %c0_i32_0 = arith.constant 0 : i32
    %c0_i32_1 = arith.constant 0 : i32
    return %c0_i32, %c0_i32_0 : i32, i32
  }
  func.func @transform_26(%arg0: i32) -> (i32, i32) {
    %c0_i32 = arith.constant 0 : i32
    %c0_i32_0 = arith.constant 0 : i32
    %c0_i32_1 = arith.constant 0 : i32
    return %c0_i32, %c0_i32_0 : i32, i32
  }
  func.func @transform_27(%arg0: i32) -> (i32, i32) {
    %c0_i32 = arith.constant 0 : i32
    %c0_i32_0 = arith.constant 0 : i32
    %c0_i32_1 = arith.constant 0 : i32
    return %c0_i32, %c0_i32_0 : i32, i32
  }
  func.func @transform_28(%arg0: i32) -> (i32, i32, i32) {
    %c0_i32 = arith.constant 0 : i32
    %c0_i32_0 = arith.constant 0 : i32
    %c0_i32_1 = arith.constant 0 : i32
    return %arg0, %c0_i32, %c0_i32_0 : i32, i32, i32
  }
}

</mosaic_0001>

<llo_original>
// kernel: cross_attn_encoder.1
$region0: #{cross_attn_encoder.1}
  #allocation0 [shape = 'u32[]', space=smem, size = 0x4, offset = 0x4, fixed_abs, tag = 'smem constant byte address 0x4 - core index']
  #allocation1 [shape = 'u32[144,128]{1,0:T(1,128)}', space=vmem, size = 0x12000, scoped, tag = 'internal scratch']
  %s0 = inlined_call_operand.vmem [shape: f32[2,8,1], index: 0, kind: input, shape index: {}]
  %s1 = inlined_call_operand.vmem [shape: f32[2,8,1], index: 1, kind: input, shape index: {}]
  %s2 = inlined_call_operand.vmem [shape: f32[2,8,1], index: 2, kind: input, shape index: {}]
  %s3 = inlined_call_operand.vmem [shape: f32[1,128], index: 3, kind: input, shape index: {}]
  %s4 = inlined_call_operand.vmem [shape: f32[1,128], index: 4, kind: input, shape index: {}]
  %s5 = inlined_call_operand.vmem [shape: f32[128,128], index: 5, kind: input, shape index: {}]
  %s6 = inlined_call_operand.vmem [shape: f32[1,128], index: 6, kind: input, shape index: {}]
  %s7 = inlined_call_operand.vmem [shape: f32[1,128], index: 7, kind: input, shape index: {}]
  %s8 = inlined_call_operand.vmem [shape: f32[1,128], index: 8, kind: input, shape index: {}]
  %s9 = inlined_call_operand.vmem [shape: f32[1,128], index: 9, kind: input, shape index: {}]
  %s10 = inlined_call_operand.vmem [shape: f32[128,128], index: 10, kind: input, shape index: {}]
  %s11 = inlined_call_operand.vmem [shape: f32[1,128], index: 11, kind: input, shape index: {}]
  %s12 = inlined_call_operand.vmem [shape: f32[128,384], index: 12, kind: input, shape index: {}]
  %s13 = inlined_call_operand.vmem [shape: f32[128,128], index: 13, kind: input, shape index: {}]
  %s14 = inlined_call_operand.vmem [shape: f32[1,128], index: 14, kind: input, shape index: {}]
  %s15 = inlined_call_operand.vmem [shape: f32[1,128], index: 15, kind: input, shape index: {}]
  %s16 = inlined_call_operand.vmem [shape: f32[1,128], index: 16, kind: input, shape index: {}]
  %s17 = inlined_call_operand.vmem [shape: f32[1,128], index: 17, kind: input, shape index: {}]
  %s18 = inlined_call_operand.vmem [shape: f32[1,128], index: 18, kind: input, shape index: {}]
  %s19 = inlined_call_operand.vmem [shape: f32[128,128], index: 19, kind: input, shape index: {}]
  %s20 = inlined_call_operand.vmem [shape: f32[128,128], index: 20, kind: input, shape index: {}]
  %s21 = inlined_call_operand.vmem [shape: f32[128,128], index: 21, kind: input, shape index: {}]
  %s22 = inlined_call_operand.hbm [shape: f32[128,128], index: 22, kind: input, shape index: {}]
  %s23 = inlined_call_operand.vmem [shape: f32[1,128], index: 23, kind: input, shape index: {}]
  %s24 = inlined_call_operand.vmem [shape: f32[1,128], index: 24, kind: input, shape index: {}]
  %s25 = inlined_call_operand.vmem [shape: f32[1,128], index: 25, kind: input, shape index: {}]
  %s26 = inlined_call_operand.vmem [shape: f32[1,128], index: 26, kind: input, shape index: {}]
  %s27 = inlined_call_operand.vmem [shape: f32[1,128], index: 27, kind: input, shape index: {}]
  %s28 = inlined_call_operand.hbm [shape: f32[2,8,128], index: 28, kind: output, shape index: {}]
  %s29 = sld [smem:[#allocation0]]
  $region149: #{cross_attn_encoder.1} parent=0
    _
  %s31 = ssub.s32 1, %s29
  %s32 = scalar_select 0, %s31, %s29
  $region1: #{cross_attn_encoder.1} parent=0
    #allocation2 [shape = 'u8[65536]{0}', space=vmem, size = 0x10000, scoped, tag = 'input window, operand 22, single buffered']
    #allocation3 [shape = 's32[2]{0}', space=sflag, size = 0x8, scoped, tag = 'scoped memory for cross_attn_encoder.1']
    #allocation4 [shape = 's32[2]{0}', space=sflag, size = 0x8, scoped, tag = 'scoped memory for cross_attn_encoder.1']
    #allocation5 [shape = 'u8[8192]{0}', space=vmem, size = 0x2000, scoped, tag = 'output window, operand 0']
    %33 = vsyncpa [#allocation3], 0
    %34 = vsyncpa [#allocation4], 0
    %s35 = scalar_lea.sflag [#allocation4], 1
    %36 = vsyncpa %s35, 0
    loop: start=0, step=1, limit=4
    $region2: #{cross_attn_encoder.1} parent=1 // loop_pre_header
      _
    $region3: #{cross_attn_encoder.1} parent=1 // loop_header
      %s38 = sphi 0, %s42
      %p39 = scmp.ge.s32.totalorder %s38, 4
      %s48 = sphi 0, %s50
      %s51 = sphi 0, %s48
      %s52 = sphi 0, %s51
      %s68 = sphi 0, %s52
      %s74 = sphi 0, %s76
      %s77 = sphi 0, %s74
      %s78 = sphi 0, %s77
      %s94 = sphi 0, %s78
      %s100 = sphi 0, %s102
      %s103 = sphi 0, %s100
      %s104 = sphi 0, %s103
      %s120 = sphi 0, %s104
      %s124 = sphi 0, %s124
      %s126 = sphi 0, %s124
      %s127 = sphi 0, %s126
      %s141 = sphi 0, %s127
      %s145 = sphi 0, %s145
      %s147 = sphi 0, %s145
      %s148 = sphi 0, %s147
      %s162 = sphi 0, %s148
      %s166 = sphi 0, %s166
      %s168 = sphi 0, %s166
      %s169 = sphi 0, %s168
      %s183 = sphi 0, %s169
      %s187 = sphi 0, %s187
      %s189 = sphi 0, %s187
      %s190 = sphi 0, %s189
      %s204 = sphi 0, %s190
      %s208 = sphi 0, %s208
      %s210 = sphi 0, %s208
      %s211 = sphi 0, %s210
      %s225 = sphi 0, %s211
      %s229 = sphi 0, %s229
      %s231 = sphi 0, %s229
      %s232 = sphi 0, %s231
      %s246 = sphi 0, %s232
      %s250 = sphi 0, %s250
      %s252 = sphi 0, %s250
      %s253 = sphi 0, %s252
      %s267 = sphi 0, %s253
      %s271 = sphi 0, %s271
      %s273 = sphi 0, %s271
      %s274 = sphi 0, %s273
      %s288 = sphi 0, %s274
      %s292 = sphi 0, %s292
      %s294 = sphi 0, %s292
      %s295 = sphi 0, %s294
      %s309 = sphi 0, %s295
      %s313 = sphi 0, %s313
      %s315 = sphi 0, %s313
      %s316 = sphi 0, %s315
      %s330 = sphi 0, %s316
      %s334 = sphi 0, %s334
      %s336 = sphi 0, %s334
      %s337 = sphi 0, %s336
      %s351 = sphi 0, %s337
      %s355 = sphi 0, %s355
      %s357 = sphi 0, %s355
      %s358 = sphi 0, %s357
      %s372 = sphi 0, %s358
      %s376 = sphi 0, %s376
      %s378 = sphi 0, %s376
      %s379 = sphi 0, %s378
      %s393 = sphi 0, %s379
      %s397 = sphi 0, %s397
      %s399 = sphi 0, %s397
      %s400 = sphi 0, %s399
      %s414 = sphi 0, %s400
      %s418 = sphi 0, %s418
      %s420 = sphi 0, %s418
      %s421 = sphi 0, %s420
      %s435 = sphi 0, %s421
      %s439 = sphi 0, %s439
      %s441 = sphi 0, %s439
      %s442 = sphi 0, %s441
      %s456 = sphi 0, %s442
      %s460 = sphi 0, %s460
      %s462 = sphi 0, %s460
      %s463 = sphi 0, %s462
      %s477 = sphi 0, %s463
      %s481 = sphi 0, %s481
      %s483 = sphi 0, %s481
      %s484 = sphi 0, %s483
      %s498 = sphi 0, %s484
      %s502 = sphi 0, %s502
      %s504 = sphi 0, %s502
      %s505 = sphi 0, %s504
      %s519 = sphi 0, %s505
      %s523 = sphi 0, %s523
      %s525 = sphi 0, %s523
      %s526 = sphi 0, %s525
      %s540 = sphi 0, %s526
      %s544 = sphi 0, %s544
      %s546 = sphi 0, %s544
      %s547 = sphi 0, %s546
      %s561 = sphi 0, %s547
      %s565 = sphi 0, %s565
      %s567 = sphi 0, %s565
      %s568 = sphi 0, %s567
      %s582 = sphi 0, %s568
      %s586 = sphi 0, %s586
      %s588 = sphi 0, %s586
      %s589 = sphi 0, %s588
      %s603 = sphi 0, %s589
      %s607 = sphi 0, %s607
      %s609 = sphi 0, %s607
      %s610 = sphi 0, %s609
      %s624 = sphi 0, %s610
      %s628 = sphi 0, %s628
      %s630 = sphi 0, %s628
      %s631 = sphi 0, %s630
      %s645 = sphi 0, %s631
      %s651 = sphi 0, %s653
      %s654 = sphi 0, %s651
      %s655 = sphi 0, %s654
      %s671 = sphi 0, %s655
    $region4: #{cross_attn_encoder.1} parent=1 // loop_header_branch
      %41 = sbr.rel (%p39) target = $region8
    $region5: #{cross_attn_encoder.1} parent=1 // loop_body
      %s43 = ssub.s32 %s38, 1
      %s44 = ssub.s32 %s38, 2
      %s45 = sadd.s32 %s38, 1
      %s46 = ssub.s32 %s38, %s45
      %p47 = scmp.eq.s32.totalorder %s46, 0
      %s49 = sadd.s32 %s48, 1
      %s50 = scalar_select %p47, %s48, %s49
      %p53 = pneg %p47
      %p54 = scmp.eq.s32.totalorder %s38, 1
      %p55 = por %p53, %p54
      %p56 = scmp.ne.s32.totalorder %s48, %s51
      %p57 = scmp.eq.s32.totalorder %s38, 0
      %p58 = por %p56, %p57
      %p59 = scmp.ne.s32.totalorder %s48, %s51
      %p60 = scmp.eq.s32.totalorder %s43, 1
      %p61 = por %p59, %p60
      %p62 = scmp.ne.s32.totalorder %s51, %s52
      %p63 = scmp.eq.s32.totalorder %s43, 0
      %p64 = por %p62, %p63
      %p65 = scmp.ne.s32.totalorder %s51, %s52
      %p66 = scmp.eq.s32.totalorder %s44, 1
      %p67 = por %p65, %p66
      %p69 = scmp.ne.s32.totalorder %s52, %s68
      %p70 = scmp.eq.s32.totalorder %s44, 0
      %p71 = por %p69, %p70
      %s72 = ssub.s32 %s38, %s45
      %p73 = scmp.eq.s32.totalorder %s72, 0
      %s75 = sadd.s32 %s74, 1
      %s76 = scalar_select %p73, %s74, %s75
      %p79 = pneg %p73
      %p80 = scmp.eq.s32.totalorder %s38, 1
      %p81 = por %p79, %p80
      %p82 = scmp.ne.s32.totalorder %s74, %s77
      %p83 = scmp.eq.s32.totalorder %s38, 0
      %p84 = por %p82, %p83
      %p85 = scmp.ne.s32.totalorder %s74, %s77
      %p86 = scmp.eq.s32.totalorder %s43, 1
      %p87 = por %p85, %p86
      %p88 = scmp.ne.s32.totalorder %s77, %s78
      %p89 = scmp.eq.s32.totalorder %s43, 0
      %p90 = por %p88, %p89
      %p91 = scmp.ne.s32.totalorder %s77, %s78
      %p92 = scmp.eq.s32.totalorder %s44, 1
      %p93 = por %p91, %p92
      %p95 = scmp.ne.s32.totalorder %s78, %s94
      %p96 = scmp.eq.s32.totalorder %s44, 0
      %p97 = por %p95, %p96
      %s98 = ssub.s32 %s38, %s45
      %p99 = scmp.eq.s32.totalorder %s98, 0
      %s101 = sadd.s32 %s100, 1
      %s102 = scalar_select %p99, %s100, %s101
      %p105 = pneg %p99
      %p106 = scmp.eq.s32.totalorder %s38, 1
      %p107 = por %p105, %p106
      %p108 = scmp.ne.s32.totalorder %s100, %s103
      %p109 = scmp.eq.s32.totalorder %s38, 0
      %p110 = por %p108, %p109
      %p111 = scmp.ne.s32.totalorder %s100, %s103
      %p112 = scmp.eq.s32.totalorder %s43, 1
      %p113 = por %p111, %p112
      %p114 = scmp.ne.s32.totalorder %s103, %s104
      %p115 = scmp.eq.s32.totalorder %s43, 0
      %p116 = por %p114, %p115
      %p117 = scmp.ne.s32.totalorder %s103, %s104
      %p118 = scmp.eq.s32.totalorder %s44, 1
      %p119 = por %p117, %p118
      %p121 = scmp.ne.s32.totalorder %s104, %s120
      %p122 = scmp.eq.s32.totalorder %s44, 0
      %p123 = por %p121, %p122
      %s125 = sadd.s32 %s124, 1
      %p128 = scmp.eq.s32.totalorder %s38, 1
      %p129 = scmp.ne.s32.totalorder %s124, %s126
      %p130 = scmp.eq.s32.totalorder %s38, 0
      %p131 = por %p129, %p130
      %p132 = scmp.ne.s32.totalorder %s124, %s126
      %p133 = scmp.eq.s32.totalorder %s43, 1
      %p134 = por %p132, %p133
      %p135 = scmp.ne.s32.totalorder %s126, %s127
      %p136 = scmp.eq.s32.totalorder %s43, 0
      %p137 = por %p135, %p136
      %p138 = scmp.ne.s32.totalorder %s126, %s127
      %p139 = scmp.eq.s32.totalorder %s44, 1
      %p140 = por %p138, %p139
      %p142 = scmp.ne.s32.totalorder %s127, %s141
      %p143 = scmp.eq.s32.totalorder %s44, 0
      %p144 = por %p142, %p143
      %s146 = sadd.s32 %s145, 1
      %p149 = scmp.eq.s32.totalorder %s38, 1
      %p150 = scmp.ne.s32.totalorder %s145, %s147
      %p151 = scmp.eq.s32.totalorder %s38, 0
      %p152 = por %p150, %p151
      %p153 = scmp.ne.s32.totalorder %s145, %s147
      %p154 = scmp.eq.s32.totalorder %s43, 1
      %p155 = por %p153, %p154
      %p156 = scmp.ne.s32.totalorder %s147, %s148
      %p157 = scmp.eq.s32.totalorder %s43, 0
      %p158 = por %p156, %p157
      %p159 = scmp.ne.s32.totalorder %s147, %s148
      %p160 = scmp.eq.s32.totalorder %s44, 1
      %p161 = por %p159, %p160
      %p163 = scmp.ne.s32.totalorder %s148, %s162
      %p164 = scmp.eq.s32.totalorder %s44, 0
      %p165 = por %p163, %p164
      %s167 = sadd.s32 %s166, 1
      %p170 = scmp.eq.s32.totalorder %s38, 1
      %p171 = scmp.ne.s32.totalorder %s166, %s168
      %p172 = scmp.eq.s32.totalorder %s38, 0
      %p173 = por %p171, %p172
      %p174 = scmp.ne.s32.totalorder %s166, %s168
      %p175 = scmp.eq.s32.totalorder %s43, 1
      %p176 = por %p174, %p175
      %p177 = scmp.ne.s32.totalorder %s168, %s169
      %p178 = scmp.eq.s32.totalorder %s43, 0
      %p179 = por %p177, %p178
      %p180 = scmp.ne.s32.totalorder %s168, %s169
      %p181 = scmp.eq.s32.totalorder %s44, 1
      %p182 = por %p180, %p181
      %p184 = scmp.ne.s32.totalorder %s169, %s183
      %p185 = scmp.eq.s32.totalorder %s44, 0
      %p186 = por %p184, %p185
      %s188 = sadd.s32 %s187, 1
      %p191 = scmp.eq.s32.totalorder %s38, 1
      %p192 = scmp.ne.s32.totalorder %s187, %s189
      %p193 = scmp.eq.s32.totalorder %s38, 0
      %p194 = por %p192, %p193
      %p195 = scmp.ne.s32.totalorder %s187, %s189
      %p196 = scmp.eq.s32.totalorder %s43, 1
      %p197 = por %p195, %p196
      %p198 = scmp.ne.s32.totalorder %s189, %s190
      %p199 = scmp.eq.s32.totalorder %s43, 0
      %p200 = por %p198, %p199
      %p201 = scmp.ne.s32.totalorder %s189, %s190
      %p202 = scmp.eq.s32.totalorder %s44, 1
      %p203 = por %p201, %p202
      %p205 = scmp.ne.s32.totalorder %s190, %s204
      %p206 = scmp.eq.s32.totalorder %s44, 0
      %p207 = por %p205, %p206
      %s209 = sadd.s32 %s208, 1
      %p212 = scmp.eq.s32.totalorder %s38, 1
      %p213 = scmp.ne.s32.totalorder %s208, %s210
      %p214 = scmp.eq.s32.totalorder %s38, 0
      %p215 = por %p213, %p214
      %p216 = scmp.ne.s32.totalorder %s208, %s210
      %p217 = scmp.eq.s32.totalorder %s43, 1
      %p218 = por %p216, %p217
      %p219 = scmp.ne.s32.totalorder %s210, %s211
      %p220 = scmp.eq.s32.totalorder %s43, 0
      %p221 = por %p219, %p220
      %p222 = scmp.ne.s32.totalorder %s210, %s211
      %p223 = scmp.eq.s32.totalorder %s44, 1
      %p224 = por %p222, %p223
      %p226 = scmp.ne.s32.totalorder %s211, %s225
      %p227 = scmp.eq.s32.totalorder %s44, 0
      %p228 = por %p226, %p227
      %s230 = sadd.s32 %s229, 1
      %p233 = scmp.eq.s32.totalorder %s38, 1
      %p234 = scmp.ne.s32.totalorder %s229, %s231
      %p235 = scmp.eq.s32.totalorder %s38, 0
      %p236 = por %p234, %p235
      %p237 = scmp.ne.s32.totalorder %s229, %s231
      %p238 = scmp.eq.s32.totalorder %s43, 1
      %p239 = por %p237, %p238
      %p240 = scmp.ne.s32.totalorder %s231, %s232
      %p241 = scmp.eq.s32.totalorder %s43, 0
      %p242 = por %p240, %p241
      %p243 = scmp.ne.s32.totalorder %s231, %s232
      %p244 = scmp.eq.s32.totalorder %s44, 1
      %p245 = por %p243, %p244
      %p247 = scmp.ne.s32.totalorder %s232, %s246
      %p248 = scmp.eq.s32.totalorder %s44, 0
      %p249 = por %p247, %p248
      %s251 = sadd.s32 %s250, 1
      %p254 = scmp.eq.s32.totalorder %s38, 1
      %p255 = scmp.ne.s32.totalorder %s250, %s252
      %p256 = scmp.eq.s32.totalorder %s38, 0
      %p257 = por %p255, %p256
      %p258 = scmp.ne.s32.totalorder %s250, %s252
      %p259 = scmp.eq.s32.totalorder %s43, 1
      %p260 = por %p258, %p259
      %p261 = scmp.ne.s32.totalorder %s252, %s253
      %p262 = scmp.eq.s32.totalorder %s43, 0
      %p263 = por %p261, %p262
      %p264 = scmp.ne.s32.totalorder %s252, %s253
      %p265 = scmp.eq.s32.totalorder %s44, 1
      %p266 = por %p264, %p265
      %p268 = scmp.ne.s32.totalorder %s253, %s267
      %p269 = scmp.eq.s32.totalorder %s44, 0
      %p270 = por %p268, %p269
      %s272 = sadd.s32 %s271, 1
      %p275 = scmp.eq.s32.totalorder %s38, 1
      %p276 = scmp.ne.s32.totalorder %s271, %s273
      %p277 = scmp.eq.s32.totalorder %s38, 0
      %p278 = por %p276, %p277
      %p279 = scmp.ne.s32.totalorder %s271, %s273
      %p280 = scmp.eq.s32.totalorder %s43, 1
      %p281 = por %p279, %p280
      %p282 = scmp.ne.s32.totalorder %s273, %s274
      %p283 = scmp.eq.s32.totalorder %s43, 0
      %p284 = por %p282, %p283
      %p285 = scmp.ne.s32.totalorder %s273, %s274
      %p286 = scmp.eq.s32.totalorder %s44, 1
      %p287 = por %p285, %p286
      %p289 = scmp.ne.s32.totalorder %s274, %s288
      %p290 = scmp.eq.s32.totalorder %s44, 0
      %p291 = por %p289, %p290
      %s293 = sadd.s32 %s292, 1
      %p296 = scmp.eq.s32.totalorder %s38, 1
      %p297 = scmp.ne.s32.totalorder %s292, %s294
      %p298 = scmp.eq.s32.totalorder %s38, 0
      %p299 = por %p297, %p298
      %p300 = scmp.ne.s32.totalorder %s292, %s294
      %p301 = scmp.eq.s32.totalorder %s43, 1
      %p302 = por %p300, %p301
      %p303 = scmp.ne.s32.totalorder %s294, %s295
      %p304 = scmp.eq.s32.totalorder %s43, 0
      %p305 = por %p303, %p304
      %p306 = scmp.ne.s32.totalorder %s294, %s295
      %p307 = scmp.eq.s32.totalorder %s44, 1
      %p308 = por %p306, %p307
      %p310 = scmp.ne.s32.totalorder %s295, %s309
      %p311 = scmp.eq.s32.totalorder %s44, 0
      %p312 = por %p310, %p311
      %s314 = sadd.s32 %s313, 1
      %p317 = scmp.eq.s32.totalorder %s38, 1
      %p318 = scmp.ne.s32.totalorder %s313, %s315
      %p319 = scmp.eq.s32.totalorder %s38, 0
      %p320 = por %p318, %p319
      %p321 = scmp.ne.s32.totalorder %s313, %s315
      %p322 = scmp.eq.s32.totalorder %s43, 1
      %p323 = por %p321, %p322
      %p324 = scmp.ne.s32.totalorder %s315, %s316
      %p325 = scmp.eq.s32.totalorder %s43, 0
      %p326 = por %p324, %p325
      %p327 = scmp.ne.s32.totalorder %s315, %s316
      %p328 = scmp.eq.s32.totalorder %s44, 1
      %p329 = por %p327, %p328
      %p331 = scmp.ne.s32.totalorder %s316, %s330
      %p332 = scmp.eq.s32.totalorder %s44, 0
      %p333 = por %p331, %p332
      %s335 = sadd.s32 %s334, 1
      %p338 = scmp.eq.s32.totalorder %s38, 1
      %p339 = scmp.ne.s32.totalorder %s334, %s336
      %p340 = scmp.eq.s32.totalorder %s38, 0
      %p341 = por %p339, %p340
      %p342 = scmp.ne.s32.totalorder %s334, %s336
      %p343 = scmp.eq.s32.totalorder %s43, 1
      %p344 = por %p342, %p343
      %p345 = scmp.ne.s32.totalorder %s336, %s337
      %p346 = scmp.eq.s32.totalorder %s43, 0
      %p347 = por %p345, %p346
      %p348 = scmp.ne.s32.totalorder %s336, %s337
      %p349 = scmp.eq.s32.totalorder %s44, 1
      %p350 = por %p348, %p349
      %p352 = scmp.ne.s32.totalorder %s337, %s351
      %p353 = scmp.eq.s32.totalorder %s44, 0
      %p354 = por %p352, %p353
      %s356 = sadd.s32 %s355, 1
      %p359 = scmp.eq.s32.totalorder %s38, 1
      %p360 = scmp.ne.s32.totalorder %s355, %s357
      %p361 = scmp.eq.s32.totalorder %s38, 0
      %p362 = por %p360, %p361
      %p363 = scmp.ne.s32.totalorder %s355, %s357
      %p364 = scmp.eq.s32.totalorder %s43, 1
      %p365 = por %p363, %p364
      %p366 = scmp.ne.s32.totalorder %s357, %s358
      %p367 = scmp.eq.s32.totalorder %s43, 0
      %p368 = por %p366, %p367
      %p369 = scmp.ne.s32.totalorder %s357, %s358
      %p370 = scmp.eq.s32.totalorder %s44, 1
      %p371 = por %p369, %p370
      %p373 = scmp.ne.s32.totalorder %s358, %s372
      %p374 = scmp.eq.s32.totalorder %s44, 0
      %p375 = por %p373, %p374
      %s377 = sadd.s32 %s376, 1
      %p380 = scmp.eq.s32.totalorder %s38, 1
      %p381 = scmp.ne.s32.totalorder %s376, %s378
      %p382 = scmp.eq.s32.totalorder %s38, 0
      %p383 = por %p381, %p382
      %p384 = scmp.ne.s32.totalorder %s376, %s378
      %p385 = scmp.eq.s32.totalorder %s43, 1
      %p386 = por %p384, %p385
      %p387 = scmp.ne.s32.totalorder %s378, %s379
      %p388 = scmp.eq.s32.totalorder %s43, 0
      %p389 = por %p387, %p388
      %p390 = scmp.ne.s32.totalorder %s378, %s379
      %p391 = scmp.eq.s32.totalorder %s44, 1
      %p392 = por %p390, %p391
      %p394 = scmp.ne.s32.totalorder %s379, %s393
      %p395 = scmp.eq.s32.totalorder %s44, 0
      %p396 = por %p394, %p395
      %s398 = sadd.s32 %s397, 1
      %p401 = scmp.eq.s32.totalorder %s38, 1
      %p402 = scmp.ne.s32.totalorder %s397, %s399
      %p403 = scmp.eq.s32.totalorder %s38, 0
      %p404 = por %p402, %p403
      %p405 = scmp.ne.s32.totalorder %s397, %s399
      %p406 = scmp.eq.s32.totalorder %s43, 1
      %p407 = por %p405, %p406
      %p408 = scmp.ne.s32.totalorder %s399, %s400
      %p409 = scmp.eq.s32.totalorder %s43, 0
      %p410 = por %p408, %p409
      %p411 = scmp.ne.s32.totalorder %s399, %s400
      %p412 = scmp.eq.s32.totalorder %s44, 1
      %p413 = por %p411, %p412
      %p415 = scmp.ne.s32.totalorder %s400, %s414
      %p416 = scmp.eq.s32.totalorder %s44, 0
      %p417 = por %p415, %p416
      %s419 = sadd.s32 %s418, 1
      %p422 = scmp.eq.s32.totalorder %s38, 1
      %p423 = scmp.ne.s32.totalorder %s418, %s420
      %p424 = scmp.eq.s32.totalorder %s38, 0
      %p425 = por %p423, %p424
      %p426 = scmp.ne.s32.totalorder %s418, %s420
      %p427 = scmp.eq.s32.totalorder %s43, 1
      %p428 = por %p426, %p427
      %p429 = scmp.ne.s32.totalorder %s420, %s421
      %p430 = scmp.eq.s32.totalorder %s43, 0
      %p431 = por %p429, %p430
      %p432 = scmp.ne.s32.totalorder %s420, %s421
      %p433 = scmp.eq.s32.totalorder %s44, 1
      %p434 = por %p432, %p433
      %p436 = scmp.ne.s32.totalorder %s421, %s435
      %p437 = scmp.eq.s32.totalorder %s44, 0
      %p438 = por %p436, %p437
      %s440 = sadd.s32 %s439, 1
      %p443 = scmp.eq.s32.totalorder %s38, 1
      %p444 = scmp.ne.s32.totalorder %s439, %s441
      %p445 = scmp.eq.s32.totalorder %s38, 0
      %p446 = por %p444, %p445
      %p447 = scmp.ne.s32.totalorder %s439, %s441
      %p448 = scmp.eq.s32.totalorder %s43, 1
      %p449 = por %p447, %p448
      %p450 = scmp.ne.s32.totalorder %s441, %s442
      %p451 = scmp.eq.s32.totalorder %s43, 0
      %p452 = por %p450, %p451
      %p453 = scmp.ne.s32.totalorder %s441, %s442
      %p454 = scmp.eq.s32.totalorder %s44, 1
      %p455 = por %p453, %p454
      %p457 = scmp.ne.s32.totalorder %s442, %s456
      %p458 = scmp.eq.s32.totalorder %s44, 0
      %p459 = por %p457, %p458
      %s461 = sadd.s32 %s460, 1
      %p464 = scmp.eq.s32.totalorder %s38, 1
      %p465 = scmp.ne.s32.totalorder %s460, %s462
      %p466 = scmp.eq.s32.totalorder %s38, 0
      %p467 = por %p465, %p466
      %p468 = scmp.ne.s32.totalorder %s460, %s462
      %p469 = scmp.eq.s32.totalorder %s43, 1
      %p470 = por %p468, %p469
      %p471 = scmp.ne.s32.totalorder %s462, %s463
      %p472 = scmp.eq.s32.totalorder %s43, 0
      %p473 = por %p471, %p472
      %p474 = scmp.ne.s32.totalorder %s462, %s463
      %p475 = scmp.eq.s32.totalorder %s44, 1
      %p476 = por %p474, %p475
      %p478 = scmp.ne.s32.totalorder %s463, %s477
      %p479 = scmp.eq.s32.totalorder %s44, 0
      %p480 = por %p478, %p479
      %s482 = sadd.s32 %s481, 1
      %p485 = scmp.eq.s32.totalorder %s38, 1
      %p486 = scmp.ne.s32.totalorder %s481, %s483
      %p487 = scmp.eq.s32.totalorder %s38, 0
      %p488 = por %p486, %p487
      %p489 = scmp.ne.s32.totalorder %s481, %s483
      %p490 = scmp.eq.s32.totalorder %s43, 1
      %p491 = por %p489, %p490
      %p492 = scmp.ne.s32.totalorder %s483, %s484
      %p493 = scmp.eq.s32.totalorder %s43, 0
      %p494 = por %p492, %p493
      %p495 = scmp.ne.s32.totalorder %s483, %s484
      %p496 = scmp.eq.s32.totalorder %s44, 1
      %p497 = por %p495, %p496
      %p499 = scmp.ne.s32.totalorder %s484, %s498
      %p500 = scmp.eq.s32.totalorder %s44, 0
      %p501 = por %p499, %p500
      %s503 = sadd.s32 %s502, 1
      %p506 = scmp.eq.s32.totalorder %s38, 1
      %p507 = scmp.ne.s32.totalorder %s502, %s504
      %p508 = scmp.eq.s32.totalorder %s38, 0
      %p509 = por %p507, %p508
      %p510 = scmp.ne.s32.totalorder %s502, %s504
      %p511 = scmp.eq.s32.totalorder %s43, 1
      %p512 = por %p510, %p511
      %p513 = scmp.ne.s32.totalorder %s504, %s505
      %p514 = scmp.eq.s32.totalorder %s43, 0
      %p515 = por %p513, %p514
      %p516 = scmp.ne.s32.totalorder %s504, %s505
      %p517 = scmp.eq.s32.totalorder %s44, 1
      %p518 = por %p516, %p517
      %p520 = scmp.ne.s32.totalorder %s505, %s519
      %p521 = scmp.eq.s32.totalorder %s44, 0
      %p522 = por %p520, %p521
      %s524 = sadd.s32 %s523, 1
      %p527 = scmp.eq.s32.totalorder %s38, 1
      %p528 = scmp.ne.s32.totalorder %s523, %s525
      %p529 = scmp.eq.s32.totalorder %s38, 0
      %p530 = por %p528, %p529
      %p531 = scmp.ne.s32.totalorder %s523, %s525
      %p532 = scmp.eq.s32.totalorder %s43, 1
      %p533 = por %p531, %p532
      %p534 = scmp.ne.s32.totalorder %s525, %s526
      %p535 = scmp.eq.s32.totalorder %s43, 0
      %p536 = por %p534, %p535
      %p537 = scmp.ne.s32.totalorder %s525, %s526
      %p538 = scmp.eq.s32.totalorder %s44, 1
      %p539 = por %p537, %p538
      %p541 = scmp.ne.s32.totalorder %s526, %s540
      %p542 = scmp.eq.s32.totalorder %s44, 0
      %p543 = por %p541, %p542
      %s545 = sadd.s32 %s544, 1
      %p548 = scmp.eq.s32.totalorder %s38, 1
      %p549 = scmp.ne.s32.totalorder %s544, %s546
      %p550 = scmp.eq.s32.totalorder %s38, 0
      %p551 = por %p549, %p550
      %p552 = scmp.ne.s32.totalorder %s544, %s546
      %p553 = scmp.eq.s32.totalorder %s43, 1
      %p554 = por %p552, %p553
      %p555 = scmp.ne.s32.totalorder %s546, %s547
      %p556 = scmp.eq.s32.totalorder %s43, 0
      %p557 = por %p555, %p556
      %p558 = scmp.ne.s32.totalorder %s546, %s547
      %p559 = scmp.eq.s32.totalorder %s44, 1
      %p560 = por %p558, %p559
      %p562 = scmp.ne.s32.totalorder %s547, %s561
      %p563 = scmp.eq.s32.totalorder %s44, 0
      %p564 = por %p562, %p563
      %s566 = sadd.s32 %s565, 1
      %p569 = scmp.eq.s32.totalorder %s38, 1
      %p570 = scmp.ne.s32.totalorder %s565, %s567
      %p571 = scmp.eq.s32.totalorder %s38, 0
      %p572 = por %p570, %p571
      %p573 = scmp.ne.s32.totalorder %s565, %s567
      %p574 = scmp.eq.s32.totalorder %s43, 1
      %p575 = por %p573, %p574
      %p576 = scmp.ne.s32.totalorder %s567, %s568
      %p577 = scmp.eq.s32.totalorder %s43, 0
      %p578 = por %p576, %p577
      %p579 = scmp.ne.s32.totalorder %s567, %s568
      %p580 = scmp.eq.s32.totalorder %s44, 1
      %p581 = por %p579, %p580
      %p583 = scmp.ne.s32.totalorder %s568, %s582
      %p584 = scmp.eq.s32.totalorder %s44, 0
      %p585 = por %p583, %p584
      %s587 = sadd.s32 %s586, 1
      %p590 = scmp.eq.s32.totalorder %s38, 1
      %p591 = scmp.ne.s32.totalorder %s586, %s588
      %p592 = scmp.eq.s32.totalorder %s38, 0
      %p593 = por %p591, %p592
      %p594 = scmp.ne.s32.totalorder %s586, %s588
      %p595 = scmp.eq.s32.totalorder %s43, 1
      %p596 = por %p594, %p595
      %p597 = scmp.ne.s32.totalorder %s588, %s589
      %p598 = scmp.eq.s32.totalorder %s43, 0
      %p599 = por %p597, %p598
      %p600 = scmp.ne.s32.totalorder %s588, %s589
      %p601 = scmp.eq.s32.totalorder %s44, 1
      %p602 = por %p600, %p601
      %p604 = scmp.ne.s32.totalorder %s589, %s603
      %p605 = scmp.eq.s32.totalorder %s44, 0
      %p606 = por %p604, %p605
      %s608 = sadd.s32 %s607, 1
      %p611 = scmp.eq.s32.totalorder %s38, 1
      %p612 = scmp.ne.s32.totalorder %s607, %s609
      %p613 = scmp.eq.s32.totalorder %s38, 0
      %p614 = por %p612, %p613
      %p615 = scmp.ne.s32.totalorder %s607, %s609
      %p616 = scmp.eq.s32.totalorder %s43, 1
      %p617 = por %p615, %p616
      %p618 = scmp.ne.s32.totalorder %s609, %s610
      %p619 = scmp.eq.s32.totalorder %s43, 0
      %p620 = por %p618, %p619
      %p621 = scmp.ne.s32.totalorder %s609, %s610
      %p622 = scmp.eq.s32.totalorder %s44, 1
      %p623 = por %p621, %p622
      %p625 = scmp.ne.s32.totalorder %s610, %s624
      %p626 = scmp.eq.s32.totalorder %s44, 0
      %p627 = por %p625, %p626
      %s629 = sadd.s32 %s628, 1
      %p632 = scmp.eq.s32.totalorder %s38, 1
      %p633 = scmp.ne.s32.totalorder %s628, %s630
      %p634 = scmp.eq.s32.totalorder %s38, 0
      %p635 = por %p633, %p634
      %p636 = scmp.ne.s32.totalorder %s628, %s630
      %p637 = scmp.eq.s32.totalorder %s43, 1
      %p638 = por %p636, %p637
      %p639 = scmp.ne.s32.totalorder %s630, %s631
      %p640 = scmp.eq.s32.totalorder %s43, 0
      %p641 = por %p639, %p640
      %p642 = scmp.ne.s32.totalorder %s630, %s631
      %p643 = scmp.eq.s32.totalorder %s44, 1
      %p644 = por %p642, %p643
      %p646 = scmp.ne.s32.totalorder %s631, %s645
      %p647 = scmp.eq.s32.totalorder %s44, 0
      %p648 = por %p646, %p647
      %s649 = ssub.s32 %s38, %s45
      %p650 = scmp.eq.s32.totalorder %s649, 0
      %s652 = sadd.s32 %s651, 1
      %s653 = scalar_select %p650, %s651, %s652
      %p656 = pneg %p650
      %p657 = scmp.eq.s32.totalorder %s38, 1
      %p658 = por %p656, %p657
      %p659 = scmp.ne.s32.totalorder %s651, %s654
      %p660 = scmp.eq.s32.totalorder %s38, 0
      %p661 = por %p659, %p660
      %p662 = scmp.ne.s32.totalorder %s651, %s654
      %p663 = scmp.eq.s32.totalorder %s43, 1
      %p664 = por %p662, %p663
      %p665 = scmp.ne.s32.totalorder %s654, %s655
      %p666 = scmp.eq.s32.totalorder %s43, 0
      %p667 = por %p665, %p666
      %p668 = scmp.ne.s32.totalorder %s654, %s655
      %p669 = scmp.eq.s32.totalorder %s44, 1
      %p670 = por %p668, %p669
      %p672 = scmp.ne.s32.totalorder %s655, %s671
      %p673 = scmp.eq.s32.totalorder %s44, 0
      %p674 = por %p672, %p673
      %p675 = scmp.le.s32.totalorder 1, %s38
      %p676 = scmp.lt.s32.totalorder %s38, 3
      %p677 = pnand %p675, %p676
      %p678 = pneg %p677
      // Predicated region
      $region9: #{cross_attn_encoder.1} parent=5 // pred_check
        _
      $region10: #{cross_attn_encoder.1} parent=5 // pred_check_branch
        %680 = sbr.rel (%p677) target = $region12
      $region11: #{cross_attn_encoder.1} parent=5 // pred_region
        %s681 = ssub.s32 %s38, 1
        // Predicated region
        $region13: #{cross_attn_encoder.1} parent=11 // pred_check
          %p682 = pneg %p137
        $region14: #{cross_attn_encoder.1} parent=11 // pred_check_branch
          %684 = sbr.rel (%p682) target = $region16
        $region15: #{cross_attn_encoder.1} parent=11 // pred_region
          _
        $region16: #{cross_attn_encoder.1} parent=11 // pred_fallthru
          _
        // Predicated region
        $region17: #{cross_attn_encoder.1} parent=11 // pred_check
          %p685 = pneg %p158
        $region18: #{cross_attn_encoder.1} parent=11 // pred_check_branch
          %687 = sbr.rel (%p685) target = $region20
        $region19: #{cross_attn_encoder.1} parent=11 // pred_region
          _
        $region20: #{cross_attn_encoder.1} parent=11 // pred_fallthru
          _
        // Predicated region
        $region21: #{cross_attn_encoder.1} parent=11 // pred_check
          %p688 = pneg %p179
        $region22: #{cross_attn_encoder.1} parent=11 // pred_check_branch
          %690 = sbr.rel (%p688) target = $region24
        $region23: #{cross_attn_encoder.1} parent=11 // pred_region
          _
        $region24: #{cross_attn_encoder.1} parent=11 // pred_fallthru
          _
        // Predicated region
        $region25: #{cross_attn_encoder.1} parent=11 // pred_check
          %p691 = pneg %p200
        $region26: #{cross_attn_encoder.1} parent=11 // pred_check_branch
          %693 = sbr.rel (%p691) target = $region28
        $region27: #{cross_attn_encoder.1} parent=11 // pred_region
          _
        $region28: #{cross_attn_encoder.1} parent=11 // pred_fallthru
          _
        // Predicated region
        $region29: #{cross_attn_encoder.1} parent=11 // pred_check
          %p694 = pneg %p221
        $region30: #{cross_attn_encoder.1} parent=11 // pred_check_branch
          %696 = sbr.rel (%p694) target = $region32
        $region31: #{cross_attn_encoder.1} parent=11 // pred_region
          _
        $region32: #{cross_attn_encoder.1} parent=11 // pred_fallthru
          _
        // Predicated region
        $region33: #{cross_attn_encoder.1} parent=11 // pred_check
          %p697 = pneg %p242
        $region34: #{cross_attn_encoder.1} parent=11 // pred_check_branch
          %699 = sbr.rel (%p697) target = $region36
        $region35: #{cross_attn_encoder.1} parent=11 // pred_region
          _
        $region36: #{cross_attn_encoder.1} parent=11 // pred_fallthru
          _
        // Predicated region
        $region37: #{cross_attn_encoder.1} parent=11 // pred_check
          %p700 = pneg %p263
        $region38: #{cross_attn_encoder.1} parent=11 // pred_check_branch
          %702 = sbr.rel (%p700) target = $region40
        $region39: #{cross_attn_encoder.1} parent=11 // pred_region
          _
        $region40: #{cross_attn_encoder.1} parent=11 // pred_fallthru
          _
        // Predicated region
        $region41: #{cross_attn_encoder.1} parent=11 // pred_check
          %p703 = pneg %p284
        $region42: #{cross_attn_encoder.1} parent=11 // pred_check_branch
          %705 = sbr.rel (%p703) target = $region44
        $region43: #{cross_attn_encoder.1} parent=11 // pred_region
          _
        $region44: #{cross_attn_encoder.1} parent=11 // pred_fallthru
          _
        // Predicated region
        $region45: #{cross_attn_encoder.1} parent=11 // pred_check
          %p706 = pneg %p305
        $region46: #{cross_attn_encoder.1} parent=11 // pred_check_branch
          %708 = sbr.rel (%p706) target = $region48
        $region47: #{cross_attn_encoder.1} parent=11 // pred_region
          _
        $region48: #{cross_attn_encoder.1} parent=11 // pred_fallthru
          _
        // Predicated region
        $region49: #{cross_attn_encoder.1} parent=11 // pred_check
          %p709 = pneg %p326
        $region50: #{cross_attn_encoder.1} parent=11 // pred_check_branch
          %711 = sbr.rel (%p709) target = $region52
        $region51: #{cross_attn_encoder.1} parent=11 // pred_region
          _
        $region52: #{cross_attn_encoder.1} parent=11 // pred_fallthru
          _
        // Predicated region
        $region53: #{cross_attn_encoder.1} parent=11 // pred_check
          %p712 = pneg %p347
        $region54: #{cross_attn_encoder.1} parent=11 // pred_check_branch
          %714 = sbr.rel (%p712) target = $region56
        $region55: #{cross_attn_encoder.1} parent=11 // pred_region
          _
        $region56: #{cross_attn_encoder.1} parent=11 // pred_fallthru
          _
        // Predicated region
        $region57: #{cross_attn_encoder.1} parent=11 // pred_check
          %p715 = pneg %p368
        $region58: #{cross_attn_encoder.1} parent=11 // pred_check_branch
          %717 = sbr.rel (%p715) target = $region60
        $region59: #{cross_attn_encoder.1} parent=11 // pred_region
          _
        $region60: #{cross_attn_encoder.1} parent=11 // pred_fallthru
          _
        // Predicated region
        $region61: #{cross_attn_encoder.1} parent=11 // pred_check
          %p718 = pneg %p389
        $region62: #{cross_attn_encoder.1} parent=11 // pred_check_branch
          %720 = sbr.rel (%p718) target = $region64
        $region63: #{cross_attn_encoder.1} parent=11 // pred_region
          _
        $region64: #{cross_attn_encoder.1} parent=11 // pred_fallthru
          _
        // Predicated region
        $region65: #{cross_attn_encoder.1} parent=11 // pred_check
          %p721 = pneg %p410
        $region66: #{cross_attn_encoder.1} parent=11 // pred_check_branch
          %723 = sbr.rel (%p721) target = $region68
        $region67: #{cross_attn_encoder.1} parent=11 // pred_region
          _
        $region68: #{cross_attn_encoder.1} parent=11 // pred_fallthru
          _
        // Predicated region
        $region69: #{cross_attn_encoder.1} parent=11 // pred_check
          %p724 = pneg %p431
        $region70: #{cross_attn_encoder.1} parent=11 // pred_check_branch
          %726 = sbr.rel (%p724) target = $region72
        $region71: #{cross_attn_encoder.1} parent=11 // pred_region
          _
        $region72: #{cross_attn_encoder.1} parent=11 // pred_fallthru
          _
        // Predicated region
        $region73: #{cross_attn_encoder.1} parent=11 // pred_check
          %p727 = pneg %p452
        $region74: #{cross_attn_encoder.1} parent=11 // pred_check_branch
          %729 = sbr.rel (%p727) target = $region76
        $region75: #{cross_attn_encoder.1} parent=11 // pred_region
          _
        $region76: #{cross_attn_encoder.1} parent=11 // pred_fallthru
          _
        // Predicated region
        $region77: #{cross_attn_encoder.1} parent=11 // pred_check
          %p730 = pneg %p473
        $region78: #{cross_attn_encoder.1} parent=11 // pred_check_branch
          %732 = sbr.rel (%p730) target = $region80
        $region79: #{cross_attn_encoder.1} parent=11 // pred_region
          _
        $region80: #{cross_attn_encoder.1} parent=11 // pred_fallthru
          _
        // Predicated region
        $region81: #{cross_attn_encoder.1} parent=11 // pred_check
          %p733 = pneg %p494
        $region82: #{cross_attn_encoder.1} parent=11 // pred_check_branch
          %735 = sbr.rel (%p733) target = $region84
        $region83: #{cross_attn_encoder.1} parent=11 // pred_region
          _
        $region84: #{cross_attn_encoder.1} parent=11 // pred_fallthru
          _
        // Predicated region
        $region85: #{cross_attn_encoder.1} parent=11 // pred_check
          %p736 = pneg %p515
        $region86: #{cross_attn_encoder.1} parent=11 // pred_check_branch
          %738 = sbr.rel (%p736) target = $region88
        $region87: #{cross_attn_encoder.1} parent=11 // pred_region
          _
        $region88: #{cross_attn_encoder.1} parent=11 // pred_fallthru
          _
        // Predicated region
        $region89: #{cross_attn_encoder.1} parent=11 // pred_check
          %p739 = pneg %p536
        $region90: #{cross_attn_encoder.1} parent=11 // pred_check_branch
          %741 = sbr.rel (%p739) target = $region92
        $region91: #{cross_attn_encoder.1} parent=11 // pred_region
          %s743 = ssub.s32 2048, 2048
          %744 = vsyncadd [#allocation3], %s743
          %s745 = sshll.u32 [#allocation2], 4
          %s746 = int_to_ptr.vmem [resolvable:$true] %s745
          %751 = dma.hbm_to_vmem [thread:$0]  %s22, 2048, %s746, [#allocation3], 128, 128, 8
        $region92: #{cross_attn_encoder.1} parent=11 // pred_fallthru
          _
        // Predicated region
        $region93: #{cross_attn_encoder.1} parent=11 // pred_check
          %p752 = pneg %p557
        $region94: #{cross_attn_encoder.1} parent=11 // pred_check_branch
          %754 = sbr.rel (%p752) target = $region96
        $region95: #{cross_attn_encoder.1} parent=11 // pred_region
          _
        $region96: #{cross_attn_encoder.1} parent=11 // pred_fallthru
          _
        // Predicated region
        $region97: #{cross_attn_encoder.1} parent=11 // pred_check
          %p755 = pneg %p578
        $region98: #{cross_attn_encoder.1} parent=11 // pred_check_branch
          %757 = sbr.rel (%p755) target = $region100
        $region99: #{cross_attn_encoder.1} parent=11 // pred_region
          _
        $region100: #{cross_attn_encoder.1} parent=11 // pred_fallthru
          _
        // Predicated region
        $region101: #{cross_attn_encoder.1} parent=11 // pred_check
          %p758 = pneg %p599
        $region102: #{cross_attn_encoder.1} parent=11 // pred_check_branch
          %760 = sbr.rel (%p758) target = $region104
        $region103: #{cross_attn_encoder.1} parent=11 // pred_region
          _
        $region104: #{cross_attn_encoder.1} parent=11 // pred_fallthru
          _
        // Predicated region
        $region105: #{cross_attn_encoder.1} parent=11 // pred_check
          %p761 = pneg %p620
        $region106: #{cross_attn_encoder.1} parent=11 // pred_check_branch
          %763 = sbr.rel (%p761) target = $region108
        $region107: #{cross_attn_encoder.1} parent=11 // pred_region
          _
        $region108: #{cross_attn_encoder.1} parent=11 // pred_fallthru
          _
        // Predicated region
        $region109: #{cross_attn_encoder.1} parent=11 // pred_check
          %p764 = pneg %p641
        $region110: #{cross_attn_encoder.1} parent=11 // pred_check_branch
          %766 = sbr.rel (%p764) target = $region112
        $region111: #{cross_attn_encoder.1} parent=11 // pred_region
          _
        $region112: #{cross_attn_encoder.1} parent=11 // pred_fallthru
          _
      $region12: #{cross_attn_encoder.1} parent=5 // pred_fallthru
        _
      %p767 = scmp.lt.s32.totalorder %s38, 2
      // Predicated region
      $region113: #{cross_attn_encoder.1} parent=5 // pred_check
        %p768 = pneg %p767
      $region114: #{cross_attn_encoder.1} parent=5 // pred_check_branch
        %770 = sbr.rel (%p768) target = $region116
      $region115: #{cross_attn_encoder.1} parent=5 // pred_region
        // Predicated region
        $region117: #{cross_attn_encoder.1} parent=115 // pred_check
          %p771 = pneg %p58
        $region118: #{cross_attn_encoder.1} parent=115 // pred_check_branch
          %773 = sbr.rel (%p771) target = $region120
        $region119: #{cross_attn_encoder.1} parent=115 // pred_region
          %p774 = scmp.lt.s32.totalorder %s38, 1
          %s775 = scalar_select %p774, %s38, 1
          %s776 = smul.addr %s775, 8
          %s777 = scalar_lea.vmem %s0, %s776
        $region120: #{cross_attn_encoder.1} parent=115 // pred_fallthru
          _
        // Predicated region
        $region121: #{cross_attn_encoder.1} parent=115 // pred_check
          %p778 = pneg %p84
        $region122: #{cross_attn_encoder.1} parent=115 // pred_check_branch
          %780 = sbr.rel (%p778) target = $region124
        $region123: #{cross_attn_encoder.1} parent=115 // pred_region
          %p781 = scmp.lt.s32.totalorder %s38, 1
          %s782 = scalar_select %p781, %s38, 1
          %s783 = smul.addr %s782, 8
          %s784 = scalar_lea.vmem %s1, %s783
        $region124: #{cross_attn_encoder.1} parent=115 // pred_fallthru
          _
        // Predicated region
        $region125: #{cross_attn_encoder.1} parent=115 // pred_check
          %p785 = pneg %p110
        $region126: #{cross_attn_encoder.1} parent=115 // pred_check_branch
          %787 = sbr.rel (%p785) target = $region128
        $region127: #{cross_attn_encoder.1} parent=115 // pred_region
          %p788 = scmp.lt.s32.totalorder %s38, 1
          %s789 = scalar_select %p788, %s38, 1
          %s790 = smul.addr %s789, 8
          %s791 = scalar_lea.vmem %s2, %s790
        $region128: #{cross_attn_encoder.1} parent=115 // pred_fallthru
          _
      $region116: #{cross_attn_encoder.1} parent=5 // pred_fallthru
        _
      %p792 = scmp.le.s32.totalorder 1, %s38
      %p793 = scmp.lt.s32.totalorder %s38, 3
      %p794 = pnand %p792, %p793
      %p795 = pneg %p794
      // Predicated region
      $region129: #{cross_attn_encoder.1} parent=5 // pred_check
        _
      $region130: #{cross_attn_encoder.1} parent=5 // pred_check_branch
        %797 = sbr.rel (%p794) target = $region132
      $region131: #{cross_attn_encoder.1} parent=5 // pred_region
        %s798 = ssub.s32 %s38, 1
        // Predicated region
        $region133: #{cross_attn_encoder.1} parent=131 // pred_check
          %p799 = pneg %p536
        $region134: #{cross_attn_encoder.1} parent=131 // pred_check_branch
          %801 = sbr.rel (%p799) target = $region136
        $region135: #{cross_attn_encoder.1} parent=131 // pred_region
          %802 = dma.done [#allocation3], 2048
        $region136: #{cross_attn_encoder.1} parent=131 // pred_fallthru
          _
        %p803 = scmp.lt.s32.totalorder %s43, 1
        %s804 = scalar_select %p803, %s43, 1
        %s805 = smul.addr %s804, 8
        %s806 = scalar_lea.vmem %s0, %s805
        %p807 = pneg %p64
        %p808 = pneg %p61
        %p809 = scmp.lt.s32.totalorder %s43, 1
        %s810 = scalar_select %p809, %s43, 1
        %s811 = smul.addr %s810, 8
        %s812 = scalar_lea.vmem %s1, %s811
        %p813 = pneg %p90
        %p814 = pneg %p87
        %p815 = scmp.lt.s32.totalorder %s43, 1
        %s816 = scalar_select %p815, %s43, 1
        %s817 = smul.addr %s816, 8
        %s818 = scalar_lea.vmem %s2, %s817
        %p819 = pneg %p116
        %p820 = pneg %p113
        %p821 = pneg %p137
        %p822 = pneg %p134
        %p823 = pneg %p158
        %p824 = pneg %p155
        %p825 = pneg %p179
        %p826 = pneg %p176
        %p827 = pneg %p200
        %p828 = pneg %p197
        %p829 = pneg %p221
        %p830 = pneg %p218
        %p831 = pneg %p242
        %p832 = pneg %p239
        %p833 = pneg %p263
        %p834 = pneg %p260
        %p835 = pneg %p284
        %p836 = pneg %p281
        %p837 = pneg %p305
        %p838 = pneg %p302
        %p839 = pneg %p326
        %p840 = pneg %p323
        %p841 = pneg %p347
        %p842 = pneg %p344
        %p843 = pneg %p368
        %p844 = pneg %p365
        %p845 = pneg %p389
        %p846 = pneg %p386
        %p847 = pneg %p410
        %p848 = pneg %p407
        %p849 = pneg %p431
        %p850 = pneg %p428
        %p851 = pneg %p452
        %p852 = pneg %p449
        %p853 = pneg %p473
        %p854 = pneg %p470
        %p855 = pneg %p494
        %p856 = pneg %p491
        %p857 = pneg %p515
        %p858 = pneg %p512
        %p859 = pneg %p536
        %p860 = pneg %p533
        %p861 = pneg %p557
        %p862 = pneg %p554
        %p863 = pneg %p578
        %p864 = pneg %p575
        %p865 = pneg %p599
        %p866 = pneg %p596
        %p867 = pneg %p620
        %p868 = pneg %p617
        %p869 = pneg %p641
        %p870 = pneg %p638
        %p871 = pneg %p667
        %p872 = pneg %p664
        %s873 = sand.u32 %s654, 1
        %s874 = scalar_lea.sflag [#allocation4], %s873
        %s875 = sand.u32 %s654, 1
        %s876 = smul.addr %s875, 8
        %s877 = scalar_lea.vmem [#allocation5], %s876
        %p878 = scmp.lt.s32.totalorder %s43, 1
        %s879 = scalar_select %p878, %s43, 1
        %s880 = smul.addr %s879, 8
        %s881 = scalar_lea.vmem %s0, %s880
        %p882 = scmp.lt.s32.totalorder %s43, 1
        %s883 = scalar_select %p882, %s43, 1
        %s884 = smul.addr %s883, 8
        %s885 = scalar_lea.vmem %s1, %s884
        %p886 = scmp.lt.s32.totalorder %s43, 1
        %s887 = scalar_select %p886, %s43, 1
        %s888 = smul.addr %s887, 8
        %s889 = scalar_lea.vmem %s2, %s888
        %v890 = vlaneseq
        %v891 = vand.u32 %v890, 127
        %vm892 = vcmp.ge.s32.totalorder %v891, 0
        %vm893 = vcmp.ge.s32.totalorder %v891, 16
        %vm894 = vcmp.ge.s32.totalorder %v891, 32
        %vm895 = vcmp.ge.s32.totalorder %v891, 48
        %vm896 = vcmp.ge.s32.totalorder %v891, 64
        %vm897 = vcmp.ge.s32.totalorder %v891, 80
        %vm898 = vcmp.ge.s32.totalorder %v891, 96
        %vm899 = vcmp.ge.s32.totalorder %v891, 112
        %vm900 = vcmp.lt.s32.totalorder %v891, 16
        %vm901 = vcmp.lt.s32.totalorder %v891, 32
        %vm902 = vcmp.lt.s32.totalorder %v891, 48
        %vm903 = vcmp.lt.s32.totalorder %v891, 64
        %vm904 = vcmp.lt.s32.totalorder %v891, 80
        %vm905 = vcmp.lt.s32.totalorder %v891, 96
        %vm906 = vcmp.lt.s32.totalorder %v891, 112
        %vm907 = vcmp.lt.s32.totalorder %v891, 128
        %vm908 = vmand %vm892, %vm900
        %vm909 = vmand %vm893, %vm901
        %vm910 = vmand %vm894, %vm902
        %vm911 = vmand %vm895, %vm903
        %vm912 = vmand %vm896, %vm904
        %vm913 = vmand %vm897, %vm905
        %vm914 = vmand %vm898, %vm906
        %vm915 = vmand %vm899, %vm907
        %v916 = vsel %vm908, 1, 0
        %v917 = vsel %vm909, 1, 0
        %v918 = vsel %vm910, 1, 0
        %v919 = vsel %vm911, 1, 0
        %v920 = vsel %vm912, 1, 0
        %v921 = vsel %vm913, 1, 0
        %v922 = vsel %vm914, 1, 0
        %v923 = vsel %vm915, 1, 0
        %v924 = vcvt.s32.f32 %v916
        %v925 = vcvt.s32.f32 %v917
        %v926 = vcvt.s32.f32 %v918
        %v927 = vcvt.s32.f32 %v919
        %v928 = vcvt.s32.f32 %v920
        %v929 = vcvt.s32.f32 %v921
        %v930 = vcvt.s32.f32 %v922
        %v931 = vcvt.s32.f32 %v923
        %v932 = vld [vmem:[%s881] sm:$0xff]
        %v933 = vld [vmem:[%s885] sm:$0xff]
        %v934 = vld [vmem:[%s889] sm:$0xff]
        %v935 = vld [vmem:[%s3] sm:$0x1]
        %937 = vset.pattern.permute.xlu0 0
        %938 = vperm.xlu0 %937, %v934
        %v939 = vpop.permute.xlu0 %938
        %v942 = vlaneseq
        %v943 = vshrl.u32 %v942, 7
        %v944 = vsub.s32 0, %v943
        %v945 = vrot.slane %v935, %v944
        %v947 = vmul.f32 %v939, %v945
        %v948 = vld [vmem:[%s4] sm:$0x1]
        %v950 = vlaneseq
        %v951 = vshrl.u32 %v950, 7
        %v952 = vsub.s32 0, %v951
        %v953 = vrot.slane %v948, %v952
        %v955 = vadd.f32 %v947, %v953
        %v956 = vmax.f32 %v955, 0.0
        %v957 = vld [vmem:[%s5] sm:$0xff]
        %v958 = vld [vmem:[%s5 + $0x8] sm:$0xff]
        %v959 = vld [vmem:[%s5 + $0x10] sm:$0xff]
        %v960 = vld [vmem:[%s5 + $0x18] sm:$0xff]
        %v961 = vld [vmem:[%s5 + $0x20] sm:$0xff]
        %v962 = vld [vmem:[%s5 + $0x28] sm:$0xff]
        %v963 = vld [vmem:[%s5 + $0x30] sm:$0xff]
        %v964 = vld [vmem:[%s5 + $0x38] sm:$0xff]
        %v965 = vld [vmem:[%s5 + $0x40] sm:$0xff]
        %v966 = vld [vmem:[%s5 + $0x48] sm:$0xff]
        %v967 = vld [vmem:[%s5 + $0x50] sm:$0xff]
        %v968 = vld [vmem:[%s5 + $0x58] sm:$0xff]
        %v969 = vld [vmem:[%s5 + $0x60] sm:$0xff]
        %v970 = vld [vmem:[%s5 + $0x68] sm:$0xff]
        %v971 = vld [vmem:[%s5 + $0x70] sm:$0xff]
        %v972 = vld [vmem:[%s5 + $0x78] sm:$0xff]
        %v973 = vld [vmem:[%s6] sm:$0x1]
        %v975 = vlaneseq
        %v976 = vshrl.u32 %v975, 7
        %v977 = vsub.s32 0, %v976
        %v978 = vrot.slane %v973, %v977
        %980 = vmatprep.subr.mxu0 0.0
        %981 = vmatpush1.msra.mxu0 %v972
        %982 = vmatprep.subr.mxu0 0.0
        %983 = vmatpush1.msra.mxu0 %v971
        %984 = vmatprep.subr.mxu0 0.0
        %985 = vmatpush1.msra.mxu0 %v970
        %986 = vmatprep.subr.mxu0 0.0
        %987 = vmatpush1.msra.mxu0 %v969
        %988 = vmatprep.subr.mxu0 0.0
        %989 = vmatpush1.msra.mxu0 %v968
        %990 = vmatprep.subr.mxu0 0.0
        %991 = vmatpush1.msra.mxu0 %v967
        %992 = vmatprep.subr.mxu0 0.0
        %993 = vmatpush1.msra.mxu0 %v966
        %994 = vmatprep.subr.mxu0 0.0
        %995 = vmatpush1.msra.mxu0 %v965
        %996 = vmatprep.subr.mxu0 0.0
        %997 = vmatpush1.msra.mxu0 %v964
        %998 = vmatprep.subr.mxu0 0.0
        %999 = vmatpush1.msra.mxu0 %v963
        %1000 = vmatprep.subr.mxu0 0.0
        %1001 = vmatpush1.msra.mxu0 %v962
        %1002 = vmatprep.subr.mxu0 0.0
        %1003 = vmatpush1.msra.mxu0 %v961
        %1004 = vmatprep.subr.mxu0 0.0
        %1005 = vmatpush1.msra.mxu0 %v960
        %1006 = vmatprep.subr.mxu0 0.0
        %1007 = vmatpush1.msra.mxu0 %v959
        %1008 = vmatprep.subr.mxu0 0.0
        %1009 = vmatpush1.msra.mxu0 %v958
        %1010 = vmatprep.subr.mxu0 0.0
        %1011 = vmatpush1.msra.mxu0 %v957
        %1012 = vmatprep.subr.mxu0 0.0
        %1013 = vmatpush2.msra.mxu0 0.0
        %1014 = vmatprep.subr.mxu0 0.0
        %1015 = vmatpush2.msra.mxu0 0.0
        %1016 = vmatprep.subr.mxu0 0.0
        %1017 = vmatpush2.msra.mxu0 0.0
        %1018 = vmatprep.subr.mxu0 0.0
        %1019 = vmatpush2.msra.mxu0 0.0
        %1020 = vmatprep.subr.mxu0 0.0
        %1021 = vmatpush2.msra.mxu0 0.0
        %1022 = vmatprep.subr.mxu0 0.0
        %1023 = vmatpush2.msra.mxu0 0.0
        %1024 = vmatprep.subr.mxu0 0.0
        %1025 = vmatpush2.msra.mxu0 0.0
        %1026 = vmatprep.subr.mxu0 0.0
        %1027 = vmatpush2.msra.mxu0 0.0
        %1028 = vmatprep.subr.mxu0 0.0
        %1029 = vmatpush2.msra.mxu0 0.0
        %1030 = vmatprep.subr.mxu0 0.0
        %1031 = vmatpush2.msra.mxu0 0.0
        %1032 = vmatprep.subr.mxu0 0.0
        %1033 = vmatpush2.msra.mxu0 0.0
        %1034 = vmatprep.subr.mxu0 0.0
        %1035 = vmatpush2.msra.mxu0 0.0
        %1036 = vmatprep.subr.mxu0 0.0
        %1037 = vmatpush2.msra.mxu0 0.0
        %1038 = vmatprep.subr.mxu0 0.0
        %1039 = vmatpush2.msra.mxu0 0.0
        %1040 = vmatprep.subr.mxu0 0.0
        %1041 = vmatpush2.msra.mxu0 0.0
        %1042 = vmatprep.subr.mxu0 0.0
        %1043 = vmatpush2.msra.mxu0 0.0
        %1044 = vmatprep.mubr.f32.mxu0 0.0
        %1045 = vmatmul.mubr.f32.gmra.mxu0 %v956
        %v1046 = vpop.f32.mrf.mxu0
        %v1047 = vadd.f32 %v978, %v1046
        %v1048 = vpop.f32.mrf.mxu0
        %1049 = vdwg.mxu0
        %1051 = vset.pattern.permute.xlu0 0
        %1052 = vperm.xlu0 %1051, %v932
        %v1053 = vpop.permute.xlu0 %1052
        %v1055 = vmul.f32 %v1053, %v945
        %v1056 = vadd.f32 %v1055, %v953
        %v1057 = vmax.f32 %v1056, 0.0
        %1058 = vmatprep.subr.mxu0 0.0
        %1059 = vmatpush1.msra.mxu0 %v972
        %1060 = vmatprep.subr.mxu0 0.0
        %1061 = vmatpush1.msra.mxu0 %v971
        %1062 = vmatprep.subr.mxu0 0.0
        %1063 = vmatpush1.msra.mxu0 %v970
        %1064 = vmatprep.subr.mxu0 0.0
        %1065 = vmatpush1.msra.mxu0 %v969
        %1066 = vmatprep.subr.mxu0 0.0
        %1067 = vmatpush1.msra.mxu0 %v968
        %1068 = vmatprep.subr.mxu0 0.0
        %1069 = vmatpush1.msra.mxu0 %v967
        %1070 = vmatprep.subr.mxu0 0.0
        %1071 = vmatpush1.msra.mxu0 %v966
        %1072 = vmatprep.subr.mxu0 0.0
        %1073 = vmatpush1.msra.mxu0 %v965
        %1074 = vmatprep.subr.mxu0 0.0
        %1075 = vmatpush1.msra.mxu0 %v964
        %1076 = vmatprep.subr.mxu0 0.0
        %1077 = vmatpush1.msra.mxu0 %v963
        %1078 = vmatprep.subr.mxu0 0.0
        %1079 = vmatpush1.msra.mxu0 %v962
        %1080 = vmatprep.subr.mxu0 0.0
        %1081 = vmatpush1.msra.mxu0 %v961
        %1082 = vmatprep.subr.mxu0 0.0
        %1083 = vmatpush1.msra.mxu0 %v960
        %1084 = vmatprep.subr.mxu0 0.0
        %1085 = vmatpush1.msra.mxu0 %v959
        %1086 = vmatprep.subr.mxu0 0.0
        %1087 = vmatpush1.msra.mxu0 %v958
        %1088 = vmatprep.subr.mxu0 0.0
        %1089 = vmatpush1.msra.mxu0 %v957
        %1090 = vmatprep.subr.mxu0 0.0
        %1091 = vmatpush2.msra.mxu0 0.0
        %1092 = vmatprep.subr.mxu0 0.0
        %1093 = vmatpush2.msra.mxu0 0.0
        %1094 = vmatprep.subr.mxu0 0.0
        %1095 = vmatpush2.msra.mxu0 0.0
        %1096 = vmatprep.subr.mxu0 0.0
        %1097 = vmatpush2.msra.mxu0 0.0
        %1098 = vmatprep.subr.mxu0 0.0
        %1099 = vmatpush2.msra.mxu0 0.0
        %1100 = vmatprep.subr.mxu0 0.0
        %1101 = vmatpush2.msra.mxu0 0.0
        %1102 = vmatprep.subr.mxu0 0.0
        %1103 = vmatpush2.msra.mxu0 0.0
        %1104 = vmatprep.subr.mxu0 0.0
        %1105 = vmatpush2.msra.mxu0 0.0
        %1106 = vmatprep.subr.mxu0 0.0
        %1107 = vmatpush2.msra.mxu0 0.0
        %1108 = vmatprep.subr.mxu0 0.0
        %1109 = vmatpush2.msra.mxu0 0.0
        %1110 = vmatprep.subr.mxu0 0.0
        %1111 = vmatpush2.msra.mxu0 0.0
        %1112 = vmatprep.subr.mxu0 0.0
        %1113 = vmatpush2.msra.mxu0 0.0
        %1114 = vmatprep.subr.mxu0 0.0
        %1115 = vmatpush2.msra.mxu0 0.0
        %1116 = vmatprep.subr.mxu0 0.0
        %1117 = vmatpush2.msra.mxu0 0.0
        %1118 = vmatprep.subr.mxu0 0.0
        %1119 = vmatpush2.msra.mxu0 0.0
        %1120 = vmatprep.subr.mxu0 0.0
        %1121 = vmatpush2.msra.mxu0 0.0
        %1122 = vmatprep.mubr.f32.mxu0 0.0
        %1123 = vmatmul.mubr.f32.gmra.mxu0 %v1057
        %v1124 = vpop.f32.mrf.mxu0
        %v1125 = vadd.f32 %v978, %v1124
        %v1126 = vpop.f32.mrf.mxu0
        %1127 = vdwg.mxu0
        %v1128 = vld [vmem:[%s7] sm:$0x1]
        %v1130 = vlaneseq
        %v1131 = vshrl.u32 %v1130, 7
        %v1132 = vsub.s32 0, %v1131
        %v1133 = vrot.slane %v1128, %v1132
        %v1135 = vmul.f32 %v1053, %v1133
        %v1136 = vld [vmem:[%s8] sm:$0x1]
        %1138 = vset.pattern.permute.xlu0 0
        %1139 = vperm.xlu0 %1138, %v933
        %v1140 = vpop.permute.xlu0 %1139
        %v1143 = vlaneseq
        %v1144 = vshrl.u32 %v1143, 7
        %v1145 = vsub.s32 0, %v1144
        %v1146 = vrot.slane %v1136, %v1145
        %v1148 = vmul.f32 %v1140, %v1146
        %v1149 = vadd.f32 %v1135, %v1148
        %v1150 = vld [vmem:[%s9] sm:$0x1]
        %v1152 = vlaneseq
        %v1153 = vshrl.u32 %v1152, 7
        %v1154 = vsub.s32 0, %v1153
        %v1155 = vrot.slane %v1150, %v1154
        %v1157 = vadd.f32 %v1149, %v1155
        %v1158 = vmax.f32 %v1157, 0.0
        %v1159 = vld [vmem:[%s10] sm:$0xff]
        %v1160 = vld [vmem:[%s10 + $0x8] sm:$0xff]
        %v1161 = vld [vmem:[%s10 + $0x10] sm:$0xff]
        %v1162 = vld [vmem:[%s10 + $0x18] sm:$0xff]
        %v1163 = vld [vmem:[%s10 + $0x20] sm:$0xff]
        %v1164 = vld [vmem:[%s10 + $0x28] sm:$0xff]
        %v1165 = vld [vmem:[%s10 + $0x30] sm:$0xff]
        %v1166 = vld [vmem:[%s10 + $0x38] sm:$0xff]
        %v1167 = vld [vmem:[%s10 + $0x40] sm:$0xff]
        %v1168 = vld [vmem:[%s10 + $0x48] sm:$0xff]
        %v1169 = vld [vmem:[%s10 + $0x50] sm:$0xff]
        %v1170 = vld [vmem:[%s10 + $0x58] sm:$0xff]
        %v1171 = vld [vmem:[%s10 + $0x60] sm:$0xff]
        %v1172 = vld [vmem:[%s10 + $0x68] sm:$0xff]
        %v1173 = vld [vmem:[%s10 + $0x70] sm:$0xff]
        %v1174 = vld [vmem:[%s10 + $0x78] sm:$0xff]
        %v1175 = vld [vmem:[%s11] sm:$0x1]
        %v1177 = vlaneseq
        %v1178 = vshrl.u32 %v1177, 7
        %v1179 = vsub.s32 0, %v1178
        %v1180 = vrot.slane %v1175, %v1179
        %1182 = vmatprep.subr.mxu0 0.0
        %1183 = vmatpush1.msra.mxu0 %v1174
        %1184 = vmatprep.subr.mxu0 0.0
        %1185 = vmatpush1.msra.mxu0 %v1173
        %1186 = vmatprep.subr.mxu0 0.0
        %1187 = vmatpush1.msra.mxu0 %v1172
        %1188 = vmatprep.subr.mxu0 0.0
        %1189 = vmatpush1.msra.mxu0 %v1171
        %1190 = vmatprep.subr.mxu0 0.0
        %1191 = vmatpush1.msra.mxu0 %v1170
        %1192 = vmatprep.subr.mxu0 0.0
        %1193 = vmatpush1.msra.mxu0 %v1169
        %1194 = vmatprep.subr.mxu0 0.0
        %1195 = vmatpush1.msra.mxu0 %v1168
        %1196 = vmatprep.subr.mxu0 0.0
        %1197 = vmatpush1.msra.mxu0 %v1167
        %1198 = vmatprep.subr.mxu0 0.0
        %1199 = vmatpush1.msra.mxu0 %v1166
        %1200 = vmatprep.subr.mxu0 0.0
        %1201 = vmatpush1.msra.mxu0 %v1165
        %1202 = vmatprep.subr.mxu0 0.0
        %1203 = vmatpush1.msra.mxu0 %v1164
        %1204 = vmatprep.subr.mxu0 0.0
        %1205 = vmatpush1.msra.mxu0 %v1163
        %1206 = vmatprep.subr.mxu0 0.0
        %1207 = vmatpush1.msra.mxu0 %v1162
        %1208 = vmatprep.subr.mxu0 0.0
        %1209 = vmatpush1.msra.mxu0 %v1161
        %1210 = vmatprep.subr.mxu0 0.0
        %1211 = vmatpush1.msra.mxu0 %v1160
        %1212 = vmatprep.subr.mxu0 0.0
        %1213 = vmatpush1.msra.mxu0 %v1159
        %1214 = vmatprep.subr.mxu0 0.0
        %1215 = vmatpush2.msra.mxu0 0.0
        %1216 = vmatprep.subr.mxu0 0.0
        %1217 = vmatpush2.msra.mxu0 0.0
        %1218 = vmatprep.subr.mxu0 0.0
        %1219 = vmatpush2.msra.mxu0 0.0
        %1220 = vmatprep.subr.mxu0 0.0
        %1221 = vmatpush2.msra.mxu0 0.0
        %1222 = vmatprep.subr.mxu0 0.0
        %1223 = vmatpush2.msra.mxu0 0.0
        %1224 = vmatprep.subr.mxu0 0.0
        %1225 = vmatpush2.msra.mxu0 0.0
        %1226 = vmatprep.subr.mxu0 0.0
        %1227 = vmatpush2.msra.mxu0 0.0
        %1228 = vmatprep.subr.mxu0 0.0
        %1229 = vmatpush2.msra.mxu0 0.0
        %1230 = vmatprep.subr.mxu0 0.0
        %1231 = vmatpush2.msra.mxu0 0.0
        %1232 = vmatprep.subr.mxu0 0.0
        %1233 = vmatpush2.msra.mxu0 0.0
        %1234 = vmatprep.subr.mxu0 0.0
        %1235 = vmatpush2.msra.mxu0 0.0
        %1236 = vmatprep.subr.mxu0 0.0
        %1237 = vmatpush2.msra.mxu0 0.0
        %1238 = vmatprep.subr.mxu0 0.0
        %1239 = vmatpush2.msra.mxu0 0.0
        %1240 = vmatprep.subr.mxu0 0.0
        %1241 = vmatpush2.msra.mxu0 0.0
        %1242 = vmatprep.subr.mxu0 0.0
        %1243 = vmatpush2.msra.mxu0 0.0
        %1244 = vmatprep.subr.mxu0 0.0
        %1245 = vmatpush2.msra.mxu0 0.0
        %1246 = vmatprep.mubr.f32.mxu0 0.0
        %1247 = vmatmul.mubr.f32.gmra.mxu0 %v1158
        %v1248 = vpop.f32.mrf.mxu0
        %v1249 = vadd.f32 %v1180, %v1248
        %v1250 = vpop.f32.mrf.mxu0
        %1251 = vdwg.mxu0
        %v1252 = vld [vmem:[%s12] sm:$0xff]
        %v1253 = vld [vmem:[%s12 + $0x8] sm:$0xff]
        %v1254 = vld [vmem:[%s12 + $0x10] sm:$0xff]
        %v1255 = vld [vmem:[%s12 + $0x18] sm:$0xff]
        %v1256 = vld [vmem:[%s12 + $0x20] sm:$0xff]
        %v1257 = vld [vmem:[%s12 + $0x28] sm:$0xff]
        %v1258 = vld [vmem:[%s12 + $0x30] sm:$0xff]
        %v1259 = vld [vmem:[%s12 + $0x38] sm:$0xff]
        %v1260 = vld [vmem:[%s12 + $0x40] sm:$0xff]
        %v1261 = vld [vmem:[%s12 + $0x48] sm:$0xff]
        %v1262 = vld [vmem:[%s12 + $0x50] sm:$0xff]
        %v1263 = vld [vmem:[%s12 + $0x58] sm:$0xff]
        %v1264 = vld [vmem:[%s12 + $0x60] sm:$0xff]
        %v1265 = vld [vmem:[%s12 + $0x68] sm:$0xff]
        %v1266 = vld [vmem:[%s12 + $0x70] sm:$0xff]
        %v1267 = vld [vmem:[%s12 + $0x78] sm:$0xff]
        %v1268 = vld [vmem:[%s12 + $0x80] sm:$0xff]
        %v1269 = vld [vmem:[%s12 + $0x88] sm:$0xff]
        %v1270 = vld [vmem:[%s12 + $0x90] sm:$0xff]
        %v1271 = vld [vmem:[%s12 + $0x98] sm:$0xff]
        %v1272 = vld [vmem:[%s12 + $0xa0] sm:$0xff]
        %v1273 = vld [vmem:[%s12 + $0xa8] sm:$0xff]
        %v1274 = vld [vmem:[%s12 + $0xb0] sm:$0xff]
        %v1275 = vld [vmem:[%s12 + $0xb8] sm:$0xff]
        %v1276 = vld [vmem:[%s12 + $0xc0] sm:$0xff]
        %v1277 = vld [vmem:[%s12 + $0xc8] sm:$0xff]
        %v1278 = vld [vmem:[%s12 + $0xd0] sm:$0xff]
        %v1279 = vld [vmem:[%s12 + $0xd8] sm:$0xff]
        %v1280 = vld [vmem:[%s12 + $0xe0] sm:$0xff]
        %v1281 = vld [vmem:[%s12 + $0xe8] sm:$0xff]
        %v1282 = vld [vmem:[%s12 + $0xf0] sm:$0xff]
        %v1283 = vld [vmem:[%s12 + $0xf8] sm:$0xff]
        %v1284 = vld [vmem:[%s12 + $0x100] sm:$0xff]
        %v1285 = vld [vmem:[%s12 + $0x108] sm:$0xff]
        %v1286 = vld [vmem:[%s12 + $0x110] sm:$0xff]
        %v1287 = vld [vmem:[%s12 + $0x118] sm:$0xff]
        %v1288 = vld [vmem:[%s12 + $0x120] sm:$0xff]
        %v1289 = vld [vmem:[%s12 + $0x128] sm:$0xff]
        %v1290 = vld [vmem:[%s12 + $0x130] sm:$0xff]
        %v1291 = vld [vmem:[%s12 + $0x138] sm:$0xff]
        %v1292 = vld [vmem:[%s12 + $0x140] sm:$0xff]
        %v1293 = vld [vmem:[%s12 + $0x148] sm:$0xff]
        %v1294 = vld [vmem:[%s12 + $0x150] sm:$0xff]
        %v1295 = vld [vmem:[%s12 + $0x158] sm:$0xff]
        %v1296 = vld [vmem:[%s12 + $0x160] sm:$0xff]
        %v1297 = vld [vmem:[%s12 + $0x168] sm:$0xff]
        %v1298 = vld [vmem:[%s12 + $0x170] sm:$0xff]
        %v1299 = vld [vmem:[%s12 + $0x178] sm:$0xff]
        %1300 = vmatprep.subr.mxu0 %v1298
        %1301 = vmatpush1.msra.mxu0 %v1297
        %1302 = vmatprep.subr.mxu0 %v1295
        %1303 = vmatpush1.msra.mxu0 %v1294
        %1304 = vmatprep.subr.mxu0 %v1292
        %1305 = vmatpush1.msra.mxu0 %v1291
        %1306 = vmatprep.subr.mxu0 %v1289
        %1307 = vmatpush1.msra.mxu0 %v1288
        %1308 = vmatprep.subr.mxu0 %v1286
        %1309 = vmatpush1.msra.mxu0 %v1285
        %1310 = vmatprep.subr.mxu0 %v1283
        %1311 = vmatpush1.msra.mxu0 %v1282
        %1312 = vmatprep.subr.mxu0 %v1280
        %1313 = vmatpush1.msra.mxu0 %v1279
        %1314 = vmatprep.subr.mxu0 %v1277
        %1315 = vmatpush1.msra.mxu0 %v1276
        %1316 = vmatprep.subr.mxu0 %v1274
        %1317 = vmatpush1.msra.mxu0 %v1273
        %1318 = vmatprep.subr.mxu0 %v1271
        %1319 = vmatpush1.msra.mxu0 %v1270
        %1320 = vmatprep.subr.mxu0 %v1268
        %1321 = vmatpush1.msra.mxu0 %v1267
        %1322 = vmatprep.subr.mxu0 %v1265
        %1323 = vmatpush1.msra.mxu0 %v1264
        %1324 = vmatprep.subr.mxu0 %v1262
        %1325 = vmatpush1.msra.mxu0 %v1261
        %1326 = vmatprep.subr.mxu0 %v1259
        %1327 = vmatpush1.msra.mxu0 %v1258
        %1328 = vmatprep.subr.mxu0 %v1256
        %1329 = vmatpush1.msra.mxu0 %v1255
        %1330 = vmatprep.subr.mxu0 %v1253
        %1331 = vmatpush1.msra.mxu0 %v1252
        %1332 = vmatprep.subr.mxu0 0.0
        %1333 = vmatpush2.msra.mxu0 0.0
        %1334 = vmatprep.subr.mxu0 0.0
        %1335 = vmatpush2.msra.mxu0 0.0
        %1336 = vmatprep.subr.mxu0 0.0
        %1337 = vmatpush2.msra.mxu0 0.0
        %1338 = vmatprep.subr.mxu0 0.0
        %1339 = vmatpush2.msra.mxu0 0.0
        %1340 = vmatprep.subr.mxu0 0.0
        %1341 = vmatpush2.msra.mxu0 0.0
        %1342 = vmatprep.subr.mxu0 0.0
        %1343 = vmatpush2.msra.mxu0 0.0
        %1344 = vmatprep.subr.mxu0 0.0
        %1345 = vmatpush2.msra.mxu0 0.0
        %1346 = vmatprep.subr.mxu0 0.0
        %1347 = vmatpush2.msra.mxu0 0.0
        %1348 = vmatprep.subr.mxu0 0.0
        %1349 = vmatpush2.msra.mxu0 0.0
        %1350 = vmatprep.subr.mxu0 0.0
        %1351 = vmatpush2.msra.mxu0 0.0
        %1352 = vmatprep.subr.mxu0 0.0
        %1353 = vmatpush2.msra.mxu0 0.0
        %1354 = vmatprep.subr.mxu0 0.0
        %1355 = vmatpush2.msra.mxu0 0.0
        %1356 = vmatprep.subr.mxu0 0.0
        %1357 = vmatpush2.msra.mxu0 0.0
        %1358 = vmatprep.subr.mxu0 0.0
        %1359 = vmatpush2.msra.mxu0 0.0
        %1360 = vmatprep.subr.mxu0 0.0
        %1361 = vmatpush2.msra.mxu0 0.0
        %1362 = vmatprep.subr.mxu0 0.0
        %1363 = vmatpush2.msra.mxu0 0.0
        %1364 = vmatprep.mubr.f32.mxu0 0.0
        %1365 = vmatmul.mubr.f32.gmra.mxu0 %v1249
        %v1366 = vpop.f32.mrf.mxu0
        %v1367 = vadd.f32 0.0, %v1366
        %v1368 = vpop.f32.mrf.mxu0
        %v1369 = vadd.f32 0.0, %v1368
        %1370 = vdwg.mxu0
        %1371 = vmatprep.subr.mxu0 0.0
        %1372 = vmatpush1.msra.mxu0 %v1299
        %1373 = vmatprep.subr.mxu0 0.0
        %1374 = vmatpush1.msra.mxu0 %v1296
        %1375 = vmatprep.subr.mxu0 0.0
        %1376 = vmatpush1.msra.mxu0 %v1293
        %1377 = vmatprep.subr.mxu0 0.0
        %1378 = vmatpush1.msra.mxu0 %v1290
        %1379 = vmatprep.subr.mxu0 0.0
        %1380 = vmatpush1.msra.mxu0 %v1287
        %1381 = vmatprep.subr.mxu0 0.0
        %1382 = vmatpush1.msra.mxu0 %v1284
        %1383 = vmatprep.subr.mxu0 0.0
        %1384 = vmatpush1.msra.mxu0 %v1281
        %1385 = vmatprep.subr.mxu0 0.0
        %1386 = vmatpush1.msra.mxu0 %v1278
        %1387 = vmatprep.subr.mxu0 0.0
        %1388 = vmatpush1.msra.mxu0 %v1275
        %1389 = vmatprep.subr.mxu0 0.0
        %1390 = vmatpush1.msra.mxu0 %v1272
        %1391 = vmatprep.subr.mxu0 0.0
        %1392 = vmatpush1.msra.mxu0 %v1269
        %1393 = vmatprep.subr.mxu0 0.0
        %1394 = vmatpush1.msra.mxu0 %v1266
        %1395 = vmatprep.subr.mxu0 0.0
        %1396 = vmatpush1.msra.mxu0 %v1263
        %1397 = vmatprep.subr.mxu0 0.0
        %1398 = vmatpush1.msra.mxu0 %v1260
        %1399 = vmatprep.subr.mxu0 0.0
        %1400 = vmatpush1.msra.mxu0 %v1257
        %1401 = vmatprep.subr.mxu0 0.0
        %1402 = vmatpush1.msra.mxu0 %v1254
        %1403 = vmatprep.subr.mxu0 0.0
        %1404 = vmatpush2.msra.mxu0 0.0
        %1405 = vmatprep.subr.mxu0 0.0
        %1406 = vmatpush2.msra.mxu0 0.0
        %1407 = vmatprep.subr.mxu0 0.0
        %1408 = vmatpush2.msra.mxu0 0.0
        %1409 = vmatprep.subr.mxu0 0.0
        %1410 = vmatpush2.msra.mxu0 0.0
        %1411 = vmatprep.subr.mxu0 0.0
        %1412 = vmatpush2.msra.mxu0 0.0
        %1413 = vmatprep.subr.mxu0 0.0
        %1414 = vmatpush2.msra.mxu0 0.0
        %1415 = vmatprep.subr.mxu0 0.0
        %1416 = vmatpush2.msra.mxu0 0.0
        %1417 = vmatprep.subr.mxu0 0.0
        %1418 = vmatpush2.msra.mxu0 0.0
        %1419 = vmatprep.subr.mxu0 0.0
        %1420 = vmatpush2.msra.mxu0 0.0
        %1421 = vmatprep.subr.mxu0 0.0
        %1422 = vmatpush2.msra.mxu0 0.0
        %1423 = vmatprep.subr.mxu0 0.0
        %1424 = vmatpush2.msra.mxu0 0.0
        %1425 = vmatprep.subr.mxu0 0.0
        %1426 = vmatpush2.msra.mxu0 0.0
        %1427 = vmatprep.subr.mxu0 0.0
        %1428 = vmatpush2.msra.mxu0 0.0
        %1429 = vmatprep.subr.mxu0 0.0
        %1430 = vmatpush2.msra.mxu0 0.0
        %1431 = vmatprep.subr.mxu0 0.0
        %1432 = vmatpush2.msra.mxu0 0.0
        %1433 = vmatprep.subr.mxu0 0.0
        %1434 = vmatpush2.msra.mxu0 0.0
        %1435 = vmatprep.mubr.f32.mxu0 0.0
        %1436 = vmatmul.mubr.f32.gmra.mxu0 %v1249
        %v1437 = vpop.f32.mrf.mxu0
        %v1438 = vadd.f32 0.0, %v1437
        %v1439 = vpop.f32.mrf.mxu0
        %1440 = vdwg.mxu0
        %v1441 = vld [vmem:[%s13] sm:$0xff]
        %v1442 = vld [vmem:[%s13 + $0x8] sm:$0xff]
        %v1443 = vld [vmem:[%s13 + $0x10] sm:$0xff]
        %v1444 = vld [vmem:[%s13 + $0x18] sm:$0xff]
        %v1445 = vld [vmem:[%s13 + $0x20] sm:$0xff]
        %v1446 = vld [vmem:[%s13 + $0x28] sm:$0xff]
        %v1447 = vld [vmem:[%s13 + $0x30] sm:$0xff]
        %v1448 = vld [vmem:[%s13 + $0x38] sm:$0xff]
        %v1449 = vld [vmem:[%s13 + $0x40] sm:$0xff]
        %v1450 = vld [vmem:[%s13 + $0x48] sm:$0xff]
        %v1451 = vld [vmem:[%s13 + $0x50] sm:$0xff]
        %v1452 = vld [vmem:[%s13 + $0x58] sm:$0xff]
        %v1453 = vld [vmem:[%s13 + $0x60] sm:$0xff]
        %v1454 = vld [vmem:[%s13 + $0x68] sm:$0xff]
        %v1455 = vld [vmem:[%s13 + $0x70] sm:$0xff]
        %v1456 = vld [vmem:[%s13 + $0x78] sm:$0xff]
        %v1457 = vld [vmem:[%s14] sm:$0x1]
        %v1458 = vld [vmem:[%s15] sm:$0x1]
        %v1459 = vld [vmem:[%s16] sm:$0x1]
        %v1460 = vld [vmem:[%s17] sm:$0x1]
        %v1461 = vld [vmem:[%s18] sm:$0x1]
        %v1462 = vmul.f32 %v1367, 0.088388346
        %v1463 = vmul.f32 %v1462, %v924
        %v1464 = vmul.f32 %v1462, %v925
        %v1465 = vmul.f32 %v1462, %v926
        %v1466 = vmul.f32 %v1462, %v927
        %v1467 = vmul.f32 %v1462, %v928
        %v1468 = vmul.f32 %v1462, %v929
        %v1469 = vmul.f32 %v1462, %v930
        %v1470 = vmul.f32 %v1462, %v931
        %v1471 = vmul.f32 %v1438, %v924
        %v1472 = vmul.f32 %v1438, %v925
        %v1473 = vmul.f32 %v1438, %v926
        %v1474 = vmul.f32 %v1438, %v927
        %v1475 = vmul.f32 %v1438, %v928
        %v1476 = vmul.f32 %v1438, %v929
        %v1477 = vmul.f32 %v1438, %v930
        %v1478 = vmul.f32 %v1438, %v931
        %1479 = vmatprep.subr.mxu0 0.0
        %1480 = vmatpush1.xpose.msra.mxu0 0.0
        %1481 = vmatprep.subr.mxu0 0.0
        %1482 = vmatpush1.xpose.msra.mxu0 0.0
        %1483 = vmatprep.subr.mxu0 0.0
        %1484 = vmatpush1.xpose.msra.mxu0 0.0
        %1485 = vmatprep.subr.mxu0 0.0
        %1486 = vmatpush1.xpose.msra.mxu0 0.0
        %1487 = vmatprep.subr.mxu0 0.0
        %1488 = vmatpush1.xpose.msra.mxu0 0.0
        %1489 = vmatprep.subr.mxu0 0.0
        %1490 = vmatpush1.xpose.msra.mxu0 0.0
        %1491 = vmatprep.subr.mxu0 0.0
        %1492 = vmatpush1.xpose.msra.mxu0 0.0
        %1493 = vmatprep.subr.mxu0 0.0
        %1494 = vmatpush1.xpose.msra.mxu0 0.0
        %1495 = vmatprep.subr.mxu0 0.0
        %1496 = vmatpush1.xpose.msra.mxu0 0.0
        %1497 = vmatprep.subr.mxu0 0.0
        %1498 = vmatpush1.xpose.msra.mxu0 0.0
        %1499 = vmatprep.subr.mxu0 0.0
        %1500 = vmatpush1.xpose.msra.mxu0 0.0
        %1501 = vmatprep.subr.mxu0 0.0
        %1502 = vmatpush1.xpose.msra.mxu0 0.0
        %1503 = vmatprep.subr.mxu0 0.0
        %1504 = vmatpush1.xpose.msra.mxu0 0.0
        %1505 = vmatprep.subr.mxu0 0.0
        %1506 = vmatpush1.xpose.msra.mxu0 0.0
        %1507 = vmatprep.subr.mxu0 0.0
        %1508 = vmatpush1.xpose.msra.mxu0 0.0
        %1509 = vmatprep.subr.mxu0 0.0
        %1510 = vmatpush1.xpose.msra.mxu0 %v1369
        %1511 = vmatprep.subr.mxu0 0.0
        %1512 = vmatpush2.xpose.msra.mxu0 0.0
        %1513 = vmatprep.subr.mxu0 0.0
        %1514 = vmatpush2.xpose.msra.mxu0 0.0
        %1515 = vmatprep.subr.mxu0 0.0
        %1516 = vmatpush2.xpose.msra.mxu0 0.0
        %1517 = vmatprep.subr.mxu0 0.0
        %1518 = vmatpush2.xpose.msra.mxu0 0.0
        %1519 = vmatprep.subr.mxu0 0.0
        %1520 = vmatpush2.xpose.msra.mxu0 0.0
        %1521 = vmatprep.subr.mxu0 0.0
        %1522 = vmatpush2.xpose.msra.mxu0 0.0
        %1523 = vmatprep.subr.mxu0 0.0
        %1524 = vmatpush2.xpose.msra.mxu0 0.0
        %1525 = vmatprep.subr.mxu0 0.0
        %1526 = vmatpush2.xpose.msra.mxu0 0.0
        %1527 = vmatprep.subr.mxu0 0.0
        %1528 = vmatpush2.xpose.msra.mxu0 0.0
        %1529 = vmatprep.subr.mxu0 0.0
        %1530 = vmatpush2.xpose.msra.mxu0 0.0
        %1531 = vmatprep.subr.mxu0 0.0
        %1532 = vmatpush2.xpose.msra.mxu0 0.0
        %1533 = vmatprep.subr.mxu0 0.0
        %1534 = vmatpush2.xpose.msra.mxu0 0.0
        %1535 = vmatprep.subr.mxu0 0.0
        %1536 = vmatpush2.xpose.msra.mxu0 0.0
        %1537 = vmatprep.subr.mxu0 0.0
        %1538 = vmatpush2.xpose.msra.mxu0 0.0
        %1539 = vmatprep.subr.mxu0 0.0
        %1540 = vmatpush2.xpose.msra.mxu0 0.0
        %1541 = vmatprep.subr.mxu0 0.0
        %1542 = vmatpush2.xpose.msra.mxu0 0.0
        %1543 = vmatprep.mubr.f32.mxu0 0.0
        %1544 = vmatmul.mubr.f32.gmra.mxu0 %v1463
        %v1545 = vpop.f32.mrf.mxu0
        %v1546 = vadd.f32 0.0, %v1545
        %v1547 = vpop.f32.mrf.mxu0
        %1548 = vdwg.mxu0
        %1549 = vmatprep.subr.mxu0 0.0
        %1550 = vmatpush1.xpose.msra.mxu0 0.0
        %1551 = vmatprep.subr.mxu0 0.0
        %1552 = vmatpush1.xpose.msra.mxu0 0.0
        %1553 = vmatprep.subr.mxu0 0.0
        %1554 = vmatpush1.xpose.msra.mxu0 0.0
        %1555 = vmatprep.subr.mxu0 0.0
        %1556 = vmatpush1.xpose.msra.mxu0 0.0
        %1557 = vmatprep.subr.mxu0 0.0
        %1558 = vmatpush1.xpose.msra.mxu0 0.0
        %1559 = vmatprep.subr.mxu0 0.0
        %1560 = vmatpush1.xpose.msra.mxu0 0.0
        %1561 = vmatprep.subr.mxu0 0.0
        %1562 = vmatpush1.xpose.msra.mxu0 0.0
        %1563 = vmatprep.subr.mxu0 0.0
        %1564 = vmatpush1.xpose.msra.mxu0 0.0
        %1565 = vmatprep.subr.mxu0 0.0
        %1566 = vmatpush1.xpose.msra.mxu0 0.0
        %1567 = vmatprep.subr.mxu0 0.0
        %1568 = vmatpush1.xpose.msra.mxu0 0.0
        %1569 = vmatprep.subr.mxu0 0.0
        %1570 = vmatpush1.xpose.msra.mxu0 0.0
        %1571 = vmatprep.subr.mxu0 0.0
        %1572 = vmatpush1.xpose.msra.mxu0 0.0
        %1573 = vmatprep.subr.mxu0 0.0
        %1574 = vmatpush1.xpose.msra.mxu0 0.0
        %1575 = vmatprep.subr.mxu0 0.0
        %1576 = vmatpush1.xpose.msra.mxu0 0.0
        %1577 = vmatprep.subr.mxu0 0.0
        %1578 = vmatpush1.xpose.msra.mxu0 0.0
        %1579 = vmatprep.subr.mxu0 0.0
        %1580 = vmatpush1.xpose.msra.mxu0 %v1369
        %1581 = vmatprep.subr.mxu0 0.0
        %1582 = vmatpush2.xpose.msra.mxu0 0.0
        %1583 = vmatprep.subr.mxu0 0.0
        %1584 = vmatpush2.xpose.msra.mxu0 0.0
        %1585 = vmatprep.subr.mxu0 0.0
        %1586 = vmatpush2.xpose.msra.mxu0 0.0
        %1587 = vmatprep.subr.mxu0 0.0
        %1588 = vmatpush2.xpose.msra.mxu0 0.0
        %1589 = vmatprep.subr.mxu0 0.0
        %1590 = vmatpush2.xpose.msra.mxu0 0.0
        %1591 = vmatprep.subr.mxu0 0.0
        %1592 = vmatpush2.xpose.msra.mxu0 0.0
        %1593 = vmatprep.subr.mxu0 0.0
        %1594 = vmatpush2.xpose.msra.mxu0 0.0
        %1595 = vmatprep.subr.mxu0 0.0
        %1596 = vmatpush2.xpose.msra.mxu0 0.0
        %1597 = vmatprep.subr.mxu0 0.0
        %1598 = vmatpush2.xpose.msra.mxu0 0.0
        %1599 = vmatprep.subr.mxu0 0.0
        %1600 = vmatpush2.xpose.msra.mxu0 0.0
        %1601 = vmatprep.subr.mxu0 0.0
        %1602 = vmatpush2.xpose.msra.mxu0 0.0
        %1603 = vmatprep.subr.mxu0 0.0
        %1604 = vmatpush2.xpose.msra.mxu0 0.0
        %1605 = vmatprep.subr.mxu0 0.0
        %1606 = vmatpush2.xpose.msra.mxu0 0.0
        %1607 = vmatprep.subr.mxu0 0.0
        %1608 = vmatpush2.xpose.msra.mxu0 0.0
        %1609 = vmatprep.subr.mxu0 0.0
        %1610 = vmatpush2.xpose.msra.mxu0 0.0
        %1611 = vmatprep.subr.mxu0 0.0
        %1612 = vmatpush2.xpose.msra.mxu0 0.0
        %1613 = vmatprep.mubr.f32.mxu0 0.0
        %1614 = vmatmul.mubr.f32.gmra.mxu0 %v1464
        %v1615 = vpop.f32.mrf.mxu0
        %v1616 = vadd.f32 0.0, %v1615
        %v1617 = vpop.f32.mrf.mxu0
        %1618 = vdwg.mxu0
        %1619 = vmatprep.subr.mxu0 0.0
        %1620 = vmatpush1.xpose.msra.mxu0 0.0
        %1621 = vmatprep.subr.mxu0 0.0
        %1622 = vmatpush1.xpose.msra.mxu0 0.0
        %1623 = vmatprep.subr.mxu0 0.0
        %1624 = vmatpush1.xpose.msra.mxu0 0.0
        %1625 = vmatprep.subr.mxu0 0.0
        %1626 = vmatpush1.xpose.msra.mxu0 0.0
        %1627 = vmatprep.subr.mxu0 0.0
        %1628 = vmatpush1.xpose.msra.mxu0 0.0
        %1629 = vmatprep.subr.mxu0 0.0
        %1630 = vmatpush1.xpose.msra.mxu0 0.0
        %1631 = vmatprep.subr.mxu0 0.0
        %1632 = vmatpush1.xpose.msra.mxu0 0.0
        %1633 = vmatprep.subr.mxu0 0.0
        %1634 = vmatpush1.xpose.msra.mxu0 0.0
        %1635 = vmatprep.subr.mxu0 0.0
        %1636 = vmatpush1.xpose.msra.mxu0 0.0
        %1637 = vmatprep.subr.mxu0 0.0
        %1638 = vmatpush1.xpose.msra.mxu0 0.0
        %1639 = vmatprep.subr.mxu0 0.0
        %1640 = vmatpush1.xpose.msra.mxu0 0.0
        %1641 = vmatprep.subr.mxu0 0.0
        %1642 = vmatpush1.xpose.msra.mxu0 0.0
        %1643 = vmatprep.subr.mxu0 0.0
        %1644 = vmatpush1.xpose.msra.mxu0 0.0
        %1645 = vmatprep.subr.mxu0 0.0
        %1646 = vmatpush1.xpose.msra.mxu0 0.0
        %1647 = vmatprep.subr.mxu0 0.0
        %1648 = vmatpush1.xpose.msra.mxu0 0.0
        %1649 = vmatprep.subr.mxu0 0.0
        %1650 = vmatpush1.xpose.msra.mxu0 %v1369
        %1651 = vmatprep.subr.mxu0 0.0
        %1652 = vmatpush2.xpose.msra.mxu0 0.0
        %1653 = vmatprep.subr.mxu0 0.0
        %1654 = vmatpush2.xpose.msra.mxu0 0.0
        %1655 = vmatprep.subr.mxu0 0.0
        %1656 = vmatpush2.xpose.msra.mxu0 0.0
        %1657 = vmatprep.subr.mxu0 0.0
        %1658 = vmatpush2.xpose.msra.mxu0 0.0
        %1659 = vmatprep.subr.mxu0 0.0
        %1660 = vmatpush2.xpose.msra.mxu0 0.0
        %1661 = vmatprep.subr.mxu0 0.0
        %1662 = vmatpush2.xpose.msra.mxu0 0.0
        %1663 = vmatprep.subr.mxu0 0.0
        %1664 = vmatpush2.xpose.msra.mxu0 0.0
        %1665 = vmatprep.subr.mxu0 0.0
        %1666 = vmatpush2.xpose.msra.mxu0 0.0
        %1667 = vmatprep.subr.mxu0 0.0
        %1668 = vmatpush2.xpose.msra.mxu0 0.0
        %1669 = vmatprep.subr.mxu0 0.0
        %1670 = vmatpush2.xpose.msra.mxu0 0.0
        %1671 = vmatprep.subr.mxu0 0.0
        %1672 = vmatpush2.xpose.msra.mxu0 0.0
        %1673 = vmatprep.subr.mxu0 0.0
        %1674 = vmatpush2.xpose.msra.mxu0 0.0
        %1675 = vmatprep.subr.mxu0 0.0
        %1676 = vmatpush2.xpose.msra.mxu0 0.0
        %1677 = vmatprep.subr.mxu0 0.0
        %1678 = vmatpush2.xpose.msra.mxu0 0.0
        %1679 = vmatprep.subr.mxu0 0.0
        %1680 = vmatpush2.xpose.msra.mxu0 0.0
        %1681 = vmatprep.subr.mxu0 0.0
        %1682 = vmatpush2.xpose.msra.mxu0 0.0
        %1683 = vmatprep.mubr.f32.mxu0 0.0
        %1684 = vmatmul.mubr.f32.gmra.mxu0 %v1465
        %v1685 = vpop.f32.mrf.mxu0
        %v1686 = vadd.f32 0.0, %v1685
        %v1687 = vpop.f32.mrf.mxu0
        %1688 = vdwg.mxu0
        %1689 = vmatprep.subr.mxu0 0.0
        %1690 = vmatpush1.xpose.msra.mxu0 0.0
        %1691 = vmatprep.subr.mxu0 0.0
        %1692 = vmatpush1.xpose.msra.mxu0 0.0
        %1693 = vmatprep.subr.mxu0 0.0
        %1694 = vmatpush1.xpose.msra.mxu0 0.0
        %1695 = vmatprep.subr.mxu0 0.0
        %1696 = vmatpush1.xpose.msra.mxu0 0.0
        %1697 = vmatprep.subr.mxu0 0.0
        %1698 = vmatpush1.xpose.msra.mxu0 0.0
        %1699 = vmatprep.subr.mxu0 0.0
        %1700 = vmatpush1.xpose.msra.mxu0 0.0
        %1701 = vmatprep.subr.mxu0 0.0
        %1702 = vmatpush1.xpose.msra.mxu0 0.0
        %1703 = vmatprep.subr.mxu0 0.0
        %1704 = vmatpush1.xpose.msra.mxu0 0.0
        %1705 = vmatprep.subr.mxu0 0.0
        %1706 = vmatpush1.xpose.msra.mxu0 0.0
        %1707 = vmatprep.subr.mxu0 0.0
        %1708 = vmatpush1.xpose.msra.mxu0 0.0
        %1709 = vmatprep.subr.mxu0 0.0
        %1710 = vmatpush1.xpose.msra.mxu0 0.0
        %1711 = vmatprep.subr.mxu0 0.0
        %1712 = vmatpush1.xpose.msra.mxu0 0.0
        %1713 = vmatprep.subr.mxu0 0.0
        %1714 = vmatpush1.xpose.msra.mxu0 0.0
        %1715 = vmatprep.subr.mxu0 0.0
        %1716 = vmatpush1.xpose.msra.mxu0 0.0
        %1717 = vmatprep.subr.mxu0 0.0
        %1718 = vmatpush1.xpose.msra.mxu0 0.0
        %1719 = vmatprep.subr.mxu0 0.0
        %1720 = vmatpush1.xpose.msra.mxu0 %v1369
        %1721 = vmatprep.subr.mxu0 0.0
        %1722 = vmatpush2.xpose.msra.mxu0 0.0
        %1723 = vmatprep.subr.mxu0 0.0
        %1724 = vmatpush2.xpose.msra.mxu0 0.0
        %1725 = vmatprep.subr.mxu0 0.0
        %1726 = vmatpush2.xpose.msra.mxu0 0.0
        %1727 = vmatprep.subr.mxu0 0.0
        %1728 = vmatpush2.xpose.msra.mxu0 0.0
        %1729 = vmatprep.subr.mxu0 0.0
        %1730 = vmatpush2.xpose.msra.mxu0 0.0
        %1731 = vmatprep.subr.mxu0 0.0
        %1732 = vmatpush2.xpose.msra.mxu0 0.0
        %1733 = vmatprep.subr.mxu0 0.0
        %1734 = vmatpush2.xpose.msra.mxu0 0.0
        %1735 = vmatprep.subr.mxu0 0.0
        %1736 = vmatpush2.xpose.msra.mxu0 0.0
        %1737 = vmatprep.subr.mxu0 0.0
        %1738 = vmatpush2.xpose.msra.mxu0 0.0
        %1739 = vmatprep.subr.mxu0 0.0
        %1740 = vmatpush2.xpose.msra.mxu0 0.0
        %1741 = vmatprep.subr.mxu0 0.0
        %1742 = vmatpush2.xpose.msra.mxu0 0.0
        %1743 = vmatprep.subr.mxu0 0.0
        %1744 = vmatpush2.xpose.msra.mxu0 0.0
        %1745 = vmatprep.subr.mxu0 0.0
        %1746 = vmatpush2.xpose.msra.mxu0 0.0
        %1747 = vmatprep.subr.mxu0 0.0
        %1748 = vmatpush2.xpose.msra.mxu0 0.0
        %1749 = vmatprep.subr.mxu0 0.0
        %1750 = vmatpush2.xpose.msra.mxu0 0.0
        %1751 = vmatprep.subr.mxu0 0.0
        %1752 = vmatpush2.xpose.msra.mxu0 0.0
        %1753 = vmatprep.mubr.f32.mxu0 0.0
        %1754 = vmatmul.mubr.f32.gmra.mxu0 %v1466
        %v1755 = vpop.f32.mrf.mxu0
        %v1756 = vadd.f32 0.0, %v1755
        %v1757 = vpop.f32.mrf.mxu0
        %1758 = vdwg.mxu0
        %1759 = vmatprep.subr.mxu0 0.0
        %1760 = vmatpush1.xpose.msra.mxu0 0.0
        %1761 = vmatprep.subr.mxu0 0.0
        %1762 = vmatpush1.xpose.msra.mxu0 0.0
        %1763 = vmatprep.subr.mxu0 0.0
        %1764 = vmatpush1.xpose.msra.mxu0 0.0
        %1765 = vmatprep.subr.mxu0 0.0
        %1766 = vmatpush1.xpose.msra.mxu0 0.0
        %1767 = vmatprep.subr.mxu0 0.0
        %1768 = vmatpush1.xpose.msra.mxu0 0.0
        %1769 = vmatprep.subr.mxu0 0.0
        %1770 = vmatpush1.xpose.msra.mxu0 0.0
        %1771 = vmatprep.subr.mxu0 0.0
        %1772 = vmatpush1.xpose.msra.mxu0 0.0
        %1773 = vmatprep.subr.mxu0 0.0
        %1774 = vmatpush1.xpose.msra.mxu0 0.0
        %1775 = vmatprep.subr.mxu0 0.0
        %1776 = vmatpush1.xpose.msra.mxu0 0.0
        %1777 = vmatprep.subr.mxu0 0.0
        %1778 = vmatpush1.xpose.msra.mxu0 0.0
        %1779 = vmatprep.subr.mxu0 0.0
        %1780 = vmatpush1.xpose.msra.mxu0 0.0
        %1781 = vmatprep.subr.mxu0 0.0
        %1782 = vmatpush1.xpose.msra.mxu0 0.0
        %1783 = vmatprep.subr.mxu0 0.0
        %1784 = vmatpush1.xpose.msra.mxu0 0.0
        %1785 = vmatprep.subr.mxu0 0.0
        %1786 = vmatpush1.xpose.msra.mxu0 0.0
        %1787 = vmatprep.subr.mxu0 0.0
        %1788 = vmatpush1.xpose.msra.mxu0 0.0
        %1789 = vmatprep.subr.mxu0 0.0
        %1790 = vmatpush1.xpose.msra.mxu0 %v1369
        %1791 = vmatprep.subr.mxu0 0.0
        %1792 = vmatpush2.xpose.msra.mxu0 0.0
        %1793 = vmatprep.subr.mxu0 0.0
        %1794 = vmatpush2.xpose.msra.mxu0 0.0
        %1795 = vmatprep.subr.mxu0 0.0
        %1796 = vmatpush2.xpose.msra.mxu0 0.0
        %1797 = vmatprep.subr.mxu0 0.0
        %1798 = vmatpush2.xpose.msra.mxu0 0.0
        %1799 = vmatprep.subr.mxu0 0.0
        %1800 = vmatpush2.xpose.msra.mxu0 0.0
        %1801 = vmatprep.subr.mxu0 0.0
        %1802 = vmatpush2.xpose.msra.mxu0 0.0
        %1803 = vmatprep.subr.mxu0 0.0
        %1804 = vmatpush2.xpose.msra.mxu0 0.0
        %1805 = vmatprep.subr.mxu0 0.0
        %1806 = vmatpush2.xpose.msra.mxu0 0.0
        %1807 = vmatprep.subr.mxu0 0.0
        %1808 = vmatpush2.xpose.msra.mxu0 0.0
        %1809 = vmatprep.subr.mxu0 0.0
        %1810 = vmatpush2.xpose.msra.mxu0 0.0
        %1811 = vmatprep.subr.mxu0 0.0
        %1812 = vmatpush2.xpose.msra.mxu0 0.0
        %1813 = vmatprep.subr.mxu0 0.0
        %1814 = vmatpush2.xpose.msra.mxu0 0.0
        %1815 = vmatprep.subr.mxu0 0.0
        %1816 = vmatpush2.xpose.msra.mxu0 0.0
        %1817 = vmatprep.subr.mxu0 0.0
        %1818 = vmatpush2.xpose.msra.mxu0 0.0
        %1819 = vmatprep.subr.mxu0 0.0
        %1820 = vmatpush2.xpose.msra.mxu0 0.0
        %1821 = vmatprep.subr.mxu0 0.0
        %1822 = vmatpush2.xpose.msra.mxu0 0.0
        %1823 = vmatprep.mubr.f32.mxu0 0.0
        %1824 = vmatmul.mubr.f32.gmra.mxu0 %v1467
        %v1825 = vpop.f32.mrf.mxu0
        %v1826 = vadd.f32 0.0, %v1825
        %v1827 = vpop.f32.mrf.mxu0
        %1828 = vdwg.mxu0
        %1829 = vmatprep.subr.mxu0 0.0
        %1830 = vmatpush1.xpose.msra.mxu0 0.0
        %1831 = vmatprep.subr.mxu0 0.0
        %1832 = vmatpush1.xpose.msra.mxu0 0.0
        %1833 = vmatprep.subr.mxu0 0.0
        %1834 = vmatpush1.xpose.msra.mxu0 0.0
        %1835 = vmatprep.subr.mxu0 0.0
        %1836 = vmatpush1.xpose.msra.mxu0 0.0
        %1837 = vmatprep.subr.mxu0 0.0
        %1838 = vmatpush1.xpose.msra.mxu0 0.0
        %1839 = vmatprep.subr.mxu0 0.0
        %1840 = vmatpush1.xpose.msra.mxu0 0.0
        %1841 = vmatprep.subr.mxu0 0.0
        %1842 = vmatpush1.xpose.msra.mxu0 0.0
        %1843 = vmatprep.subr.mxu0 0.0
        %1844 = vmatpush1.xpose.msra.mxu0 0.0
        %1845 = vmatprep.subr.mxu0 0.0
        %1846 = vmatpush1.xpose.msra.mxu0 0.0
        %1847 = vmatprep.subr.mxu0 0.0
        %1848 = vmatpush1.xpose.msra.mxu0 0.0
        %1849 = vmatprep.subr.mxu0 0.0
        %1850 = vmatpush1.xpose.msra.mxu0 0.0
        %1851 = vmatprep.subr.mxu0 0.0
        %1852 = vmatpush1.xpose.msra.mxu0 0.0
        %1853 = vmatprep.subr.mxu0 0.0
        %1854 = vmatpush1.xpose.msra.mxu0 0.0
        %1855 = vmatprep.subr.mxu0 0.0
        %1856 = vmatpush1.xpose.msra.mxu0 0.0
        %1857 = vmatprep.subr.mxu0 0.0
        %1858 = vmatpush1.xpose.msra.mxu0 0.0
        %1859 = vmatprep.subr.mxu0 0.0
        %1860 = vmatpush1.xpose.msra.mxu0 %v1369
        %1861 = vmatprep.subr.mxu0 0.0
        %1862 = vmatpush2.xpose.msra.mxu0 0.0
        %1863 = vmatprep.subr.mxu0 0.0
        %1864 = vmatpush2.xpose.msra.mxu0 0.0
        %1865 = vmatprep.subr.mxu0 0.0
        %1866 = vmatpush2.xpose.msra.mxu0 0.0
        %1867 = vmatprep.subr.mxu0 0.0
        %1868 = vmatpush2.xpose.msra.mxu0 0.0
        %1869 = vmatprep.subr.mxu0 0.0
        %1870 = vmatpush2.xpose.msra.mxu0 0.0
        %1871 = vmatprep.subr.mxu0 0.0
        %1872 = vmatpush2.xpose.msra.mxu0 0.0
        %1873 = vmatprep.subr.mxu0 0.0
        %1874 = vmatpush2.xpose.msra.mxu0 0.0
        %1875 = vmatprep.subr.mxu0 0.0
        %1876 = vmatpush2.xpose.msra.mxu0 0.0
        %1877 = vmatprep.subr.mxu0 0.0
        %1878 = vmatpush2.xpose.msra.mxu0 0.0
        %1879 = vmatprep.subr.mxu0 0.0
        %1880 = vmatpush2.xpose.msra.mxu0 0.0
        %1881 = vmatprep.subr.mxu0 0.0
        %1882 = vmatpush2.xpose.msra.mxu0 0.0
        %1883 = vmatprep.subr.mxu0 0.0
        %1884 = vmatpush2.xpose.msra.mxu0 0.0
        %1885 = vmatprep.subr.mxu0 0.0
        %1886 = vmatpush2.xpose.msra.mxu0 0.0
        %1887 = vmatprep.subr.mxu0 0.0
        %1888 = vmatpush2.xpose.msra.mxu0 0.0
        %1889 = vmatprep.subr.mxu0 0.0
        %1890 = vmatpush2.xpose.msra.mxu0 0.0
        %1891 = vmatprep.subr.mxu0 0.0
        %1892 = vmatpush2.xpose.msra.mxu0 0.0
        %1893 = vmatprep.mubr.f32.mxu0 0.0
        %1894 = vmatmul.mubr.f32.gmra.mxu0 %v1468
        %v1895 = vpop.f32.mrf.mxu0
        %v1896 = vadd.f32 0.0, %v1895
        %v1897 = vpop.f32.mrf.mxu0
        %1898 = vdwg.mxu0
        %1899 = vmatprep.subr.mxu0 0.0
        %1900 = vmatpush1.xpose.msra.mxu0 0.0
        %1901 = vmatprep.subr.mxu0 0.0
        %1902 = vmatpush1.xpose.msra.mxu0 0.0
        %1903 = vmatprep.subr.mxu0 0.0
        %1904 = vmatpush1.xpose.msra.mxu0 0.0
        %1905 = vmatprep.subr.mxu0 0.0
        %1906 = vmatpush1.xpose.msra.mxu0 0.0
        %1907 = vmatprep.subr.mxu0 0.0
        %1908 = vmatpush1.xpose.msra.mxu0 0.0
        %1909 = vmatprep.subr.mxu0 0.0
        %1910 = vmatpush1.xpose.msra.mxu0 0.0
        %1911 = vmatprep.subr.mxu0 0.0
        %1912 = vmatpush1.xpose.msra.mxu0 0.0
        %1913 = vmatprep.subr.mxu0 0.0
        %1914 = vmatpush1.xpose.msra.mxu0 0.0
        %1915 = vmatprep.subr.mxu0 0.0
        %1916 = vmatpush1.xpose.msra.mxu0 0.0
        %1917 = vmatprep.subr.mxu0 0.0
        %1918 = vmatpush1.xpose.msra.mxu0 0.0
        %1919 = vmatprep.subr.mxu0 0.0
        %1920 = vmatpush1.xpose.msra.mxu0 0.0
        %1921 = vmatprep.subr.mxu0 0.0
        %1922 = vmatpush1.xpose.msra.mxu0 0.0
        %1923 = vmatprep.subr.mxu0 0.0
        %1924 = vmatpush1.xpose.msra.mxu0 0.0
        %1925 = vmatprep.subr.mxu0 0.0
        %1926 = vmatpush1.xpose.msra.mxu0 0.0
        %1927 = vmatprep.subr.mxu0 0.0
        %1928 = vmatpush1.xpose.msra.mxu0 0.0
        %1929 = vmatprep.subr.mxu0 0.0
        %1930 = vmatpush1.xpose.msra.mxu0 %v1369
        %1931 = vmatprep.subr.mxu0 0.0
        %1932 = vmatpush2.xpose.msra.mxu0 0.0
        %1933 = vmatprep.subr.mxu0 0.0
        %1934 = vmatpush2.xpose.msra.mxu0 0.0
        %1935 = vmatprep.subr.mxu0 0.0
        %1936 = vmatpush2.xpose.msra.mxu0 0.0
        %1937 = vmatprep.subr.mxu0 0.0
        %1938 = vmatpush2.xpose.msra.mxu0 0.0
        %1939 = vmatprep.subr.mxu0 0.0
        %1940 = vmatpush2.xpose.msra.mxu0 0.0
        %1941 = vmatprep.subr.mxu0 0.0
        %1942 = vmatpush2.xpose.msra.mxu0 0.0
        %1943 = vmatprep.subr.mxu0 0.0
        %1944 = vmatpush2.xpose.msra.mxu0 0.0
        %1945 = vmatprep.subr.mxu0 0.0
        %1946 = vmatpush2.xpose.msra.mxu0 0.0
        %1947 = vmatprep.subr.mxu0 0.0
        %1948 = vmatpush2.xpose.msra.mxu0 0.0
        %1949 = vmatprep.subr.mxu0 0.0
        %1950 = vmatpush2.xpose.msra.mxu0 0.0
        %1951 = vmatprep.subr.mxu0 0.0
        %1952 = vmatpush2.xpose.msra.mxu0 0.0
        %1953 = vmatprep.subr.mxu0 0.0
        %1954 = vmatpush2.xpose.msra.mxu0 0.0
        %1955 = vmatprep.subr.mxu0 0.0
        %1956 = vmatpush2.xpose.msra.mxu0 0.0
        %1957 = vmatprep.subr.mxu0 0.0
        %1958 = vmatpush2.xpose.msra.mxu0 0.0
        %1959 = vmatprep.subr.mxu0 0.0
        %1960 = vmatpush2.xpose.msra.mxu0 0.0
        %1961 = vmatprep.subr.mxu0 0.0
        %1962 = vmatpush2.xpose.msra.mxu0 0.0
        %1963 = vmatprep.mubr.f32.mxu0 0.0
        %1964 = vmatmul.mubr.f32.gmra.mxu0 %v1469
        %v1965 = vpop.f32.mrf.mxu0
        %v1966 = vadd.f32 0.0, %v1965
        %v1967 = vpop.f32.mrf.mxu0
        %1968 = vdwg.mxu0
        %1969 = vmatprep.subr.mxu0 0.0
        %1970 = vmatpush1.xpose.msra.mxu0 0.0
        %1971 = vmatprep.subr.mxu0 0.0
        %1972 = vmatpush1.xpose.msra.mxu0 0.0
        %1973 = vmatprep.subr.mxu0 0.0
        %1974 = vmatpush1.xpose.msra.mxu0 0.0
        %1975 = vmatprep.subr.mxu0 0.0
        %1976 = vmatpush1.xpose.msra.mxu0 0.0
        %1977 = vmatprep.subr.mxu0 0.0
        %1978 = vmatpush1.xpose.msra.mxu0 0.0
        %1979 = vmatprep.subr.mxu0 0.0
        %1980 = vmatpush1.xpose.msra.mxu0 0.0
        %1981 = vmatprep.subr.mxu0 0.0
        %1982 = vmatpush1.xpose.msra.mxu0 0.0
        %1983 = vmatprep.subr.mxu0 0.0
        %1984 = vmatpush1.xpose.msra.mxu0 0.0
        %1985 = vmatprep.subr.mxu0 0.0
        %1986 = vmatpush1.xpose.msra.mxu0 0.0
        %1987 = vmatprep.subr.mxu0 0.0
        %1988 = vmatpush1.xpose.msra.mxu0 0.0
        %1989 = vmatprep.subr.mxu0 0.0
        %1990 = vmatpush1.xpose.msra.mxu0 0.0
        %1991 = vmatprep.subr.mxu0 0.0
        %1992 = vmatpush1.xpose.msra.mxu0 0.0
        %1993 = vmatprep.subr.mxu0 0.0
        %1994 = vmatpush1.xpose.msra.mxu0 0.0
        %1995 = vmatprep.subr.mxu0 0.0
        %1996 = vmatpush1.xpose.msra.mxu0 0.0
        %1997 = vmatprep.subr.mxu0 0.0
        %1998 = vmatpush1.xpose.msra.mxu0 0.0
        %1999 = vmatprep.subr.mxu0 0.0
        %2000 = vmatpush1.xpose.msra.mxu0 %v1369
        %2001 = vmatprep.subr.mxu0 0.0
        %2002 = vmatpush2.xpose.msra.mxu0 0.0
        %2003 = vmatprep.subr.mxu0 0.0
        %2004 = vmatpush2.xpose.msra.mxu0 0.0
        %2005 = vmatprep.subr.mxu0 0.0
        %2006 = vmatpush2.xpose.msra.mxu0 0.0
        %2007 = vmatprep.subr.mxu0 0.0
        %2008 = vmatpush2.xpose.msra.mxu0 0.0
        %2009 = vmatprep.subr.mxu0 0.0
        %2010 = vmatpush2.xpose.msra.mxu0 0.0
        %2011 = vmatprep.subr.mxu0 0.0
        %2012 = vmatpush2.xpose.msra.mxu0 0.0
        %2013 = vmatprep.subr.mxu0 0.0
        %2014 = vmatpush2.xpose.msra.mxu0 0.0
        %2015 = vmatprep.subr.mxu0 0.0
        %2016 = vmatpush2.xpose.msra.mxu0 0.0
        %2017 = vmatprep.subr.mxu0 0.0
        %2018 = vmatpush2.xpose.msra.mxu0 0.0
        %2019 = vmatprep.subr.mxu0 0.0
        %2020 = vmatpush2.xpose.msra.mxu0 0.0
        %2021 = vmatprep.subr.mxu0 0.0
        %2022 = vmatpush2.xpose.msra.mxu0 0.0
        %2023 = vmatprep.subr.mxu0 0.0
        %2024 = vmatpush2.xpose.msra.mxu0 0.0
        %2025 = vmatprep.subr.mxu0 0.0
        %2026 = vmatpush2.xpose.msra.mxu0 0.0
        %2027 = vmatprep.subr.mxu0 0.0
        %2028 = vmatpush2.xpose.msra.mxu0 0.0
        %2029 = vmatprep.subr.mxu0 0.0
        %2030 = vmatpush2.xpose.msra.mxu0 0.0
        %2031 = vmatprep.subr.mxu0 0.0
        %2032 = vmatpush2.xpose.msra.mxu0 0.0
        %2033 = vmatprep.mubr.f32.mxu0 0.0
        %2034 = vmatmul.mubr.f32.gmra.mxu0 %v1470
        %v2035 = vpop.f32.mrf.mxu0
        %v2036 = vadd.f32 0.0, %v2035
        %v2037 = vpop.f32.mrf.mxu0
        %2038 = vdwg.mxu0
        %vm2039 = vcmask 64512
        %v2040 = vsel %vm2039, %v1546, -inf
        %2041 = vmax.xlane.f32.xlu0 %v2040
        %v2042 = vpop.xlane.xlu0 %2041
        %v2043 = vsel %vm2039, %v1616, -inf
        %2044 = vmax.xlane.f32.xlu0 %v2043
        %v2045 = vpop.xlane.xlu0 %2044
        %v2046 = vsel %vm2039, %v1686, -inf
        %2047 = vmax.xlane.f32.xlu0 %v2046
        %v2048 = vpop.xlane.xlu0 %2047
        %v2049 = vsel %vm2039, %v1756, -inf
        %2050 = vmax.xlane.f32.xlu0 %v2049
        %v2051 = vpop.xlane.xlu0 %2050
        %v2052 = vsel %vm2039, %v1826, -inf
        %2053 = vmax.xlane.f32.xlu0 %v2052
        %v2054 = vpop.xlane.xlu0 %2053
        %v2055 = vsel %vm2039, %v1896, -inf
        %2056 = vmax.xlane.f32.xlu0 %v2055
        %v2057 = vpop.xlane.xlu0 %2056
        %v2058 = vsel %vm2039, %v1966, -inf
        %2059 = vmax.xlane.f32.xlu0 %v2058
        %v2060 = vpop.xlane.xlu0 %2059
        %v2061 = vsel %vm2039, %v2036, -inf
        %2062 = vmax.xlane.f32.xlu0 %v2061
        %v2063 = vpop.xlane.xlu0 %2062
        %v2064 = vsub.f32 %v1546, %v2042
        %v2065 = vsub.f32 %v1616, %v2045
        %v2066 = vsub.f32 %v1686, %v2048
        %v2067 = vsub.f32 %v1756, %v2051
        %v2068 = vsub.f32 %v1826, %v2054
        %v2069 = vsub.f32 %v1896, %v2057
        %v2070 = vsub.f32 %v1966, %v2060
        %v2071 = vsub.f32 %v2036, %v2063
        %v2072 = vmul.f32 %v2064, 1.442695
        %v2073 = vpow.pop %v2072
        %v2074 = vmul.f32 %v2065, 1.442695
        %v2075 = vpow.pop %v2074
        %v2076 = vmul.f32 %v2066, 1.442695
        %v2077 = vpow.pop %v2076
        %v2078 = vmul.f32 %v2067, 1.442695
        %v2079 = vpow.pop %v2078
        %v2080 = vmul.f32 %v2068, 1.442695
        %v2081 = vpow.pop %v2080
        %v2082 = vmul.f32 %v2069, 1.442695
        %v2083 = vpow.pop %v2082
        %v2084 = vmul.f32 %v2070, 1.442695
        %v2085 = vpow.pop %v2084
        %v2086 = vmul.f32 %v2071, 1.442695
        %v2087 = vpow.pop %v2086
        %v2088 = vsel %vm2039, %v2073, 0.0
        %2089 = vadd.xlane.f32.xlu0 %v2088
        %v2090 = vpop.xlane.xlu0 %2089
        %v2091 = vsel %vm2039, %v2075, 0.0
        %2092 = vadd.xlane.f32.xlu0 %v2091
        %v2093 = vpop.xlane.xlu0 %2092
        %v2094 = vsel %vm2039, %v2077, 0.0
        %2095 = vadd.xlane.f32.xlu0 %v2094
        %v2096 = vpop.xlane.xlu0 %2095
        %v2097 = vsel %vm2039, %v2079, 0.0
        %2098 = vadd.xlane.f32.xlu0 %v2097
        %v2099 = vpop.xlane.xlu0 %2098
        %v2100 = vsel %vm2039, %v2081, 0.0
        %2101 = vadd.xlane.f32.xlu0 %v2100
        %v2102 = vpop.xlane.xlu0 %2101
        %v2103 = vsel %vm2039, %v2083, 0.0
        %2104 = vadd.xlane.f32.xlu0 %v2103
        %v2105 = vpop.xlane.xlu0 %2104
        %v2106 = vsel %vm2039, %v2085, 0.0
        %2107 = vadd.xlane.f32.xlu0 %v2106
        %v2108 = vpop.xlane.xlu0 %2107
        %v2109 = vsel %vm2039, %v2087, 0.0
        %2110 = vadd.xlane.f32.xlu0 %v2109
        %v2111 = vpop.xlane.xlu0 %2110
        %v2112 = vrcp.pop %v2090
        %v2113 = vrcp.pop %v2093
        %v2114 = vrcp.pop %v2096
        %v2115 = vrcp.pop %v2099
        %v2116 = vrcp.pop %v2102
        %v2117 = vrcp.pop %v2105
        %v2118 = vrcp.pop %v2108
        %v2119 = vrcp.pop %v2111
        %v2120 = vmul.f32 %v2073, %v2112
        %v2121 = vmul.f32 %v2075, %v2113
        %v2122 = vmul.f32 %v2077, %v2114
        %v2123 = vmul.f32 %v2079, %v2115
        %v2124 = vmul.f32 %v2081, %v2116
        %v2125 = vmul.f32 %v2083, %v2117
        %v2126 = vmul.f32 %v2085, %v2118
        %v2127 = vmul.f32 %v2087, %v2119
        %v2129 = vsel %vm2039, %v2120, 0
        %2131 = vmatprep.subr.mxu0 0.0
        %2132 = vmatpush1.msra.mxu0 0.0
        %2133 = vmatprep.subr.mxu0 0.0
        %2134 = vmatpush1.msra.mxu0 0.0
        %2135 = vmatprep.subr.mxu0 0.0
        %2136 = vmatpush1.msra.mxu0 0.0
        %2137 = vmatprep.subr.mxu0 0.0
        %2138 = vmatpush1.msra.mxu0 0.0
        %2139 = vmatprep.subr.mxu0 0.0
        %2140 = vmatpush1.msra.mxu0 0.0
        %2141 = vmatprep.subr.mxu0 0.0
        %2142 = vmatpush1.msra.mxu0 0.0
        %2143 = vmatprep.subr.mxu0 0.0
        %2144 = vmatpush1.msra.mxu0 0.0
        %2145 = vmatprep.subr.mxu0 0.0
        %2146 = vmatpush1.msra.mxu0 0.0
        %2147 = vmatprep.subr.mxu0 0.0
        %2148 = vmatpush1.msra.mxu0 0.0
        %2149 = vmatprep.subr.mxu0 0.0
        %2150 = vmatpush1.msra.mxu0 0.0
        %2151 = vmatprep.subr.mxu0 0.0
        %2152 = vmatpush1.msra.mxu0 0.0
        %2153 = vmatprep.subr.mxu0 0.0
        %2154 = vmatpush1.msra.mxu0 0.0
        %2155 = vmatprep.subr.mxu0 0.0
        %2156 = vmatpush1.msra.mxu0 0.0
        %2157 = vmatprep.subr.mxu0 0.0
        %2158 = vmatpush1.msra.mxu0 0.0
        %2159 = vmatprep.subr.mxu0 0.0
        %2160 = vmatpush1.msra.mxu0 0.0
        %2161 = vmatprep.subr.mxu0 0.0
        %2162 = vmatpush1.msra.mxu0 %v1471
        %2163 = vmatprep.subr.mxu0 0.0
        %2164 = vmatpush2.msra.mxu0 0.0
        %2165 = vmatprep.subr.mxu0 0.0
        %2166 = vmatpush2.msra.mxu0 0.0
        %2167 = vmatprep.subr.mxu0 0.0
        %2168 = vmatpush2.msra.mxu0 0.0
        %2169 = vmatprep.subr.mxu0 0.0
        %2170 = vmatpush2.msra.mxu0 0.0
        %2171 = vmatprep.subr.mxu0 0.0
        %2172 = vmatpush2.msra.mxu0 0.0
        %2173 = vmatprep.subr.mxu0 0.0
        %2174 = vmatpush2.msra.mxu0 0.0
        %2175 = vmatprep.subr.mxu0 0.0
        %2176 = vmatpush2.msra.mxu0 0.0
        %2177 = vmatprep.subr.mxu0 0.0
        %2178 = vmatpush2.msra.mxu0 0.0
        %2179 = vmatprep.subr.mxu0 0.0
        %2180 = vmatpush2.msra.mxu0 0.0
        %2181 = vmatprep.subr.mxu0 0.0
        %2182 = vmatpush2.msra.mxu0 0.0
        %2183 = vmatprep.subr.mxu0 0.0
        %2184 = vmatpush2.msra.mxu0 0.0
        %2185 = vmatprep.subr.mxu0 0.0
        %2186 = vmatpush2.msra.mxu0 0.0
        %2187 = vmatprep.subr.mxu0 0.0
        %2188 = vmatpush2.msra.mxu0 0.0
        %2189 = vmatprep.subr.mxu0 0.0
        %2190 = vmatpush2.msra.mxu0 0.0
        %2191 = vmatprep.subr.mxu0 0.0
        %2192 = vmatpush2.msra.mxu0 0.0
        %2193 = vmatprep.subr.mxu0 0.0
        %2194 = vmatpush2.msra.mxu0 0.0
        %2195 = vmatprep.mubr.f32.mxu0 0.0
        %2196 = vmatmul.mubr.f32.gmra.mxu0 %v2129
        %v2197 = vpop.f32.mrf.mxu0
        %v2198 = vadd.f32 0.0, %v2197
        %v2199 = vpop.f32.mrf.mxu0
        %2200 = vdwg.mxu0
        %v2202 = vsel %vm2039, %v2121, 0
        %2204 = vmatprep.subr.mxu0 0.0
        %2205 = vmatpush1.msra.mxu0 0.0
        %2206 = vmatprep.subr.mxu0 0.0
        %2207 = vmatpush1.msra.mxu0 0.0
        %2208 = vmatprep.subr.mxu0 0.0
        %2209 = vmatpush1.msra.mxu0 0.0
        %2210 = vmatprep.subr.mxu0 0.0
        %2211 = vmatpush1.msra.mxu0 0.0
        %2212 = vmatprep.subr.mxu0 0.0
        %2213 = vmatpush1.msra.mxu0 0.0
        %2214 = vmatprep.subr.mxu0 0.0
        %2215 = vmatpush1.msra.mxu0 0.0
        %2216 = vmatprep.subr.mxu0 0.0
        %2217 = vmatpush1.msra.mxu0 0.0
        %2218 = vmatprep.subr.mxu0 0.0
        %2219 = vmatpush1.msra.mxu0 0.0
        %2220 = vmatprep.subr.mxu0 0.0
        %2221 = vmatpush1.msra.mxu0 0.0
        %2222 = vmatprep.subr.mxu0 0.0
        %2223 = vmatpush1.msra.mxu0 0.0
        %2224 = vmatprep.subr.mxu0 0.0
        %2225 = vmatpush1.msra.mxu0 0.0
        %2226 = vmatprep.subr.mxu0 0.0
        %2227 = vmatpush1.msra.mxu0 0.0
        %2228 = vmatprep.subr.mxu0 0.0
        %2229 = vmatpush1.msra.mxu0 0.0
        %2230 = vmatprep.subr.mxu0 0.0
        %2231 = vmatpush1.msra.mxu0 0.0
        %2232 = vmatprep.subr.mxu0 0.0
        %2233 = vmatpush1.msra.mxu0 0.0
        %2234 = vmatprep.subr.mxu0 0.0
        %2235 = vmatpush1.msra.mxu0 %v1472
        %2236 = vmatprep.subr.mxu0 0.0
        %2237 = vmatpush2.msra.mxu0 0.0
        %2238 = vmatprep.subr.mxu0 0.0
        %2239 = vmatpush2.msra.mxu0 0.0
        %2240 = vmatprep.subr.mxu0 0.0
        %2241 = vmatpush2.msra.mxu0 0.0
        %2242 = vmatprep.subr.mxu0 0.0
        %2243 = vmatpush2.msra.mxu0 0.0
        %2244 = vmatprep.subr.mxu0 0.0
        %2245 = vmatpush2.msra.mxu0 0.0
        %2246 = vmatprep.subr.mxu0 0.0
        %2247 = vmatpush2.msra.mxu0 0.0
        %2248 = vmatprep.subr.mxu0 0.0
        %2249 = vmatpush2.msra.mxu0 0.0
        %2250 = vmatprep.subr.mxu0 0.0
        %2251 = vmatpush2.msra.mxu0 0.0
        %2252 = vmatprep.subr.mxu0 0.0
        %2253 = vmatpush2.msra.mxu0 0.0
        %2254 = vmatprep.subr.mxu0 0.0
        %2255 = vmatpush2.msra.mxu0 0.0
        %2256 = vmatprep.subr.mxu0 0.0
        %2257 = vmatpush2.msra.mxu0 0.0
        %2258 = vmatprep.subr.mxu0 0.0
        %2259 = vmatpush2.msra.mxu0 0.0
        %2260 = vmatprep.subr.mxu0 0.0
        %2261 = vmatpush2.msra.mxu0 0.0
        %2262 = vmatprep.subr.mxu0 0.0
        %2263 = vmatpush2.msra.mxu0 0.0
        %2264 = vmatprep.subr.mxu0 0.0
        %2265 = vmatpush2.msra.mxu0 0.0
        %2266 = vmatprep.subr.mxu0 0.0
        %2267 = vmatpush2.msra.mxu0 0.0
        %2268 = vmatprep.mubr.f32.mxu0 0.0
        %2269 = vmatmul.mubr.f32.gmra.mxu0 %v2202
        %v2270 = vpop.f32.mrf.mxu0
        %v2271 = vadd.f32 0.0, %v2270
        %v2272 = vpop.f32.mrf.mxu0
        %2273 = vdwg.mxu0
        %v2275 = vsel %vm2039, %v2122, 0
        %2277 = vmatprep.subr.mxu0 0.0
        %2278 = vmatpush1.msra.mxu0 0.0
        %2279 = vmatprep.subr.mxu0 0.0
        %2280 = vmatpush1.msra.mxu0 0.0
        %2281 = vmatprep.subr.mxu0 0.0
        %2282 = vmatpush1.msra.mxu0 0.0
        %2283 = vmatprep.subr.mxu0 0.0
        %2284 = vmatpush1.msra.mxu0 0.0
        %2285 = vmatprep.subr.mxu0 0.0
        %2286 = vmatpush1.msra.mxu0 0.0
        %2287 = vmatprep.subr.mxu0 0.0
        %2288 = vmatpush1.msra.mxu0 0.0
        %2289 = vmatprep.subr.mxu0 0.0
        %2290 = vmatpush1.msra.mxu0 0.0
        %2291 = vmatprep.subr.mxu0 0.0
        %2292 = vmatpush1.msra.mxu0 0.0
        %2293 = vmatprep.subr.mxu0 0.0
        %2294 = vmatpush1.msra.mxu0 0.0
        %2295 = vmatprep.subr.mxu0 0.0
        %2296 = vmatpush1.msra.mxu0 0.0
        %2297 = vmatprep.subr.mxu0 0.0
        %2298 = vmatpush1.msra.mxu0 0.0
        %2299 = vmatprep.subr.mxu0 0.0
        %2300 = vmatpush1.msra.mxu0 0.0
        %2301 = vmatprep.subr.mxu0 0.0
        %2302 = vmatpush1.msra.mxu0 0.0
        %2303 = vmatprep.subr.mxu0 0.0
        %2304 = vmatpush1.msra.mxu0 0.0
        %2305 = vmatprep.subr.mxu0 0.0
        %2306 = vmatpush1.msra.mxu0 0.0
        %2307 = vmatprep.subr.mxu0 0.0
        %2308 = vmatpush1.msra.mxu0 %v1473
        %2309 = vmatprep.subr.mxu0 0.0
        %2310 = vmatpush2.msra.mxu0 0.0
        %2311 = vmatprep.subr.mxu0 0.0
        %2312 = vmatpush2.msra.mxu0 0.0
        %2313 = vmatprep.subr.mxu0 0.0
        %2314 = vmatpush2.msra.mxu0 0.0
        %2315 = vmatprep.subr.mxu0 0.0
        %2316 = vmatpush2.msra.mxu0 0.0
        %2317 = vmatprep.subr.mxu0 0.0
        %2318 = vmatpush2.msra.mxu0 0.0
        %2319 = vmatprep.subr.mxu0 0.0
        %2320 = vmatpush2.msra.mxu0 0.0
        %2321 = vmatprep.subr.mxu0 0.0
        %2322 = vmatpush2.msra.mxu0 0.0
        %2323 = vmatprep.subr.mxu0 0.0
        %2324 = vmatpush2.msra.mxu0 0.0
        %2325 = vmatprep.subr.mxu0 0.0
        %2326 = vmatpush2.msra.mxu0 0.0
        %2327 = vmatprep.subr.mxu0 0.0
        %2328 = vmatpush2.msra.mxu0 0.0
        %2329 = vmatprep.subr.mxu0 0.0
        %2330 = vmatpush2.msra.mxu0 0.0
        %2331 = vmatprep.subr.mxu0 0.0
        %2332 = vmatpush2.msra.mxu0 0.0
        %2333 = vmatprep.subr.mxu0 0.0
        %2334 = vmatpush2.msra.mxu0 0.0
        %2335 = vmatprep.subr.mxu0 0.0
        %2336 = vmatpush2.msra.mxu0 0.0
        %2337 = vmatprep.subr.mxu0 0.0
        %2338 = vmatpush2.msra.mxu0 0.0
        %2339 = vmatprep.subr.mxu0 0.0
        %2340 = vmatpush2.msra.mxu0 0.0
        %2341 = vmatprep.mubr.f32.mxu0 0.0
        %2342 = vmatmul.mubr.f32.gmra.mxu0 %v2275
        %v2343 = vpop.f32.mrf.mxu0
        %v2344 = vadd.f32 0.0, %v2343
        %v2345 = vpop.f32.mrf.mxu0
        %2346 = vdwg.mxu0
        %v2348 = vsel %vm2039, %v2123, 0
        %2350 = vmatprep.subr.mxu0 0.0
        %2351 = vmatpush1.msra.mxu0 0.0
        %2352 = vmatprep.subr.mxu0 0.0
        %2353 = vmatpush1.msra.mxu0 0.0
        %2354 = vmatprep.subr.mxu0 0.0
        %2355 = vmatpush1.msra.mxu0 0.0
        %2356 = vmatprep.subr.mxu0 0.0
        %2357 = vmatpush1.msra.mxu0 0.0
        %2358 = vmatprep.subr.mxu0 0.0
        %2359 = vmatpush1.msra.mxu0 0.0
        %2360 = vmatprep.subr.mxu0 0.0
        %2361 = vmatpush1.msra.mxu0 0.0
        %2362 = vmatprep.subr.mxu0 0.0
        %2363 = vmatpush1.msra.mxu0 0.0
        %2364 = vmatprep.subr.mxu0 0.0
        %2365 = vmatpush1.msra.mxu0 0.0
        %2366 = vmatprep.subr.mxu0 0.0
        %2367 = vmatpush1.msra.mxu0 0.0
        %2368 = vmatprep.subr.mxu0 0.0
        %2369 = vmatpush1.msra.mxu0 0.0
        %2370 = vmatprep.subr.mxu0 0.0
        %2371 = vmatpush1.msra.mxu0 0.0
        %2372 = vmatprep.subr.mxu0 0.0
        %2373 = vmatpush1.msra.mxu0 0.0
        %2374 = vmatprep.subr.mxu0 0.0
        %2375 = vmatpush1.msra.mxu0 0.0
        %2376 = vmatprep.subr.mxu0 0.0
        %2377 = vmatpush1.msra.mxu0 0.0
        %2378 = vmatprep.subr.mxu0 0.0
        %2379 = vmatpush1.msra.mxu0 0.0
        %2380 = vmatprep.subr.mxu0 0.0
        %2381 = vmatpush1.msra.mxu0 %v1474
        %2382 = vmatprep.subr.mxu0 0.0
        %2383 = vmatpush2.msra.mxu0 0.0
        %2384 = vmatprep.subr.mxu0 0.0
        %2385 = vmatpush2.msra.mxu0 0.0
        %2386 = vmatprep.subr.mxu0 0.0
        %2387 = vmatpush2.msra.mxu0 0.0
        %2388 = vmatprep.subr.mxu0 0.0
        %2389 = vmatpush2.msra.mxu0 0.0
        %2390 = vmatprep.subr.mxu0 0.0
        %2391 = vmatpush2.msra.mxu0 0.0
        %2392 = vmatprep.subr.mxu0 0.0
        %2393 = vmatpush2.msra.mxu0 0.0
        %2394 = vmatprep.subr.mxu0 0.0
        %2395 = vmatpush2.msra.mxu0 0.0
        %2396 = vmatprep.subr.mxu0 0.0
        %2397 = vmatpush2.msra.mxu0 0.0
        %2398 = vmatprep.subr.mxu0 0.0
        %2399 = vmatpush2.msra.mxu0 0.0
        %2400 = vmatprep.subr.mxu0 0.0
        %2401 = vmatpush2.msra.mxu0 0.0
        %2402 = vmatprep.subr.mxu0 0.0
        %2403 = vmatpush2.msra.mxu0 0.0
        %2404 = vmatprep.subr.mxu0 0.0
        %2405 = vmatpush2.msra.mxu0 0.0
        %2406 = vmatprep.subr.mxu0 0.0
        %2407 = vmatpush2.msra.mxu0 0.0
        %2408 = vmatprep.subr.mxu0 0.0
        %2409 = vmatpush2.msra.mxu0 0.0
        %2410 = vmatprep.subr.mxu0 0.0
        %2411 = vmatpush2.msra.mxu0 0.0
        %2412 = vmatprep.subr.mxu0 0.0
        %2413 = vmatpush2.msra.mxu0 0.0
        %2414 = vmatprep.mubr.f32.mxu0 0.0
        %2415 = vmatmul.mubr.f32.gmra.mxu0 %v2348
        %v2416 = vpop.f32.mrf.mxu0
        %v2417 = vadd.f32 0.0, %v2416
        %v2418 = vpop.f32.mrf.mxu0
        %2419 = vdwg.mxu0
        %v2421 = vsel %vm2039, %v2124, 0
        %2423 = vmatprep.subr.mxu0 0.0
        %2424 = vmatpush1.msra.mxu0 0.0
        %2425 = vmatprep.subr.mxu0 0.0
        %2426 = vmatpush1.msra.mxu0 0.0
        %2427 = vmatprep.subr.mxu0 0.0
        %2428 = vmatpush1.msra.mxu0 0.0
        %2429 = vmatprep.subr.mxu0 0.0
        %2430 = vmatpush1.msra.mxu0 0.0
        %2431 = vmatprep.subr.mxu0 0.0
        %2432 = vmatpush1.msra.mxu0 0.0
        %2433 = vmatprep.subr.mxu0 0.0
        %2434 = vmatpush1.msra.mxu0 0.0
        %2435 = vmatprep.subr.mxu0 0.0
        %2436 = vmatpush1.msra.mxu0 0.0
        %2437 = vmatprep.subr.mxu0 0.0
        %2438 = vmatpush1.msra.mxu0 0.0
        %2439 = vmatprep.subr.mxu0 0.0
        %2440 = vmatpush1.msra.mxu0 0.0
        %2441 = vmatprep.subr.mxu0 0.0
        %2442 = vmatpush1.msra.mxu0 0.0
        %2443 = vmatprep.subr.mxu0 0.0
        %2444 = vmatpush1.msra.mxu0 0.0
        %2445 = vmatprep.subr.mxu0 0.0
        %2446 = vmatpush1.msra.mxu0 0.0
        %2447 = vmatprep.subr.mxu0 0.0
        %2448 = vmatpush1.msra.mxu0 0.0
        %2449 = vmatprep.subr.mxu0 0.0
        %2450 = vmatpush1.msra.mxu0 0.0
        %2451 = vmatprep.subr.mxu0 0.0
        %2452 = vmatpush1.msra.mxu0 0.0
        %2453 = vmatprep.subr.mxu0 0.0
        %2454 = vmatpush1.msra.mxu0 %v1475
        %2455 = vmatprep.subr.mxu0 0.0
        %2456 = vmatpush2.msra.mxu0 0.0
        %2457 = vmatprep.subr.mxu0 0.0
        %2458 = vmatpush2.msra.mxu0 0.0
        %2459 = vmatprep.subr.mxu0 0.0
        %2460 = vmatpush2.msra.mxu0 0.0
        %2461 = vmatprep.subr.mxu0 0.0
        %2462 = vmatpush2.msra.mxu0 0.0
        %2463 = vmatprep.subr.mxu0 0.0
        %2464 = vmatpush2.msra.mxu0 0.0
        %2465 = vmatprep.subr.mxu0 0.0
        %2466 = vmatpush2.msra.mxu0 0.0
        %2467 = vmatprep.subr.mxu0 0.0
        %2468 = vmatpush2.msra.mxu0 0.0
        %2469 = vmatprep.subr.mxu0 0.0
        %2470 = vmatpush2.msra.mxu0 0.0
        %2471 = vmatprep.subr.mxu0 0.0
        %2472 = vmatpush2.msra.mxu0 0.0
        %2473 = vmatprep.subr.mxu0 0.0
        %2474 = vmatpush2.msra.mxu0 0.0
        %2475 = vmatprep.subr.mxu0 0.0
        %2476 = vmatpush2.msra.mxu0 0.0
        %2477 = vmatprep.subr.mxu0 0.0
        %2478 = vmatpush2.msra.mxu0 0.0
        %2479 = vmatprep.subr.mxu0 0.0
        %2480 = vmatpush2.msra.mxu0 0.0
        %2481 = vmatprep.subr.mxu0 0.0
        %2482 = vmatpush2.msra.mxu0 0.0
        %2483 = vmatprep.subr.mxu0 0.0
        %2484 = vmatpush2.msra.mxu0 0.0
        %2485 = vmatprep.subr.mxu0 0.0
        %2486 = vmatpush2.msra.mxu0 0.0
        %2487 = vmatprep.mubr.f32.mxu0 0.0
        %2488 = vmatmul.mubr.f32.gmra.mxu0 %v2421
        %v2489 = vpop.f32.mrf.mxu0
        %v2490 = vadd.f32 0.0, %v2489
        %v2491 = vpop.f32.mrf.mxu0
        %2492 = vdwg.mxu0
        %v2494 = vsel %vm2039, %v2125, 0
        %2496 = vmatprep.subr.mxu0 0.0
        %2497 = vmatpush1.msra.mxu0 0.0
        %2498 = vmatprep.subr.mxu0 0.0
        %2499 = vmatpush1.msra.mxu0 0.0
        %2500 = vmatprep.subr.mxu0 0.0
        %2501 = vmatpush1.msra.mxu0 0.0
        %2502 = vmatprep.subr.mxu0 0.0
        %2503 = vmatpush1.msra.mxu0 0.0
        %2504 = vmatprep.subr.mxu0 0.0
        %2505 = vmatpush1.msra.mxu0 0.0
        %2506 = vmatprep.subr.mxu0 0.0
        %2507 = vmatpush1.msra.mxu0 0.0
        %2508 = vmatprep.subr.mxu0 0.0
        %2509 = vmatpush1.msra.mxu0 0.0
        %2510 = vmatprep.subr.mxu0 0.0
        %2511 = vmatpush1.msra.mxu0 0.0
        %2512 = vmatprep.subr.mxu0 0.0
        %2513 = vmatpush1.msra.mxu0 0.0
        %2514 = vmatprep.subr.mxu0 0.0
        %2515 = vmatpush1.msra.mxu0 0.0
        %2516 = vmatprep.subr.mxu0 0.0
        %2517 = vmatpush1.msra.mxu0 0.0
        %2518 = vmatprep.subr.mxu0 0.0
        %2519 = vmatpush1.msra.mxu0 0.0
        %2520 = vmatprep.subr.mxu0 0.0
        %2521 = vmatpush1.msra.mxu0 0.0
        %2522 = vmatprep.subr.mxu0 0.0
        %2523 = vmatpush1.msra.mxu0 0.0
        %2524 = vmatprep.subr.mxu0 0.0
        %2525 = vmatpush1.msra.mxu0 0.0
        %2526 = vmatprep.subr.mxu0 0.0
        %2527 = vmatpush1.msra.mxu0 %v1476
        %2528 = vmatprep.subr.mxu0 0.0
        %2529 = vmatpush2.msra.mxu0 0.0
        %2530 = vmatprep.subr.mxu0 0.0
        %2531 = vmatpush2.msra.mxu0 0.0
        %2532 = vmatprep.subr.mxu0 0.0
        %2533 = vmatpush2.msra.mxu0 0.0
        %2534 = vmatprep.subr.mxu0 0.0
        %2535 = vmatpush2.msra.mxu0 0.0
        %2536 = vmatprep.subr.mxu0 0.0
        %2537 = vmatpush2.msra.mxu0 0.0
        %2538 = vmatprep.subr.mxu0 0.0
        %2539 = vmatpush2.msra.mxu0 0.0
        %2540 = vmatprep.subr.mxu0 0.0
        %2541 = vmatpush2.msra.mxu0 0.0
        %2542 = vmatprep.subr.mxu0 0.0
        %2543 = vmatpush2.msra.mxu0 0.0
        %2544 = vmatprep.subr.mxu0 0.0
        %2545 = vmatpush2.msra.mxu0 0.0
        %2546 = vmatprep.subr.mxu0 0.0
        %2547 = vmatpush2.msra.mxu0 0.0
        %2548 = vmatprep.subr.mxu0 0.0
        %2549 = vmatpush2.msra.mxu0 0.0
        %2550 = vmatprep.subr.mxu0 0.0
        %2551 = vmatpush2.msra.mxu0 0.0
        %2552 = vmatprep.subr.mxu0 0.0
        %2553 = vmatpush2.msra.mxu0 0.0
        %2554 = vmatprep.subr.mxu0 0.0
        %2555 = vmatpush2.msra.mxu0 0.0
        %2556 = vmatprep.subr.mxu0 0.0
        %2557 = vmatpush2.msra.mxu0 0.0
        %2558 = vmatprep.subr.mxu0 0.0
        %2559 = vmatpush2.msra.mxu0 0.0
        %2560 = vmatprep.mubr.f32.mxu0 0.0
        %2561 = vmatmul.mubr.f32.gmra.mxu0 %v2494
        %v2562 = vpop.f32.mrf.mxu0
        %v2563 = vadd.f32 0.0, %v2562
        %v2564 = vpop.f32.mrf.mxu0
        %2565 = vdwg.mxu0
        %v2567 = vsel %vm2039, %v2126, 0
        %2569 = vmatprep.subr.mxu0 0.0
        %2570 = vmatpush1.msra.mxu0 0.0
        %2571 = vmatprep.subr.mxu0 0.0
        %2572 = vmatpush1.msra.mxu0 0.0
        %2573 = vmatprep.subr.mxu0 0.0
        %2574 = vmatpush1.msra.mxu0 0.0
        %2575 = vmatprep.subr.mxu0 0.0
        %2576 = vmatpush1.msra.mxu0 0.0
        %2577 = vmatprep.subr.mxu0 0.0
        %2578 = vmatpush1.msra.mxu0 0.0
        %2579 = vmatprep.subr.mxu0 0.0
        %2580 = vmatpush1.msra.mxu0 0.0
        %2581 = vmatprep.subr.mxu0 0.0
        %2582 = vmatpush1.msra.mxu0 0.0
        %2583 = vmatprep.subr.mxu0 0.0
        %2584 = vmatpush1.msra.mxu0 0.0
        %2585 = vmatprep.subr.mxu0 0.0
        %2586 = vmatpush1.msra.mxu0 0.0
        %2587 = vmatprep.subr.mxu0 0.0
        %2588 = vmatpush1.msra.mxu0 0.0
        %2589 = vmatprep.subr.mxu0 0.0
        %2590 = vmatpush1.msra.mxu0 0.0
        %2591 = vmatprep.subr.mxu0 0.0
        %2592 = vmatpush1.msra.mxu0 0.0
        %2593 = vmatprep.subr.mxu0 0.0
        %2594 = vmatpush1.msra.mxu0 0.0
        %2595 = vmatprep.subr.mxu0 0.0
        %2596 = vmatpush1.msra.mxu0 0.0
        %2597 = vmatprep.subr.mxu0 0.0
        %2598 = vmatpush1.msra.mxu0 0.0
        %2599 = vmatprep.subr.mxu0 0.0
        %2600 = vmatpush1.msra.mxu0 %v1477
        %2601 = vmatprep.subr.mxu0 0.0
        %2602 = vmatpush2.msra.mxu0 0.0
        %2603 = vmatprep.subr.mxu0 0.0
        %2604 = vmatpush2.msra.mxu0 0.0
        %2605 = vmatprep.subr.mxu0 0.0
        %2606 = vmatpush2.msra.mxu0 0.0
        %2607 = vmatprep.subr.mxu0 0.0
        %2608 = vmatpush2.msra.mxu0 0.0
        %2609 = vmatprep.subr.mxu0 0.0
        %2610 = vmatpush2.msra.mxu0 0.0
        %2611 = vmatprep.subr.mxu0 0.0
        %2612 = vmatpush2.msra.mxu0 0.0
        %2613 = vmatprep.subr.mxu0 0.0
        %2614 = vmatpush2.msra.mxu0 0.0
        %2615 = vmatprep.subr.mxu0 0.0
        %2616 = vmatpush2.msra.mxu0 0.0
        %2617 = vmatprep.subr.mxu0 0.0
        %2618 = vmatpush2.msra.mxu0 0.0
        %2619 = vmatprep.subr.mxu0 0.0
        %2620 = vmatpush2.msra.mxu0 0.0
        %2621 = vmatprep.subr.mxu0 0.0
        %2622 = vmatpush2.msra.mxu0 0.0
        %2623 = vmatprep.subr.mxu0 0.0
        %2624 = vmatpush2.msra.mxu0 0.0
        %2625 = vmatprep.subr.mxu0 0.0
        %2626 = vmatpush2.msra.mxu0 0.0
        %2627 = vmatprep.subr.mxu0 0.0
        %2628 = vmatpush2.msra.mxu0 0.0
        %2629 = vmatprep.subr.mxu0 0.0
        %2630 = vmatpush2.msra.mxu0 0.0
        %2631 = vmatprep.subr.mxu0 0.0
        %2632 = vmatpush2.msra.mxu0 0.0
        %2633 = vmatprep.mubr.f32.mxu0 0.0
        %2634 = vmatmul.mubr.f32.gmra.mxu0 %v2567
        %v2635 = vpop.f32.mrf.mxu0
        %v2636 = vadd.f32 0.0, %v2635
        %v2637 = vpop.f32.mrf.mxu0
        %2638 = vdwg.mxu0
        %v2640 = vsel %vm2039, %v2127, 0
        %2642 = vmatprep.subr.mxu0 0.0
        %2643 = vmatpush1.msra.mxu0 0.0
        %2644 = vmatprep.subr.mxu0 0.0
        %2645 = vmatpush1.msra.mxu0 0.0
        %2646 = vmatprep.subr.mxu0 0.0
        %2647 = vmatpush1.msra.mxu0 0.0
        %2648 = vmatprep.subr.mxu0 0.0
        %2649 = vmatpush1.msra.mxu0 0.0
        %2650 = vmatprep.subr.mxu0 0.0
        %2651 = vmatpush1.msra.mxu0 0.0
        %2652 = vmatprep.subr.mxu0 0.0
        %2653 = vmatpush1.msra.mxu0 0.0
        %2654 = vmatprep.subr.mxu0 0.0
        %2655 = vmatpush1.msra.mxu0 0.0
        %2656 = vmatprep.subr.mxu0 0.0
        %2657 = vmatpush1.msra.mxu0 0.0
        %2658 = vmatprep.subr.mxu0 0.0
        %2659 = vmatpush1.msra.mxu0 0.0
        %2660 = vmatprep.subr.mxu0 0.0
        %2661 = vmatpush1.msra.mxu0 0.0
        %2662 = vmatprep.subr.mxu0 0.0
        %2663 = vmatpush1.msra.mxu0 0.0
        %2664 = vmatprep.subr.mxu0 0.0
        %2665 = vmatpush1.msra.mxu0 0.0
        %2666 = vmatprep.subr.mxu0 0.0
        %2667 = vmatpush1.msra.mxu0 0.0
        %2668 = vmatprep.subr.mxu0 0.0
        %2669 = vmatpush1.msra.mxu0 0.0
        %2670 = vmatprep.subr.mxu0 0.0
        %2671 = vmatpush1.msra.mxu0 0.0
        %2672 = vmatprep.subr.mxu0 0.0
        %2673 = vmatpush1.msra.mxu0 %v1478
        %2674 = vmatprep.subr.mxu0 0.0
        %2675 = vmatpush2.msra.mxu0 0.0
        %2676 = vmatprep.subr.mxu0 0.0
        %2677 = vmatpush2.msra.mxu0 0.0
        %2678 = vmatprep.subr.mxu0 0.0
        %2679 = vmatpush2.msra.mxu0 0.0
        %2680 = vmatprep.subr.mxu0 0.0
        %2681 = vmatpush2.msra.mxu0 0.0
        %2682 = vmatprep.subr.mxu0 0.0
        %2683 = vmatpush2.msra.mxu0 0.0
        %2684 = vmatprep.subr.mxu0 0.0
        %2685 = vmatpush2.msra.mxu0 0.0
        %2686 = vmatprep.subr.mxu0 0.0
        %2687 = vmatpush2.msra.mxu0 0.0
        %2688 = vmatprep.subr.mxu0 0.0
        %2689 = vmatpush2.msra.mxu0 0.0
        %2690 = vmatprep.subr.mxu0 0.0
        %2691 = vmatpush2.msra.mxu0 0.0
        %2692 = vmatprep.subr.mxu0 0.0
        %2693 = vmatpush2.msra.mxu0 0.0
        %2694 = vmatprep.subr.mxu0 0.0
        %2695 = vmatpush2.msra.mxu0 0.0
        %2696 = vmatprep.subr.mxu0 0.0
        %2697 = vmatpush2.msra.mxu0 0.0
        %2698 = vmatprep.subr.mxu0 0.0
        %2699 = vmatpush2.msra.mxu0 0.0
        %2700 = vmatprep.subr.mxu0 0.0
        %2701 = vmatpush2.msra.mxu0 0.0
        %2702 = vmatprep.subr.mxu0 0.0
        %2703 = vmatpush2.msra.mxu0 0.0
        %2704 = vmatprep.subr.mxu0 0.0
        %2705 = vmatpush2.msra.mxu0 0.0
        %2706 = vmatprep.mubr.f32.mxu0 0.0
        %2707 = vmatmul.mubr.f32.gmra.mxu0 %v2640
        %v2708 = vpop.f32.mrf.mxu0
        %v2709 = vadd.f32 0.0, %v2708
        %v2710 = vpop.f32.mrf.mxu0
        %2711 = vdwg.mxu0
        %v2712 = vadd.f32 %v2198, %v2271
        %v2713 = vadd.f32 %v2712, %v2344
        %v2714 = vadd.f32 %v2713, %v2417
        %v2715 = vadd.f32 %v2714, %v2490
        %v2716 = vadd.f32 %v2715, %v2563
        %v2717 = vadd.f32 %v2716, %v2636
        %v2718 = vadd.f32 %v2717, %v2709
        %v2719 = vadd.f32 %v1367, %v2718
        %2720 = vadd.xlane.f32.xlu0 %v2719
        %v2721 = vpop.xlane.xlu0 %2720
        %v2722 = vrcp.pop 128.0
        %v2723 = vmul.f32 %v2721, %v2722
        %v2724 = vsub.f32 %v2719, %v2723
        %v2725 = vmul.f32 %v2724, %v2724
        %2726 = vadd.xlane.f32.xlu0 %v2725
        %v2727 = vpop.xlane.xlu0 %2726
        %v2728 = vmul.f32 %v2727, %v2722
        %v2729 = vadd.f32 %v2728, 1e-05
        %v2730 = vrsqrt.pop %v2729
        %v2731 = vmul.f32 %v2724, %v2730
        %v2733 = vlaneseq
        %v2734 = vshrl.u32 %v2733, 7
        %v2735 = vsub.s32 0, %v2734
        %v2736 = vrot.slane %v1458, %v2735
        %v2738 = vmul.f32 %v2731, %v2736
        %v2740 = vlaneseq
        %v2741 = vshrl.u32 %v2740, 7
        %v2742 = vsub.s32 0, %v2741
        %v2743 = vrot.slane %v1459, %v2742
        %v2745 = vadd.f32 %v2738, %v2743
        %v2747 = vlaneseq
        %v2748 = vshrl.u32 %v2747, 7
        %v2749 = vsub.s32 0, %v2748
        %v2750 = vrot.slane %v1457, %v2749
        %2752 = vmatprep.subr.mxu0 0.0
        %2753 = vmatpush1.msra.mxu0 %v1456
        %2754 = vmatprep.subr.mxu0 0.0
        %2755 = vmatpush1.msra.mxu0 %v1455
        %2756 = vmatprep.subr.mxu0 0.0
        %2757 = vmatpush1.msra.mxu0 %v1454
        %2758 = vmatprep.subr.mxu0 0.0
        %2759 = vmatpush1.msra.mxu0 %v1453
        %2760 = vmatprep.subr.mxu0 0.0
        %2761 = vmatpush1.msra.mxu0 %v1452
        %2762 = vmatprep.subr.mxu0 0.0
        %2763 = vmatpush1.msra.mxu0 %v1451
        %2764 = vmatprep.subr.mxu0 0.0
        %2765 = vmatpush1.msra.mxu0 %v1450
        %2766 = vmatprep.subr.mxu0 0.0
        %2767 = vmatpush1.msra.mxu0 %v1449
        %2768 = vmatprep.subr.mxu0 0.0
        %2769 = vmatpush1.msra.mxu0 %v1448
        %2770 = vmatprep.subr.mxu0 0.0
        %2771 = vmatpush1.msra.mxu0 %v1447
        %2772 = vmatprep.subr.mxu0 0.0
        %2773 = vmatpush1.msra.mxu0 %v1446
        %2774 = vmatprep.subr.mxu0 0.0
        %2775 = vmatpush1.msra.mxu0 %v1445
        %2776 = vmatprep.subr.mxu0 0.0
        %2777 = vmatpush1.msra.mxu0 %v1444
        %2778 = vmatprep.subr.mxu0 0.0
        %2779 = vmatpush1.msra.mxu0 %v1443
        %2780 = vmatprep.subr.mxu0 0.0
        %2781 = vmatpush1.msra.mxu0 %v1442
        %2782 = vmatprep.subr.mxu0 0.0
        %2783 = vmatpush1.msra.mxu0 %v1441
        %2784 = vmatprep.subr.mxu0 0.0
        %2785 = vmatpush2.msra.mxu0 0.0
        %2786 = vmatprep.subr.mxu0 0.0
        %2787 = vmatpush2.msra.mxu0 0.0
        %2788 = vmatprep.subr.mxu0 0.0
        %2789 = vmatpush2.msra.mxu0 0.0
        %2790 = vmatprep.subr.mxu0 0.0
        %2791 = vmatpush2.msra.mxu0 0.0
        %2792 = vmatprep.subr.mxu0 0.0
        %2793 = vmatpush2.msra.mxu0 0.0
        %2794 = vmatprep.subr.mxu0 0.0
        %2795 = vmatpush2.msra.mxu0 0.0
        %2796 = vmatprep.subr.mxu0 0.0
        %2797 = vmatpush2.msra.mxu0 0.0
        %2798 = vmatprep.subr.mxu0 0.0
        %2799 = vmatpush2.msra.mxu0 0.0
        %2800 = vmatprep.subr.mxu0 0.0
        %2801 = vmatpush2.msra.mxu0 0.0
        %2802 = vmatprep.subr.mxu0 0.0
        %2803 = vmatpush2.msra.mxu0 0.0
        %2804 = vmatprep.subr.mxu0 0.0
        %2805 = vmatpush2.msra.mxu0 0.0
        %2806 = vmatprep.subr.mxu0 0.0
        %2807 = vmatpush2.msra.mxu0 0.0
        %2808 = vmatprep.subr.mxu0 0.0
        %2809 = vmatpush2.msra.mxu0 0.0
        %2810 = vmatprep.subr.mxu0 0.0
        %2811 = vmatpush2.msra.mxu0 0.0
        %2812 = vmatprep.subr.mxu0 0.0
        %2813 = vmatpush2.msra.mxu0 0.0
        %2814 = vmatprep.subr.mxu0 0.0
        %2815 = vmatpush2.msra.mxu0 0.0
        %2816 = vmatprep.mubr.f32.mxu0 0.0
        %2817 = vmatmul.mubr.f32.gmra.mxu0 %v2745
        %v2818 = vpop.f32.mrf.mxu0
        %v2819 = vadd.f32 %v2750, %v2818
        %v2820 = vpop.f32.mrf.mxu0
        %2821 = vdwg.mxu0
        %v2822 = vmax.f32 %v2819, 0.0
        %v2823 = vadd.f32 %v2745, %v2822
        %2824 = vadd.xlane.f32.xlu0 %v2823
        %v2825 = vpop.xlane.xlu0 %2824
        %v2826 = vmul.f32 %v2825, %v2722
        %v2827 = vsub.f32 %v2823, %v2826
        %v2828 = vmul.f32 %v2827, %v2827
        %2829 = vadd.xlane.f32.xlu0 %v2828
        %v2830 = vpop.xlane.xlu0 %2829
        %v2831 = vmul.f32 %v2830, %v2722
        %v2832 = vadd.f32 %v2831, 1e-05
        %v2833 = vrsqrt.pop %v2832
        %v2834 = vmul.f32 %v2827, %v2833
        %v2836 = vlaneseq
        %v2837 = vshrl.u32 %v2836, 7
        %v2838 = vsub.s32 0, %v2837
        %v2839 = vrot.slane %v1460, %v2838
        %v2841 = vmul.f32 %v2834, %v2839
        %v2843 = vlaneseq
        %v2844 = vshrl.u32 %v2843, 7
        %v2845 = vsub.s32 0, %v2844
        %v2846 = vrot.slane %v1461, %v2845
        %v2848 = vadd.f32 %v2841, %v2846
        %v2849 = vld [vmem:[%s19] sm:$0xff]
        %v2850 = vld [vmem:[%s19 + $0x8] sm:$0xff]
        %v2851 = vld [vmem:[%s19 + $0x10] sm:$0xff]
        %v2852 = vld [vmem:[%s19 + $0x18] sm:$0xff]
        %v2853 = vld [vmem:[%s19 + $0x20] sm:$0xff]
        %v2854 = vld [vmem:[%s19 + $0x28] sm:$0xff]
        %v2855 = vld [vmem:[%s19 + $0x30] sm:$0xff]
        %v2856 = vld [vmem:[%s19 + $0x38] sm:$0xff]
        %v2857 = vld [vmem:[%s19 + $0x40] sm:$0xff]
        %v2858 = vld [vmem:[%s19 + $0x48] sm:$0xff]
        %v2859 = vld [vmem:[%s19 + $0x50] sm:$0xff]
        %v2860 = vld [vmem:[%s19 + $0x58] sm:$0xff]
        %v2861 = vld [vmem:[%s19 + $0x60] sm:$0xff]
        %v2862 = vld [vmem:[%s19 + $0x68] sm:$0xff]
        %v2863 = vld [vmem:[%s19 + $0x70] sm:$0xff]
        %v2864 = vld [vmem:[%s19 + $0x78] sm:$0xff]
        %2865 = vmatprep.subr.mxu0 0.0
        %2866 = vmatpush1.msra.mxu0 %v2864
        %2867 = vmatprep.subr.mxu0 0.0
        %2868 = vmatpush1.msra.mxu0 %v2863
        %2869 = vmatprep.subr.mxu0 0.0
        %2870 = vmatpush1.msra.mxu0 %v2862
        %2871 = vmatprep.subr.mxu0 0.0
        %2872 = vmatpush1.msra.mxu0 %v2861
        %2873 = vmatprep.subr.mxu0 0.0
        %2874 = vmatpush1.msra.mxu0 %v2860
        %2875 = vmatprep.subr.mxu0 0.0
        %2876 = vmatpush1.msra.mxu0 %v2859
        %2877 = vmatprep.subr.mxu0 0.0
        %2878 = vmatpush1.msra.mxu0 %v2858
        %2879 = vmatprep.subr.mxu0 0.0
        %2880 = vmatpush1.msra.mxu0 %v2857
        %2881 = vmatprep.subr.mxu0 0.0
        %2882 = vmatpush1.msra.mxu0 %v2856
        %2883 = vmatprep.subr.mxu0 0.0
        %2884 = vmatpush1.msra.mxu0 %v2855
        %2885 = vmatprep.subr.mxu0 0.0
        %2886 = vmatpush1.msra.mxu0 %v2854
        %2887 = vmatprep.subr.mxu0 0.0
        %2888 = vmatpush1.msra.mxu0 %v2853
        %2889 = vmatprep.subr.mxu0 0.0
        %2890 = vmatpush1.msra.mxu0 %v2852
        %2891 = vmatprep.subr.mxu0 0.0
        %2892 = vmatpush1.msra.mxu0 %v2851
        %2893 = vmatprep.subr.mxu0 0.0
        %2894 = vmatpush1.msra.mxu0 %v2850
        %2895 = vmatprep.subr.mxu0 0.0
        %2896 = vmatpush1.msra.mxu0 %v2849
        %2897 = vmatprep.subr.mxu0 0.0
        %2898 = vmatpush2.msra.mxu0 0.0
        %2899 = vmatprep.subr.mxu0 0.0
        %2900 = vmatpush2.msra.mxu0 0.0
        %2901 = vmatprep.subr.mxu0 0.0
        %2902 = vmatpush2.msra.mxu0 0.0
        %2903 = vmatprep.subr.mxu0 0.0
        %2904 = vmatpush2.msra.mxu0 0.0
        %2905 = vmatprep.subr.mxu0 0.0
        %2906 = vmatpush2.msra.mxu0 0.0
        %2907 = vmatprep.subr.mxu0 0.0
        %2908 = vmatpush2.msra.mxu0 0.0
        %2909 = vmatprep.subr.mxu0 0.0
        %2910 = vmatpush2.msra.mxu0 0.0
        %2911 = vmatprep.subr.mxu0 0.0
        %2912 = vmatpush2.msra.mxu0 0.0
        %2913 = vmatprep.subr.mxu0 0.0
        %2914 = vmatpush2.msra.mxu0 0.0
        %2915 = vmatprep.subr.mxu0 0.0
        %2916 = vmatpush2.msra.mxu0 0.0
        %2917 = vmatprep.subr.mxu0 0.0
        %2918 = vmatpush2.msra.mxu0 0.0
        %2919 = vmatprep.subr.mxu0 0.0
        %2920 = vmatpush2.msra.mxu0 0.0
        %2921 = vmatprep.subr.mxu0 0.0
        %2922 = vmatpush2.msra.mxu0 0.0
        %2923 = vmatprep.subr.mxu0 0.0
        %2924 = vmatpush2.msra.mxu0 0.0
        %2925 = vmatprep.subr.mxu0 0.0
        %2926 = vmatpush2.msra.mxu0 0.0
        %2927 = vmatprep.subr.mxu0 0.0
        %2928 = vmatpush2.msra.mxu0 0.0
        %2929 = vmatprep.mubr.f32.mxu0 0.0
        %2930 = vmatmul.mubr.f32.gmra.mxu0 %v1047
        %v2931 = vpop.f32.mrf.mxu0
        %v2932 = vadd.f32 0.0, %v2931
        %v2933 = vpop.f32.mrf.mxu0
        %2934 = vdwg.mxu0
        %v2935 = vld [vmem:[%s20] sm:$0xff]
        %v2936 = vld [vmem:[%s20 + $0x8] sm:$0xff]
        %v2937 = vld [vmem:[%s20 + $0x10] sm:$0xff]
        %v2938 = vld [vmem:[%s20 + $0x18] sm:$0xff]
        %v2939 = vld [vmem:[%s20 + $0x20] sm:$0xff]
        %v2940 = vld [vmem:[%s20 + $0x28] sm:$0xff]
        %v2941 = vld [vmem:[%s20 + $0x30] sm:$0xff]
        %v2942 = vld [vmem:[%s20 + $0x38] sm:$0xff]
        %v2943 = vld [vmem:[%s20 + $0x40] sm:$0xff]
        %v2944 = vld [vmem:[%s20 + $0x48] sm:$0xff]
        %v2945 = vld [vmem:[%s20 + $0x50] sm:$0xff]
        %v2946 = vld [vmem:[%s20 + $0x58] sm:$0xff]
        %v2947 = vld [vmem:[%s20 + $0x60] sm:$0xff]
        %v2948 = vld [vmem:[%s20 + $0x68] sm:$0xff]
        %v2949 = vld [vmem:[%s20 + $0x70] sm:$0xff]
        %v2950 = vld [vmem:[%s20 + $0x78] sm:$0xff]
        %2951 = vmatprep.subr.mxu0 0.0
        %2952 = vmatpush1.msra.mxu0 %v2950
        %2953 = vmatprep.subr.mxu0 0.0
        %2954 = vmatpush1.msra.mxu0 %v2949
        %2955 = vmatprep.subr.mxu0 0.0
        %2956 = vmatpush1.msra.mxu0 %v2948
        %2957 = vmatprep.subr.mxu0 0.0
        %2958 = vmatpush1.msra.mxu0 %v2947
        %2959 = vmatprep.subr.mxu0 0.0
        %2960 = vmatpush1.msra.mxu0 %v2946
        %2961 = vmatprep.subr.mxu0 0.0
        %2962 = vmatpush1.msra.mxu0 %v2945
        %2963 = vmatprep.subr.mxu0 0.0
        %2964 = vmatpush1.msra.mxu0 %v2944
        %2965 = vmatprep.subr.mxu0 0.0
        %2966 = vmatpush1.msra.mxu0 %v2943
        %2967 = vmatprep.subr.mxu0 0.0
        %2968 = vmatpush1.msra.mxu0 %v2942
        %2969 = vmatprep.subr.mxu0 0.0
        %2970 = vmatpush1.msra.mxu0 %v2941
        %2971 = vmatprep.subr.mxu0 0.0
        %2972 = vmatpush1.msra.mxu0 %v2940
        %2973 = vmatprep.subr.mxu0 0.0
        %2974 = vmatpush1.msra.mxu0 %v2939
        %2975 = vmatprep.subr.mxu0 0.0
        %2976 = vmatpush1.msra.mxu0 %v2938
        %2977 = vmatprep.subr.mxu0 0.0
        %2978 = vmatpush1.msra.mxu0 %v2937
        %2979 = vmatprep.subr.mxu0 0.0
        %2980 = vmatpush1.msra.mxu0 %v2936
        %2981 = vmatprep.subr.mxu0 0.0
        %2982 = vmatpush1.msra.mxu0 %v2935
        %2983 = vmatprep.subr.mxu0 0.0
        %2984 = vmatpush2.msra.mxu0 0.0
        %2985 = vmatprep.subr.mxu0 0.0
        %2986 = vmatpush2.msra.mxu0 0.0
        %2987 = vmatprep.subr.mxu0 0.0
        %2988 = vmatpush2.msra.mxu0 0.0
        %2989 = vmatprep.subr.mxu0 0.0
        %2990 = vmatpush2.msra.mxu0 0.0
        %2991 = vmatprep.subr.mxu0 0.0
        %2992 = vmatpush2.msra.mxu0 0.0
        %2993 = vmatprep.subr.mxu0 0.0
        %2994 = vmatpush2.msra.mxu0 0.0
        %2995 = vmatprep.subr.mxu0 0.0
        %2996 = vmatpush2.msra.mxu0 0.0
        %2997 = vmatprep.subr.mxu0 0.0
        %2998 = vmatpush2.msra.mxu0 0.0
        %2999 = vmatprep.subr.mxu0 0.0
        %3000 = vmatpush2.msra.mxu0 0.0
        %3001 = vmatprep.subr.mxu0 0.0
        %3002 = vmatpush2.msra.mxu0 0.0
        %3003 = vmatprep.subr.mxu0 0.0
        %3004 = vmatpush2.msra.mxu0 0.0
        %3005 = vmatprep.subr.mxu0 0.0
        %3006 = vmatpush2.msra.mxu0 0.0
        %3007 = vmatprep.subr.mxu0 0.0
        %3008 = vmatpush2.msra.mxu0 0.0
        %3009 = vmatprep.subr.mxu0 0.0
        %3010 = vmatpush2.msra.mxu0 0.0
        %3011 = vmatprep.subr.mxu0 0.0
        %3012 = vmatpush2.msra.mxu0 0.0
        %3013 = vmatprep.subr.mxu0 0.0
        %3014 = vmatpush2.msra.mxu0 0.0
        %3015 = vmatprep.mubr.f32.mxu0 0.0
        %3016 = vmatmul.mubr.f32.gmra.mxu0 %v1125
        %v3017 = vpop.f32.mrf.mxu0
        %v3018 = vadd.f32 0.0, %v3017
        %v3019 = vpop.f32.mrf.mxu0
        %3020 = vdwg.mxu0
        %v3021 = vld [vmem:[%s21] sm:$0xff]
        %v3022 = vld [vmem:[%s21 + $0x8] sm:$0xff]
        %v3023 = vld [vmem:[%s21 + $0x10] sm:$0xff]
        %v3024 = vld [vmem:[%s21 + $0x18] sm:$0xff]
        %v3025 = vld [vmem:[%s21 + $0x20] sm:$0xff]
        %v3026 = vld [vmem:[%s21 + $0x28] sm:$0xff]
        %v3027 = vld [vmem:[%s21 + $0x30] sm:$0xff]
        %v3028 = vld [vmem:[%s21 + $0x38] sm:$0xff]
        %v3029 = vld [vmem:[%s21 + $0x40] sm:$0xff]
        %v3030 = vld [vmem:[%s21 + $0x48] sm:$0xff]
        %v3031 = vld [vmem:[%s21 + $0x50] sm:$0xff]
        %v3032 = vld [vmem:[%s21 + $0x58] sm:$0xff]
        %v3033 = vld [vmem:[%s21 + $0x60] sm:$0xff]
        %v3034 = vld [vmem:[%s21 + $0x68] sm:$0xff]
        %v3035 = vld [vmem:[%s21 + $0x70] sm:$0xff]
        %v3036 = vld [vmem:[%s21 + $0x78] sm:$0xff]
        %3037 = vmatprep.subr.mxu0 0.0
        %3038 = vmatpush1.msra.mxu0 %v3036
        %3039 = vmatprep.subr.mxu0 0.0
        %3040 = vmatpush1.msra.mxu0 %v3035
        %3041 = vmatprep.subr.mxu0 0.0
        %3042 = vmatpush1.msra.mxu0 %v3034
        %3043 = vmatprep.subr.mxu0 0.0
        %3044 = vmatpush1.msra.mxu0 %v3033
        %3045 = vmatprep.subr.mxu0 0.0
        %3046 = vmatpush1.msra.mxu0 %v3032
        %3047 = vmatprep.subr.mxu0 0.0
        %3048 = vmatpush1.msra.mxu0 %v3031
        %3049 = vmatprep.subr.mxu0 0.0
        %3050 = vmatpush1.msra.mxu0 %v3030
        %3051 = vmatprep.subr.mxu0 0.0
        %3052 = vmatpush1.msra.mxu0 %v3029
        %3053 = vmatprep.subr.mxu0 0.0
        %3054 = vmatpush1.msra.mxu0 %v3028
        %3055 = vmatprep.subr.mxu0 0.0
        %3056 = vmatpush1.msra.mxu0 %v3027
        %3057 = vmatprep.subr.mxu0 0.0
        %3058 = vmatpush1.msra.mxu0 %v3026
        %3059 = vmatprep.subr.mxu0 0.0
        %3060 = vmatpush1.msra.mxu0 %v3025
        %3061 = vmatprep.subr.mxu0 0.0
        %3062 = vmatpush1.msra.mxu0 %v3024
        %3063 = vmatprep.subr.mxu0 0.0
        %3064 = vmatpush1.msra.mxu0 %v3023
        %3065 = vmatprep.subr.mxu0 0.0
        %3066 = vmatpush1.msra.mxu0 %v3022
        %3067 = vmatprep.subr.mxu0 0.0
        %3068 = vmatpush1.msra.mxu0 %v3021
        %3069 = vmatprep.subr.mxu0 0.0
        %3070 = vmatpush2.msra.mxu0 0.0
        %3071 = vmatprep.subr.mxu0 0.0
        %3072 = vmatpush2.msra.mxu0 0.0
        %3073 = vmatprep.subr.mxu0 0.0
        %3074 = vmatpush2.msra.mxu0 0.0
        %3075 = vmatprep.subr.mxu0 0.0
        %3076 = vmatpush2.msra.mxu0 0.0
        %3077 = vmatprep.subr.mxu0 0.0
        %3078 = vmatpush2.msra.mxu0 0.0
        %3079 = vmatprep.subr.mxu0 0.0
        %3080 = vmatpush2.msra.mxu0 0.0
        %3081 = vmatprep.subr.mxu0 0.0
        %3082 = vmatpush2.msra.mxu0 0.0
        %3083 = vmatprep.subr.mxu0 0.0
        %3084 = vmatpush2.msra.mxu0 0.0
        %3085 = vmatprep.subr.mxu0 0.0
        %3086 = vmatpush2.msra.mxu0 0.0
        %3087 = vmatprep.subr.mxu0 0.0
        %3088 = vmatpush2.msra.mxu0 0.0
        %3089 = vmatprep.subr.mxu0 0.0
        %3090 = vmatpush2.msra.mxu0 0.0
        %3091 = vmatprep.subr.mxu0 0.0
        %3092 = vmatpush2.msra.mxu0 0.0
        %3093 = vmatprep.subr.mxu0 0.0
        %3094 = vmatpush2.msra.mxu0 0.0
        %3095 = vmatprep.subr.mxu0 0.0
        %3096 = vmatpush2.msra.mxu0 0.0
        %3097 = vmatprep.subr.mxu0 0.0
        %3098 = vmatpush2.msra.mxu0 0.0
        %3099 = vmatprep.subr.mxu0 0.0
        %3100 = vmatpush2.msra.mxu0 0.0
        %3101 = vmatprep.mubr.f32.mxu0 0.0
        %3102 = vmatmul.mubr.f32.gmra.mxu0 %v2848
        %v3103 = vpop.f32.mrf.mxu0
        %v3104 = vadd.f32 0.0, %v3103
        %v3105 = vpop.f32.mrf.mxu0
        %3106 = vdwg.mxu0
        %v3107 = vld [vmem:[#allocation2] sm:$0xff]
        %v3108 = vld [vmem:[#allocation2 + $0x8] sm:$0xff]
        %v3109 = vld [vmem:[#allocation2 + $0x10] sm:$0xff]
        %v3110 = vld [vmem:[#allocation2 + $0x18] sm:$0xff]
        %v3111 = vld [vmem:[#allocation2 + $0x20] sm:$0xff]
        %v3112 = vld [vmem:[#allocation2 + $0x28] sm:$0xff]
        %v3113 = vld [vmem:[#allocation2 + $0x30] sm:$0xff]
        %v3114 = vld [vmem:[#allocation2 + $0x38] sm:$0xff]
        %v3115 = vld [vmem:[#allocation2 + $0x40] sm:$0xff]
        %v3116 = vld [vmem:[#allocation2 + $0x48] sm:$0xff]
        %v3117 = vld [vmem:[#allocation2 + $0x50] sm:$0xff]
        %v3118 = vld [vmem:[#allocation2 + $0x58] sm:$0xff]
        %v3119 = vld [vmem:[#allocation2 + $0x60] sm:$0xff]
        %v3120 = vld [vmem:[#allocation2 + $0x68] sm:$0xff]
        %v3121 = vld [vmem:[#allocation2 + $0x70] sm:$0xff]
        %v3122 = vld [vmem:[#allocation2 + $0x78] sm:$0xff]
        %v3123 = vld [vmem:[%s23] sm:$0x1]
        %v3124 = vld [vmem:[%s24] sm:$0x1]
        %v3125 = vld [vmem:[%s25] sm:$0x1]
        %v3126 = vld [vmem:[%s26] sm:$0x1]
        %v3127 = vld [vmem:[%s27] sm:$0x1]
        %v3128 = vmul.f32 %v2932, 0.088388346
        %v3129 = vmul.f32 %v3128, %v924
        %v3130 = vmul.f32 %v3128, %v925
        %v3131 = vmul.f32 %v3128, %v926
        %v3132 = vmul.f32 %v3128, %v927
        %v3133 = vmul.f32 %v3128, %v928
        %v3134 = vmul.f32 %v3128, %v929
        %v3135 = vmul.f32 %v3128, %v930
        %v3136 = vmul.f32 %v3128, %v931
        %v3137 = vmul.f32 %v3104, %v924
        %v3138 = vmul.f32 %v3104, %v925
        %v3139 = vmul.f32 %v3104, %v926
        %v3140 = vmul.f32 %v3104, %v927
        %v3141 = vmul.f32 %v3104, %v928
        %v3142 = vmul.f32 %v3104, %v929
        %v3143 = vmul.f32 %v3104, %v930
        %v3144 = vmul.f32 %v3104, %v931
        %3145 = vmatprep.subr.mxu0 0.0
        %3146 = vmatpush1.xpose.msra.mxu0 0.0
        %3147 = vmatprep.subr.mxu0 0.0
        %3148 = vmatpush1.xpose.msra.mxu0 0.0
        %3149 = vmatprep.subr.mxu0 0.0
        %3150 = vmatpush1.xpose.msra.mxu0 0.0
        %3151 = vmatprep.subr.mxu0 0.0
        %3152 = vmatpush1.xpose.msra.mxu0 0.0
        %3153 = vmatprep.subr.mxu0 0.0
        %3154 = vmatpush1.xpose.msra.mxu0 0.0
        %3155 = vmatprep.subr.mxu0 0.0
        %3156 = vmatpush1.xpose.msra.mxu0 0.0
        %3157 = vmatprep.subr.mxu0 0.0
        %3158 = vmatpush1.xpose.msra.mxu0 0.0
        %3159 = vmatprep.subr.mxu0 0.0
        %3160 = vmatpush1.xpose.msra.mxu0 0.0
        %3161 = vmatprep.subr.mxu0 0.0
        %3162 = vmatpush1.xpose.msra.mxu0 0.0
        %3163 = vmatprep.subr.mxu0 0.0
        %3164 = vmatpush1.xpose.msra.mxu0 0.0
        %3165 = vmatprep.subr.mxu0 0.0
        %3166 = vmatpush1.xpose.msra.mxu0 0.0
        %3167 = vmatprep.subr.mxu0 0.0
        %3168 = vmatpush1.xpose.msra.mxu0 0.0
        %3169 = vmatprep.subr.mxu0 0.0
        %3170 = vmatpush1.xpose.msra.mxu0 0.0
        %3171 = vmatprep.subr.mxu0 0.0
        %3172 = vmatpush1.xpose.msra.mxu0 0.0
        %3173 = vmatprep.subr.mxu0 0.0
        %3174 = vmatpush1.xpose.msra.mxu0 0.0
        %3175 = vmatprep.subr.mxu0 0.0
        %3176 = vmatpush1.xpose.msra.mxu0 %v3018
        %3177 = vmatprep.subr.mxu0 0.0
        %3178 = vmatpush2.xpose.msra.mxu0 0.0
        %3179 = vmatprep.subr.mxu0 0.0
        %3180 = vmatpush2.xpose.msra.mxu0 0.0
        %3181 = vmatprep.subr.mxu0 0.0
        %3182 = vmatpush2.xpose.msra.mxu0 0.0
        %3183 = vmatprep.subr.mxu0 0.0
        %3184 = vmatpush2.xpose.msra.mxu0 0.0
        %3185 = vmatprep.subr.mxu0 0.0
        %3186 = vmatpush2.xpose.msra.mxu0 0.0
        %3187 = vmatprep.subr.mxu0 0.0
        %3188 = vmatpush2.xpose.msra.mxu0 0.0
        %3189 = vmatprep.subr.mxu0 0.0
        %3190 = vmatpush2.xpose.msra.mxu0 0.0
        %3191 = vmatprep.subr.mxu0 0.0
        %3192 = vmatpush2.xpose.msra.mxu0 0.0
        %3193 = vmatprep.subr.mxu0 0.0
        %3194 = vmatpush2.xpose.msra.mxu0 0.0
        %3195 = vmatprep.subr.mxu0 0.0
        %3196 = vmatpush2.xpose.msra.mxu0 0.0
        %3197 = vmatprep.subr.mxu0 0.0
        %3198 = vmatpush2.xpose.msra.mxu0 0.0
        %3199 = vmatprep.subr.mxu0 0.0
        %3200 = vmatpush2.xpose.msra.mxu0 0.0
        %3201 = vmatprep.subr.mxu0 0.0
        %3202 = vmatpush2.xpose.msra.mxu0 0.0
        %3203 = vmatprep.subr.mxu0 0.0
        %3204 = vmatpush2.xpose.msra.mxu0 0.0
        %3205 = vmatprep.subr.mxu0 0.0
        %3206 = vmatpush2.xpose.msra.mxu0 0.0
        %3207 = vmatprep.subr.mxu0 0.0
        %3208 = vmatpush2.xpose.msra.mxu0 0.0
        %3209 = vmatprep.mubr.f32.mxu0 0.0
        %3210 = vmatmul.mubr.f32.gmra.mxu0 %v3129
        %v3211 = vpop.f32.mrf.mxu0
        %v3212 = vadd.f32 0.0, %v3211
        %v3213 = vpop.f32.mrf.mxu0
        %3214 = vdwg.mxu0
        %3215 = vmatprep.subr.mxu0 0.0
        %3216 = vmatpush1.xpose.msra.mxu0 0.0
        %3217 = vmatprep.subr.mxu0 0.0
        %3218 = vmatpush1.xpose.msra.mxu0 0.0
        %3219 = vmatprep.subr.mxu0 0.0
        %3220 = vmatpush1.xpose.msra.mxu0 0.0
        %3221 = vmatprep.subr.mxu0 0.0
        %3222 = vmatpush1.xpose.msra.mxu0 0.0
        %3223 = vmatprep.subr.mxu0 0.0
        %3224 = vmatpush1.xpose.msra.mxu0 0.0
        %3225 = vmatprep.subr.mxu0 0.0
        %3226 = vmatpush1.xpose.msra.mxu0 0.0
        %3227 = vmatprep.subr.mxu0 0.0
        %3228 = vmatpush1.xpose.msra.mxu0 0.0
        %3229 = vmatprep.subr.mxu0 0.0
        %3230 = vmatpush1.xpose.msra.mxu0 0.0
        %3231 = vmatprep.subr.mxu0 0.0
        %3232 = vmatpush1.xpose.msra.mxu0 0.0
        %3233 = vmatprep.subr.mxu0 0.0
        %3234 = vmatpush1.xpose.msra.mxu0 0.0
        %3235 = vmatprep.subr.mxu0 0.0
        %3236 = vmatpush1.xpose.msra.mxu0 0.0
        %3237 = vmatprep.subr.mxu0 0.0
        %3238 = vmatpush1.xpose.msra.mxu0 0.0
        %3239 = vmatprep.subr.mxu0 0.0
        %3240 = vmatpush1.xpose.msra.mxu0 0.0
        %3241 = vmatprep.subr.mxu0 0.0
        %3242 = vmatpush1.xpose.msra.mxu0 0.0
        %3243 = vmatprep.subr.mxu0 0.0
        %3244 = vmatpush1.xpose.msra.mxu0 0.0
        %3245 = vmatprep.subr.mxu0 0.0
        %3246 = vmatpush1.xpose.msra.mxu0 %v3018
        %3247 = vmatprep.subr.mxu0 0.0
        %3248 = vmatpush2.xpose.msra.mxu0 0.0
        %3249 = vmatprep.subr.mxu0 0.0
        %3250 = vmatpush2.xpose.msra.mxu0 0.0
        %3251 = vmatprep.subr.mxu0 0.0
        %3252 = vmatpush2.xpose.msra.mxu0 0.0
        %3253 = vmatprep.subr.mxu0 0.0
        %3254 = vmatpush2.xpose.msra.mxu0 0.0
        %3255 = vmatprep.subr.mxu0 0.0
        %3256 = vmatpush2.xpose.msra.mxu0 0.0
        %3257 = vmatprep.subr.mxu0 0.0
        %3258 = vmatpush2.xpose.msra.mxu0 0.0
        %3259 = vmatprep.subr.mxu0 0.0
        %3260 = vmatpush2.xpose.msra.mxu0 0.0
        %3261 = vmatprep.subr.mxu0 0.0
        %3262 = vmatpush2.xpose.msra.mxu0 0.0
        %3263 = vmatprep.subr.mxu0 0.0
        %3264 = vmatpush2.xpose.msra.mxu0 0.0
        %3265 = vmatprep.subr.mxu0 0.0
        %3266 = vmatpush2.xpose.msra.mxu0 0.0
        %3267 = vmatprep.subr.mxu0 0.0
        %3268 = vmatpush2.xpose.msra.mxu0 0.0
        %3269 = vmatprep.subr.mxu0 0.0
        %3270 = vmatpush2.xpose.msra.mxu0 0.0
        %3271 = vmatprep.subr.mxu0 0.0
        %3272 = vmatpush2.xpose.msra.mxu0 0.0
        %3273 = vmatprep.subr.mxu0 0.0
        %3274 = vmatpush2.xpose.msra.mxu0 0.0
        %3275 = vmatprep.subr.mxu0 0.0
        %3276 = vmatpush2.xpose.msra.mxu0 0.0
        %3277 = vmatprep.subr.mxu0 0.0
        %3278 = vmatpush2.xpose.msra.mxu0 0.0
        %3279 = vmatprep.mubr.f32.mxu0 0.0
        %3280 = vmatmul.mubr.f32.gmra.mxu0 %v3130
        %v3281 = vpop.f32.mrf.mxu0
        %v3282 = vadd.f32 0.0, %v3281
        %v3283 = vpop.f32.mrf.mxu0
        %3284 = vdwg.mxu0
        %3285 = vmatprep.subr.mxu0 0.0
        %3286 = vmatpush1.xpose.msra.mxu0 0.0
        %3287 = vmatprep.subr.mxu0 0.0
        %3288 = vmatpush1.xpose.msra.mxu0 0.0
        %3289 = vmatprep.subr.mxu0 0.0
        %3290 = vmatpush1.xpose.msra.mxu0 0.0
        %3291 = vmatprep.subr.mxu0 0.0
        %3292 = vmatpush1.xpose.msra.mxu0 0.0
        %3293 = vmatprep.subr.mxu0 0.0
        %3294 = vmatpush1.xpose.msra.mxu0 0.0
        %3295 = vmatprep.subr.mxu0 0.0
        %3296 = vmatpush1.xpose.msra.mxu0 0.0
        %3297 = vmatprep.subr.mxu0 0.0
        %3298 = vmatpush1.xpose.msra.mxu0 0.0
        %3299 = vmatprep.subr.mxu0 0.0
        %3300 = vmatpush1.xpose.msra.mxu0 0.0
        %3301 = vmatprep.subr.mxu0 0.0
        %3302 = vmatpush1.xpose.msra.mxu0 0.0
        %3303 = vmatprep.subr.mxu0 0.0
        %3304 = vmatpush1.xpose.msra.mxu0 0.0
        %3305 = vmatprep.subr.mxu0 0.0
        %3306 = vmatpush1.xpose.msra.mxu0 0.0
        %3307 = vmatprep.subr.mxu0 0.0
        %3308 = vmatpush1.xpose.msra.mxu0 0.0
        %3309 = vmatprep.subr.mxu0 0.0
        %3310 = vmatpush1.xpose.msra.mxu0 0.0
        %3311 = vmatprep.subr.mxu0 0.0
        %3312 = vmatpush1.xpose.msra.mxu0 0.0
        %3313 = vmatprep.subr.mxu0 0.0
        %3314 = vmatpush1.xpose.msra.mxu0 0.0
        %3315 = vmatprep.subr.mxu0 0.0
        %3316 = vmatpush1.xpose.msra.mxu0 %v3018
        %3317 = vmatprep.subr.mxu0 0.0
        %3318 = vmatpush2.xpose.msra.mxu0 0.0
        %3319 = vmatprep.subr.mxu0 0.0
        %3320 = vmatpush2.xpose.msra.mxu0 0.0
        %3321 = vmatprep.subr.mxu0 0.0
        %3322 = vmatpush2.xpose.msra.mxu0 0.0
        %3323 = vmatprep.subr.mxu0 0.0
        %3324 = vmatpush2.xpose.msra.mxu0 0.0
        %3325 = vmatprep.subr.mxu0 0.0
        %3326 = vmatpush2.xpose.msra.mxu0 0.0
        %3327 = vmatprep.subr.mxu0 0.0
        %3328 = vmatpush2.xpose.msra.mxu0 0.0
        %3329 = vmatprep.subr.mxu0 0.0
        %3330 = vmatpush2.xpose.msra.mxu0 0.0
        %3331 = vmatprep.subr.mxu0 0.0
        %3332 = vmatpush2.xpose.msra.mxu0 0.0
        %3333 = vmatprep.subr.mxu0 0.0
        %3334 = vmatpush2.xpose.msra.mxu0 0.0
        %3335 = vmatprep.subr.mxu0 0.0
        %3336 = vmatpush2.xpose.msra.mxu0 0.0
        %3337 = vmatprep.subr.mxu0 0.0
        %3338 = vmatpush2.xpose.msra.mxu0 0.0
        %3339 = vmatprep.subr.mxu0 0.0
        %3340 = vmatpush2.xpose.msra.mxu0 0.0
        %3341 = vmatprep.subr.mxu0 0.0
        %3342 = vmatpush2.xpose.msra.mxu0 0.0
        %3343 = vmatprep.subr.mxu0 0.0
        %3344 = vmatpush2.xpose.msra.mxu0 0.0
        %3345 = vmatprep.subr.mxu0 0.0
        %3346 = vmatpush2.xpose.msra.mxu0 0.0
        %3347 = vmatprep.subr.mxu0 0.0
        %3348 = vmatpush2.xpose.msra.mxu0 0.0
        %3349 = vmatprep.mubr.f32.mxu0 0.0
        %3350 = vmatmul.mubr.f32.gmra.mxu0 %v3131
        %v3351 = vpop.f32.mrf.mxu0
        %v3352 = vadd.f32 0.0, %v3351
        %v3353 = vpop.f32.mrf.mxu0
        %3354 = vdwg.mxu0
        %3355 = vmatprep.subr.mxu0 0.0
        %3356 = vmatpush1.xpose.msra.mxu0 0.0
        %3357 = vmatprep.subr.mxu0 0.0
        %3358 = vmatpush1.xpose.msra.mxu0 0.0
        %3359 = vmatprep.subr.mxu0 0.0
        %3360 = vmatpush1.xpose.msra.mxu0 0.0
        %3361 = vmatprep.subr.mxu0 0.0
        %3362 = vmatpush1.xpose.msra.mxu0 0.0
        %3363 = vmatprep.subr.mxu0 0.0
        %3364 = vmatpush1.xpose.msra.mxu0 0.0
        %3365 = vmatprep.subr.mxu0 0.0
        %3366 = vmatpush1.xpose.msra.mxu0 0.0
        %3367 = vmatprep.subr.mxu0 0.0
        %3368 = vmatpush1.xpose.msra.mxu0 0.0
        %3369 = vmatprep.subr.mxu0 0.0
        %3370 = vmatpush1.xpose.msra.mxu0 0.0
        %3371 = vmatprep.subr.mxu0 0.0
        %3372 = vmatpush1.xpose.msra.mxu0 0.0
        %3373 = vmatprep.subr.mxu0 0.0
        %3374 = vmatpush1.xpose.msra.mxu0 0.0
        %3375 = vmatprep.subr.mxu0 0.0
        %3376 = vmatpush1.xpose.msra.mxu0 0.0
        %3377 = vmatprep.subr.mxu0 0.0
        %3378 = vmatpush1.xpose.msra.mxu0 0.0
        %3379 = vmatprep.subr.mxu0 0.0
        %3380 = vmatpush1.xpose.msra.mxu0 0.0
        %3381 = vmatprep.subr.mxu0 0.0
        %3382 = vmatpush1.xpose.msra.mxu0 0.0
        %3383 = vmatprep.subr.mxu0 0.0
        %3384 = vmatpush1.xpose.msra.mxu0 0.0
        %3385 = vmatprep.subr.mxu0 0.0
        %3386 = vmatpush1.xpose.msra.mxu0 %v3018
        %3387 = vmatprep.subr.mxu0 0.0
        %3388 = vmatpush2.xpose.msra.mxu0 0.0
        %3389 = vmatprep.subr.mxu0 0.0
        %3390 = vmatpush2.xpose.msra.mxu0 0.0
        %3391 = vmatprep.subr.mxu0 0.0
        %3392 = vmatpush2.xpose.msra.mxu0 0.0
        %3393 = vmatprep.subr.mxu0 0.0
        %3394 = vmatpush2.xpose.msra.mxu0 0.0
        %3395 = vmatprep.subr.mxu0 0.0
        %3396 = vmatpush2.xpose.msra.mxu0 0.0
        %3397 = vmatprep.subr.mxu0 0.0
        %3398 = vmatpush2.xpose.msra.mxu0 0.0
        %3399 = vmatprep.subr.mxu0 0.0
        %3400 = vmatpush2.xpose.msra.mxu0 0.0
        %3401 = vmatprep.subr.mxu0 0.0
        %3402 = vmatpush2.xpose.msra.mxu0 0.0
        %3403 = vmatprep.subr.mxu0 0.0
        %3404 = vmatpush2.xpose.msra.mxu0 0.0
        %3405 = vmatprep.subr.mxu0 0.0
        %3406 = vmatpush2.xpose.msra.mxu0 0.0
        %3407 = vmatprep.subr.mxu0 0.0
        %3408 = vmatpush2.xpose.msra.mxu0 0.0
        %3409 = vmatprep.subr.mxu0 0.0
        %3410 = vmatpush2.xpose.msra.mxu0 0.0
        %3411 = vmatprep.subr.mxu0 0.0
        %3412 = vmatpush2.xpose.msra.mxu0 0.0
        %3413 = vmatprep.subr.mxu0 0.0
        %3414 = vmatpush2.xpose.msra.mxu0 0.0
        %3415 = vmatprep.subr.mxu0 0.0
        %3416 = vmatpush2.xpose.msra.mxu0 0.0
        %3417 = vmatprep.subr.mxu0 0.0
        %3418 = vmatpush2.xpose.msra.mxu0 0.0
        %3419 = vmatprep.mubr.f32.mxu0 0.0
        %3420 = vmatmul.mubr.f32.gmra.mxu0 %v3132
        %v3421 = vpop.f32.mrf.mxu0
        %v3422 = vadd.f32 0.0, %v3421
        %v3423 = vpop.f32.mrf.mxu0
        %3424 = vdwg.mxu0
        %3425 = vmatprep.subr.mxu0 0.0
        %3426 = vmatpush1.xpose.msra.mxu0 0.0
        %3427 = vmatprep.subr.mxu0 0.0
        %3428 = vmatpush1.xpose.msra.mxu0 0.0
        %3429 = vmatprep.subr.mxu0 0.0
        %3430 = vmatpush1.xpose.msra.mxu0 0.0
        %3431 = vmatprep.subr.mxu0 0.0
        %3432 = vmatpush1.xpose.msra.mxu0 0.0
        %3433 = vmatprep.subr.mxu0 0.0
        %3434 = vmatpush1.xpose.msra.mxu0 0.0
        %3435 = vmatprep.subr.mxu0 0.0
        %3436 = vmatpush1.xpose.msra.mxu0 0.0
        %3437 = vmatprep.subr.mxu0 0.0
        %3438 = vmatpush1.xpose.msra.mxu0 0.0
        %3439 = vmatprep.subr.mxu0 0.0
        %3440 = vmatpush1.xpose.msra.mxu0 0.0
        %3441 = vmatprep.subr.mxu0 0.0
        %3442 = vmatpush1.xpose.msra.mxu0 0.0
        %3443 = vmatprep.subr.mxu0 0.0
        %3444 = vmatpush1.xpose.msra.mxu0 0.0
        %3445 = vmatprep.subr.mxu0 0.0
        %3446 = vmatpush1.xpose.msra.mxu0 0.0
        %3447 = vmatprep.subr.mxu0 0.0
        %3448 = vmatpush1.xpose.msra.mxu0 0.0
        %3449 = vmatprep.subr.mxu0 0.0
        %3450 = vmatpush1.xpose.msra.mxu0 0.0
        %3451 = vmatprep.subr.mxu0 0.0
        %3452 = vmatpush1.xpose.msra.mxu0 0.0
        %3453 = vmatprep.subr.mxu0 0.0
        %3454 = vmatpush1.xpose.msra.mxu0 0.0
        %3455 = vmatprep.subr.mxu0 0.0
        %3456 = vmatpush1.xpose.msra.mxu0 %v3018
        %3457 = vmatprep.subr.mxu0 0.0
        %3458 = vmatpush2.xpose.msra.mxu0 0.0
        %3459 = vmatprep.subr.mxu0 0.0
        %3460 = vmatpush2.xpose.msra.mxu0 0.0
        %3461 = vmatprep.subr.mxu0 0.0
        %3462 = vmatpush2.xpose.msra.mxu0 0.0
        %3463 = vmatprep.subr.mxu0 0.0
        %3464 = vmatpush2.xpose.msra.mxu0 0.0
        %3465 = vmatprep.subr.mxu0 0.0
        %3466 = vmatpush2.xpose.msra.mxu0 0.0
        %3467 = vmatprep.subr.mxu0 0.0
        %3468 = vmatpush2.xpose.msra.mxu0 0.0
        %3469 = vmatprep.subr.mxu0 0.0
        %3470 = vmatpush2.xpose.msra.mxu0 0.0
        %3471 = vmatprep.subr.mxu0 0.0
        %3472 = vmatpush2.xpose.msra.mxu0 0.0
        %3473 = vmatprep.subr.mxu0 0.0
        %3474 = vmatpush2.xpose.msra.mxu0 0.0
        %3475 = vmatprep.subr.mxu0 0.0
        %3476 = vmatpush2.xpose.msra.mxu0 0.0
        %3477 = vmatprep.subr.mxu0 0.0
        %3478 = vmatpush2.xpose.msra.mxu0 0.0
        %3479 = vmatprep.subr.mxu0 0.0
        %3480 = vmatpush2.xpose.msra.mxu0 0.0
        %3481 = vmatprep.subr.mxu0 0.0
        %3482 = vmatpush2.xpose.msra.mxu0 0.0
        %3483 = vmatprep.subr.mxu0 0.0
        %3484 = vmatpush2.xpose.msra.mxu0 0.0
        %3485 = vmatprep.subr.mxu0 0.0
        %3486 = vmatpush2.xpose.msra.mxu0 0.0
        %3487 = vmatprep.subr.mxu0 0.0
        %3488 = vmatpush2.xpose.msra.mxu0 0.0
        %3489 = vmatprep.mubr.f32.mxu0 0.0
        %3490 = vmatmul.mubr.f32.gmra.mxu0 %v3133
        %v3491 = vpop.f32.mrf.mxu0
        %v3492 = vadd.f32 0.0, %v3491
        %v3493 = vpop.f32.mrf.mxu0
        %3494 = vdwg.mxu0
        %3495 = vmatprep.subr.mxu0 0.0
        %3496 = vmatpush1.xpose.msra.mxu0 0.0
        %3497 = vmatprep.subr.mxu0 0.0
        %3498 = vmatpush1.xpose.msra.mxu0 0.0
        %3499 = vmatprep.subr.mxu0 0.0
        %3500 = vmatpush1.xpose.msra.mxu0 0.0
        %3501 = vmatprep.subr.mxu0 0.0
        %3502 = vmatpush1.xpose.msra.mxu0 0.0
        %3503 = vmatprep.subr.mxu0 0.0
        %3504 = vmatpush1.xpose.msra.mxu0 0.0
        %3505 = vmatprep.subr.mxu0 0.0
        %3506 = vmatpush1.xpose.msra.mxu0 0.0
        %3507 = vmatprep.subr.mxu0 0.0
        %3508 = vmatpush1.xpose.msra.mxu0 0.0
        %3509 = vmatprep.subr.mxu0 0.0
        %3510 = vmatpush1.xpose.msra.mxu0 0.0
        %3511 = vmatprep.subr.mxu0 0.0
        %3512 = vmatpush1.xpose.msra.mxu0 0.0
        %3513 = vmatprep.subr.mxu0 0.0
        %3514 = vmatpush1.xpose.msra.mxu0 0.0
        %3515 = vmatprep.subr.mxu0 0.0
        %3516 = vmatpush1.xpose.msra.mxu0 0.0
        %3517 = vmatprep.subr.mxu0 0.0
        %3518 = vmatpush1.xpose.msra.mxu0 0.0
        %3519 = vmatprep.subr.mxu0 0.0
        %3520 = vmatpush1.xpose.msra.mxu0 0.0
        %3521 = vmatprep.subr.mxu0 0.0
        %3522 = vmatpush1.xpose.msra.mxu0 0.0
        %3523 = vmatprep.subr.mxu0 0.0
        %3524 = vmatpush1.xpose.msra.mxu0 0.0
        %3525 = vmatprep.subr.mxu0 0.0
        %3526 = vmatpush1.xpose.msra.mxu0 %v3018
        %3527 = vmatprep.subr.mxu0 0.0
        %3528 = vmatpush2.xpose.msra.mxu0 0.0
        %3529 = vmatprep.subr.mxu0 0.0
        %3530 = vmatpush2.xpose.msra.mxu0 0.0
        %3531 = vmatprep.subr.mxu0 0.0
        %3532 = vmatpush2.xpose.msra.mxu0 0.0
        %3533 = vmatprep.subr.mxu0 0.0
        %3534 = vmatpush2.xpose.msra.mxu0 0.0
        %3535 = vmatprep.subr.mxu0 0.0
        %3536 = vmatpush2.xpose.msra.mxu0 0.0
        %3537 = vmatprep.subr.mxu0 0.0
        %3538 = vmatpush2.xpose.msra.mxu0 0.0
        %3539 = vmatprep.subr.mxu0 0.0
        %3540 = vmatpush2.xpose.msra.mxu0 0.0
        %3541 = vmatprep.subr.mxu0 0.0
        %3542 = vmatpush2.xpose.msra.mxu0 0.0
        %3543 = vmatprep.subr.mxu0 0.0
        %3544 = vmatpush2.xpose.msra.mxu0 0.0
        %3545 = vmatprep.subr.mxu0 0.0
        %3546 = vmatpush2.xpose.msra.mxu0 0.0
        %3547 = vmatprep.subr.mxu0 0.0
        %3548 = vmatpush2.xpose.msra.mxu0 0.0
        %3549 = vmatprep.subr.mxu0 0.0
        %3550 = vmatpush2.xpose.msra.mxu0 0.0
        %3551 = vmatprep.subr.mxu0 0.0
        %3552 = vmatpush2.xpose.msra.mxu0 0.0
        %3553 = vmatprep.subr.mxu0 0.0
        %3554 = vmatpush2.xpose.msra.mxu0 0.0
        %3555 = vmatprep.subr.mxu0 0.0
        %3556 = vmatpush2.xpose.msra.mxu0 0.0
        %3557 = vmatprep.subr.mxu0 0.0
        %3558 = vmatpush2.xpose.msra.mxu0 0.0
        %3559 = vmatprep.mubr.f32.mxu0 0.0
        %3560 = vmatmul.mubr.f32.gmra.mxu0 %v3134
        %v3561 = vpop.f32.mrf.mxu0
        %v3562 = vadd.f32 0.0, %v3561
        %v3563 = vpop.f32.mrf.mxu0
        %3564 = vdwg.mxu0
        %3565 = vmatprep.subr.mxu0 0.0
        %3566 = vmatpush1.xpose.msra.mxu0 0.0
        %3567 = vmatprep.subr.mxu0 0.0
        %3568 = vmatpush1.xpose.msra.mxu0 0.0
        %3569 = vmatprep.subr.mxu0 0.0
        %3570 = vmatpush1.xpose.msra.mxu0 0.0
        %3571 = vmatprep.subr.mxu0 0.0
        %3572 = vmatpush1.xpose.msra.mxu0 0.0
        %3573 = vmatprep.subr.mxu0 0.0
        %3574 = vmatpush1.xpose.msra.mxu0 0.0
        %3575 = vmatprep.subr.mxu0 0.0
        %3576 = vmatpush1.xpose.msra.mxu0 0.0
        %3577 = vmatprep.subr.mxu0 0.0
        %3578 = vmatpush1.xpose.msra.mxu0 0.0
        %3579 = vmatprep.subr.mxu0 0.0
        %3580 = vmatpush1.xpose.msra.mxu0 0.0
        %3581 = vmatprep.subr.mxu0 0.0
        %3582 = vmatpush1.xpose.msra.mxu0 0.0
        %3583 = vmatprep.subr.mxu0 0.0
        %3584 = vmatpush1.xpose.msra.mxu0 0.0
        %3585 = vmatprep.subr.mxu0 0.0
        %3586 = vmatpush1.xpose.msra.mxu0 0.0
        %3587 = vmatprep.subr.mxu0 0.0
        %3588 = vmatpush1.xpose.msra.mxu0 0.0
        %3589 = vmatprep.subr.mxu0 0.0
        %3590 = vmatpush1.xpose.msra.mxu0 0.0
        %3591 = vmatprep.subr.mxu0 0.0
        %3592 = vmatpush1.xpose.msra.mxu0 0.0
        %3593 = vmatprep.subr.mxu0 0.0
        %3594 = vmatpush1.xpose.msra.mxu0 0.0
        %3595 = vmatprep.subr.mxu0 0.0
        %3596 = vmatpush1.xpose.msra.mxu0 %v3018
        %3597 = vmatprep.subr.mxu0 0.0
        %3598 = vmatpush2.xpose.msra.mxu0 0.0
        %3599 = vmatprep.subr.mxu0 0.0
        %3600 = vmatpush2.xpose.msra.mxu0 0.0
        %3601 = vmatprep.subr.mxu0 0.0
        %3602 = vmatpush2.xpose.msra.mxu0 0.0
        %3603 = vmatprep.subr.mxu0 0.0
        %3604 = vmatpush2.xpose.msra.mxu0 0.0
        %3605 = vmatprep.subr.mxu0 0.0
        %3606 = vmatpush2.xpose.msra.mxu0 0.0
        %3607 = vmatprep.subr.mxu0 0.0
        %3608 = vmatpush2.xpose.msra.mxu0 0.0
        %3609 = vmatprep.subr.mxu0 0.0
        %3610 = vmatpush2.xpose.msra.mxu0 0.0
        %3611 = vmatprep.subr.mxu0 0.0
        %3612 = vmatpush2.xpose.msra.mxu0 0.0
        %3613 = vmatprep.subr.mxu0 0.0
        %3614 = vmatpush2.xpose.msra.mxu0 0.0
        %3615 = vmatprep.subr.mxu0 0.0
        %3616 = vmatpush2.xpose.msra.mxu0 0.0
        %3617 = vmatprep.subr.mxu0 0.0
        %3618 = vmatpush2.xpose.msra.mxu0 0.0
        %3619 = vmatprep.subr.mxu0 0.0
        %3620 = vmatpush2.xpose.msra.mxu0 0.0
        %3621 = vmatprep.subr.mxu0 0.0
        %3622 = vmatpush2.xpose.msra.mxu0 0.0
        %3623 = vmatprep.subr.mxu0 0.0
        %3624 = vmatpush2.xpose.msra.mxu0 0.0
        %3625 = vmatprep.subr.mxu0 0.0
        %3626 = vmatpush2.xpose.msra.mxu0 0.0
        %3627 = vmatprep.subr.mxu0 0.0
        %3628 = vmatpush2.xpose.msra.mxu0 0.0
        %3629 = vmatprep.mubr.f32.mxu0 0.0
        %3630 = vmatmul.mubr.f32.gmra.mxu0 %v3135
        %v3631 = vpop.f32.mrf.mxu0
        %v3632 = vadd.f32 0.0, %v3631
        %v3633 = vpop.f32.mrf.mxu0
        %3634 = vdwg.mxu0
        %3635 = vmatprep.subr.mxu0 0.0
        %3636 = vmatpush1.xpose.msra.mxu0 0.0
        %3637 = vmatprep.subr.mxu0 0.0
        %3638 = vmatpush1.xpose.msra.mxu0 0.0
        %3639 = vmatprep.subr.mxu0 0.0
        %3640 = vmatpush1.xpose.msra.mxu0 0.0
        %3641 = vmatprep.subr.mxu0 0.0
        %3642 = vmatpush1.xpose.msra.mxu0 0.0
        %3643 = vmatprep.subr.mxu0 0.0
        %3644 = vmatpush1.xpose.msra.mxu0 0.0
        %3645 = vmatprep.subr.mxu0 0.0
        %3646 = vmatpush1.xpose.msra.mxu0 0.0
        %3647 = vmatprep.subr.mxu0 0.0
        %3648 = vmatpush1.xpose.msra.mxu0 0.0
        %3649 = vmatprep.subr.mxu0 0.0
        %3650 = vmatpush1.xpose.msra.mxu0 0.0
        %3651 = vmatprep.subr.mxu0 0.0
        %3652 = vmatpush1.xpose.msra.mxu0 0.0
        %3653 = vmatprep.subr.mxu0 0.0
        %3654 = vmatpush1.xpose.msra.mxu0 0.0
        %3655 = vmatprep.subr.mxu0 0.0
        %3656 = vmatpush1.xpose.msra.mxu0 0.0
        %3657 = vmatprep.subr.mxu0 0.0
        %3658 = vmatpush1.xpose.msra.mxu0 0.0
        %3659 = vmatprep.subr.mxu0 0.0
        %3660 = vmatpush1.xpose.msra.mxu0 0.0
        %3661 = vmatprep.subr.mxu0 0.0
        %3662 = vmatpush1.xpose.msra.mxu0 0.0
        %3663 = vmatprep.subr.mxu0 0.0
        %3664 = vmatpush1.xpose.msra.mxu0 0.0
        %3665 = vmatprep.subr.mxu0 0.0
        %3666 = vmatpush1.xpose.msra.mxu0 %v3018
        %3667 = vmatprep.subr.mxu0 0.0
        %3668 = vmatpush2.xpose.msra.mxu0 0.0
        %3669 = vmatprep.subr.mxu0 0.0
        %3670 = vmatpush2.xpose.msra.mxu0 0.0
        %3671 = vmatprep.subr.mxu0 0.0
        %3672 = vmatpush2.xpose.msra.mxu0 0.0
        %3673 = vmatprep.subr.mxu0 0.0
        %3674 = vmatpush2.xpose.msra.mxu0 0.0
        %3675 = vmatprep.subr.mxu0 0.0
        %3676 = vmatpush2.xpose.msra.mxu0 0.0
        %3677 = vmatprep.subr.mxu0 0.0
        %3678 = vmatpush2.xpose.msra.mxu0 0.0
        %3679 = vmatprep.subr.mxu0 0.0
        %3680 = vmatpush2.xpose.msra.mxu0 0.0
        %3681 = vmatprep.subr.mxu0 0.0
        %3682 = vmatpush2.xpose.msra.mxu0 0.0
        %3683 = vmatprep.subr.mxu0 0.0
        %3684 = vmatpush2.xpose.msra.mxu0 0.0
        %3685 = vmatprep.subr.mxu0 0.0
        %3686 = vmatpush2.xpose.msra.mxu0 0.0
        %3687 = vmatprep.subr.mxu0 0.0
        %3688 = vmatpush2.xpose.msra.mxu0 0.0
        %3689 = vmatprep.subr.mxu0 0.0
        %3690 = vmatpush2.xpose.msra.mxu0 0.0
        %3691 = vmatprep.subr.mxu0 0.0
        %3692 = vmatpush2.xpose.msra.mxu0 0.0
        %3693 = vmatprep.subr.mxu0 0.0
        %3694 = vmatpush2.xpose.msra.mxu0 0.0
        %3695 = vmatprep.subr.mxu0 0.0
        %3696 = vmatpush2.xpose.msra.mxu0 0.0
        %3697 = vmatprep.subr.mxu0 0.0
        %3698 = vmatpush2.xpose.msra.mxu0 0.0
        %3699 = vmatprep.mubr.f32.mxu0 0.0
        %3700 = vmatmul.mubr.f32.gmra.mxu0 %v3136
        %v3701 = vpop.f32.mrf.mxu0
        %v3702 = vadd.f32 0.0, %v3701
        %v3703 = vpop.f32.mrf.mxu0
        %3704 = vdwg.mxu0
        %v3705 = vsel %vm2039, %v3212, -inf
        %3706 = vmax.xlane.f32.xlu0 %v3705
        %v3707 = vpop.xlane.xlu0 %3706
        %v3708 = vsel %vm2039, %v3282, -inf
        %3709 = vmax.xlane.f32.xlu0 %v3708
        %v3710 = vpop.xlane.xlu0 %3709
        %v3711 = vsel %vm2039, %v3352, -inf
        %3712 = vmax.xlane.f32.xlu0 %v3711
        %v3713 = vpop.xlane.xlu0 %3712
        %v3714 = vsel %vm2039, %v3422, -inf
        %3715 = vmax.xlane.f32.xlu0 %v3714
        %v3716 = vpop.xlane.xlu0 %3715
        %v3717 = vsel %vm2039, %v3492, -inf
        %3718 = vmax.xlane.f32.xlu0 %v3717
        %v3719 = vpop.xlane.xlu0 %3718
        %v3720 = vsel %vm2039, %v3562, -inf
        %3721 = vmax.xlane.f32.xlu0 %v3720
        %v3722 = vpop.xlane.xlu0 %3721
        %v3723 = vsel %vm2039, %v3632, -inf
        %3724 = vmax.xlane.f32.xlu0 %v3723
        %v3725 = vpop.xlane.xlu0 %3724
        %v3726 = vsel %vm2039, %v3702, -inf
        %3727 = vmax.xlane.f32.xlu0 %v3726
        %v3728 = vpop.xlane.xlu0 %3727
        %v3729 = vsub.f32 %v3212, %v3707
        %v3730 = vsub.f32 %v3282, %v3710
        %v3731 = vsub.f32 %v3352, %v3713
        %v3732 = vsub.f32 %v3422, %v3716
        %v3733 = vsub.f32 %v3492, %v3719
        %v3734 = vsub.f32 %v3562, %v3722
        %v3735 = vsub.f32 %v3632, %v3725
        %v3736 = vsub.f32 %v3702, %v3728
        %v3737 = vmul.f32 %v3729, 1.442695
        %v3738 = vpow.pop %v3737
        %v3739 = vmul.f32 %v3730, 1.442695
        %v3740 = vpow.pop %v3739
        %v3741 = vmul.f32 %v3731, 1.442695
        %v3742 = vpow.pop %v3741
        %v3743 = vmul.f32 %v3732, 1.442695
        %v3744 = vpow.pop %v3743
        %v3745 = vmul.f32 %v3733, 1.442695
        %v3746 = vpow.pop %v3745
        %v3747 = vmul.f32 %v3734, 1.442695
        %v3748 = vpow.pop %v3747
        %v3749 = vmul.f32 %v3735, 1.442695
        %v3750 = vpow.pop %v3749
        %v3751 = vmul.f32 %v3736, 1.442695
        %v3752 = vpow.pop %v3751
        %v3753 = vsel %vm2039, %v3738, 0.0
        %3754 = vadd.xlane.f32.xlu0 %v3753
        %v3755 = vpop.xlane.xlu0 %3754
        %v3756 = vsel %vm2039, %v3740, 0.0
        %3757 = vadd.xlane.f32.xlu0 %v3756
        %v3758 = vpop.xlane.xlu0 %3757
        %v3759 = vsel %vm2039, %v3742, 0.0
        %3760 = vadd.xlane.f32.xlu0 %v3759
        %v3761 = vpop.xlane.xlu0 %3760
        %v3762 = vsel %vm2039, %v3744, 0.0
        %3763 = vadd.xlane.f32.xlu0 %v3762
        %v3764 = vpop.xlane.xlu0 %3763
        %v3765 = vsel %vm2039, %v3746, 0.0
        %3766 = vadd.xlane.f32.xlu0 %v3765
        %v3767 = vpop.xlane.xlu0 %3766
        %v3768 = vsel %vm2039, %v3748, 0.0
        %3769 = vadd.xlane.f32.xlu0 %v3768
        %v3770 = vpop.xlane.xlu0 %3769
        %v3771 = vsel %vm2039, %v3750, 0.0
        %3772 = vadd.xlane.f32.xlu0 %v3771
        %v3773 = vpop.xlane.xlu0 %3772
        %v3774 = vsel %vm2039, %v3752, 0.0
        %3775 = vadd.xlane.f32.xlu0 %v3774
        %v3776 = vpop.xlane.xlu0 %3775
        %v3777 = vrcp.pop %v3755
        %v3778 = vrcp.pop %v3758
        %v3779 = vrcp.pop %v3761
        %v3780 = vrcp.pop %v3764
        %v3781 = vrcp.pop %v3767
        %v3782 = vrcp.pop %v3770
        %v3783 = vrcp.pop %v3773
        %v3784 = vrcp.pop %v3776
        %v3785 = vmul.f32 %v3738, %v3777
        %v3786 = vmul.f32 %v3740, %v3778
        %v3787 = vmul.f32 %v3742, %v3779
        %v3788 = vmul.f32 %v3744, %v3780
        %v3789 = vmul.f32 %v3746, %v3781
        %v3790 = vmul.f32 %v3748, %v3782
        %v3791 = vmul.f32 %v3750, %v3783
        %v3792 = vmul.f32 %v3752, %v3784
        %v3794 = vsel %vm2039, %v3785, 0
        %3796 = vmatprep.subr.mxu0 0.0
        %3797 = vmatpush1.msra.mxu0 0.0
        %3798 = vmatprep.subr.mxu0 0.0
        %3799 = vmatpush1.msra.mxu0 0.0
        %3800 = vmatprep.subr.mxu0 0.0
        %3801 = vmatpush1.msra.mxu0 0.0
        %3802 = vmatprep.subr.mxu0 0.0
        %3803 = vmatpush1.msra.mxu0 0.0
        %3804 = vmatprep.subr.mxu0 0.0
        %3805 = vmatpush1.msra.mxu0 0.0
        %3806 = vmatprep.subr.mxu0 0.0
        %3807 = vmatpush1.msra.mxu0 0.0
        %3808 = vmatprep.subr.mxu0 0.0
        %3809 = vmatpush1.msra.mxu0 0.0
        %3810 = vmatprep.subr.mxu0 0.0
        %3811 = vmatpush1.msra.mxu0 0.0
        %3812 = vmatprep.subr.mxu0 0.0
        %3813 = vmatpush1.msra.mxu0 0.0
        %3814 = vmatprep.subr.mxu0 0.0
        %3815 = vmatpush1.msra.mxu0 0.0
        %3816 = vmatprep.subr.mxu0 0.0
        %3817 = vmatpush1.msra.mxu0 0.0
        %3818 = vmatprep.subr.mxu0 0.0
        %3819 = vmatpush1.msra.mxu0 0.0
        %3820 = vmatprep.subr.mxu0 0.0
        %3821 = vmatpush1.msra.mxu0 0.0
        %3822 = vmatprep.subr.mxu0 0.0
        %3823 = vmatpush1.msra.mxu0 0.0
        %3824 = vmatprep.subr.mxu0 0.0
        %3825 = vmatpush1.msra.mxu0 0.0
        %3826 = vmatprep.subr.mxu0 0.0
        %3827 = vmatpush1.msra.mxu0 %v3137
        %3828 = vmatprep.subr.mxu0 0.0
        %3829 = vmatpush2.msra.mxu0 0.0
        %3830 = vmatprep.subr.mxu0 0.0
        %3831 = vmatpush2.msra.mxu0 0.0
        %3832 = vmatprep.subr.mxu0 0.0
        %3833 = vmatpush2.msra.mxu0 0.0
        %3834 = vmatprep.subr.mxu0 0.0
        %3835 = vmatpush2.msra.mxu0 0.0
        %3836 = vmatprep.subr.mxu0 0.0
        %3837 = vmatpush2.msra.mxu0 0.0
        %3838 = vmatprep.subr.mxu0 0.0
        %3839 = vmatpush2.msra.mxu0 0.0
        %3840 = vmatprep.subr.mxu0 0.0
        %3841 = vmatpush2.msra.mxu0 0.0
        %3842 = vmatprep.subr.mxu0 0.0
        %3843 = vmatpush2.msra.mxu0 0.0
        %3844 = vmatprep.subr.mxu0 0.0
        %3845 = vmatpush2.msra.mxu0 0.0
        %3846 = vmatprep.subr.mxu0 0.0
        %3847 = vmatpush2.msra.mxu0 0.0
        %3848 = vmatprep.subr.mxu0 0.0
        %3849 = vmatpush2.msra.mxu0 0.0
        %3850 = vmatprep.subr.mxu0 0.0
        %3851 = vmatpush2.msra.mxu0 0.0
        %3852 = vmatprep.subr.mxu0 0.0
        %3853 = vmatpush2.msra.mxu0 0.0
        %3854 = vmatprep.subr.mxu0 0.0
        %3855 = vmatpush2.msra.mxu0 0.0
        %3856 = vmatprep.subr.mxu0 0.0
        %3857 = vmatpush2.msra.mxu0 0.0
        %3858 = vmatprep.subr.mxu0 0.0
        %3859 = vmatpush2.msra.mxu0 0.0
        %3860 = vmatprep.mubr.f32.mxu0 0.0
        %3861 = vmatmul.mubr.f32.gmra.mxu0 %v3794
        %v3862 = vpop.f32.mrf.mxu0
        %v3863 = vadd.f32 0.0, %v3862
        %v3864 = vpop.f32.mrf.mxu0
        %3865 = vdwg.mxu0
        %v3867 = vsel %vm2039, %v3786, 0
        %3869 = vmatprep.subr.mxu0 0.0
        %3870 = vmatpush1.msra.mxu0 0.0
        %3871 = vmatprep.subr.mxu0 0.0
        %3872 = vmatpush1.msra.mxu0 0.0
        %3873 = vmatprep.subr.mxu0 0.0
        %3874 = vmatpush1.msra.mxu0 0.0
        %3875 = vmatprep.subr.mxu0 0.0
        %3876 = vmatpush1.msra.mxu0 0.0
        %3877 = vmatprep.subr.mxu0 0.0
        %3878 = vmatpush1.msra.mxu0 0.0
        %3879 = vmatprep.subr.mxu0 0.0
        %3880 = vmatpush1.msra.mxu0 0.0
        %3881 = vmatprep.subr.mxu0 0.0
        %3882 = vmatpush1.msra.mxu0 0.0
        %3883 = vmatprep.subr.mxu0 0.0
        %3884 = vmatpush1.msra.mxu0 0.0
        %3885 = vmatprep.subr.mxu0 0.0
        %3886 = vmatpush1.msra.mxu0 0.0
        %3887 = vmatprep.subr.mxu0 0.0
        %3888 = vmatpush1.msra.mxu0 0.0
        %3889 = vmatprep.subr.mxu0 0.0
        %3890 = vmatpush1.msra.mxu0 0.0
        %3891 = vmatprep.subr.mxu0 0.0
        %3892 = vmatpush1.msra.mxu0 0.0
        %3893 = vmatprep.subr.mxu0 0.0
        %3894 = vmatpush1.msra.mxu0 0.0
        %3895 = vmatprep.subr.mxu0 0.0
        %3896 = vmatpush1.msra.mxu0 0.0
        %3897 = vmatprep.subr.mxu0 0.0
        %3898 = vmatpush1.msra.mxu0 0.0
        %3899 = vmatprep.subr.mxu0 0.0
        %3900 = vmatpush1.msra.mxu0 %v3138
        %3901 = vmatprep.subr.mxu0 0.0
        %3902 = vmatpush2.msra.mxu0 0.0
        %3903 = vmatprep.subr.mxu0 0.0
        %3904 = vmatpush2.msra.mxu0 0.0
        %3905 = vmatprep.subr.mxu0 0.0
        %3906 = vmatpush2.msra.mxu0 0.0
        %3907 = vmatprep.subr.mxu0 0.0
        %3908 = vmatpush2.msra.mxu0 0.0
        %3909 = vmatprep.subr.mxu0 0.0
        %3910 = vmatpush2.msra.mxu0 0.0
        %3911 = vmatprep.subr.mxu0 0.0
        %3912 = vmatpush2.msra.mxu0 0.0
        %3913 = vmatprep.subr.mxu0 0.0
        %3914 = vmatpush2.msra.mxu0 0.0
        %3915 = vmatprep.subr.mxu0 0.0
        %3916 = vmatpush2.msra.mxu0 0.0
        %3917 = vmatprep.subr.mxu0 0.0
        %3918 = vmatpush2.msra.mxu0 0.0
        %3919 = vmatprep.subr.mxu0 0.0
        %3920 = vmatpush2.msra.mxu0 0.0
        %3921 = vmatprep.subr.mxu0 0.0
        %3922 = vmatpush2.msra.mxu0 0.0
        %3923 = vmatprep.subr.mxu0 0.0
        %3924 = vmatpush2.msra.mxu0 0.0
        %3925 = vmatprep.subr.mxu0 0.0
        %3926 = vmatpush2.msra.mxu0 0.0
        %3927 = vmatprep.subr.mxu0 0.0
        %3928 = vmatpush2.msra.mxu0 0.0
        %3929 = vmatprep.subr.mxu0 0.0
        %3930 = vmatpush2.msra.mxu0 0.0
        %3931 = vmatprep.subr.mxu0 0.0
        %3932 = vmatpush2.msra.mxu0 0.0
        %3933 = vmatprep.mubr.f32.mxu0 0.0
        %3934 = vmatmul.mubr.f32.gmra.mxu0 %v3867
        %v3935 = vpop.f32.mrf.mxu0
        %v3936 = vadd.f32 0.0, %v3935
        %v3937 = vpop.f32.mrf.mxu0
        %3938 = vdwg.mxu0
        %v3940 = vsel %vm2039, %v3787, 0
        %3942 = vmatprep.subr.mxu0 0.0
        %3943 = vmatpush1.msra.mxu0 0.0
        %3944 = vmatprep.subr.mxu0 0.0
        %3945 = vmatpush1.msra.mxu0 0.0
        %3946 = vmatprep.subr.mxu0 0.0
        %3947 = vmatpush1.msra.mxu0 0.0
        %3948 = vmatprep.subr.mxu0 0.0
        %3949 = vmatpush1.msra.mxu0 0.0
        %3950 = vmatprep.subr.mxu0 0.0
        %3951 = vmatpush1.msra.mxu0 0.0
        %3952 = vmatprep.subr.mxu0 0.0
        %3953 = vmatpush1.msra.mxu0 0.0
        %3954 = vmatprep.subr.mxu0 0.0
        %3955 = vmatpush1.msra.mxu0 0.0
        %3956 = vmatprep.subr.mxu0 0.0
        %3957 = vmatpush1.msra.mxu0 0.0
        %3958 = vmatprep.subr.mxu0 0.0
        %3959 = vmatpush1.msra.mxu0 0.0
        %3960 = vmatprep.subr.mxu0 0.0
        %3961 = vmatpush1.msra.mxu0 0.0
        %3962 = vmatprep.subr.mxu0 0.0
        %3963 = vmatpush1.msra.mxu0 0.0
        %3964 = vmatprep.subr.mxu0 0.0
        %3965 = vmatpush1.msra.mxu0 0.0
        %3966 = vmatprep.subr.mxu0 0.0
        %3967 = vmatpush1.msra.mxu0 0.0
        %3968 = vmatprep.subr.mxu0 0.0
        %3969 = vmatpush1.msra.mxu0 0.0
        %3970 = vmatprep.subr.mxu0 0.0
        %3971 = vmatpush1.msra.mxu0 0.0
        %3972 = vmatprep.subr.mxu0 0.0
        %3973 = vmatpush1.msra.mxu0 %v3139
        %3974 = vmatprep.subr.mxu0 0.0
        %3975 = vmatpush2.msra.mxu0 0.0
        %3976 = vmatprep.subr.mxu0 0.0
        %3977 = vmatpush2.msra.mxu0 0.0
        %3978 = vmatprep.subr.mxu0 0.0
        %3979 = vmatpush2.msra.mxu0 0.0
        %3980 = vmatprep.subr.mxu0 0.0
        %3981 = vmatpush2.msra.mxu0 0.0
        %3982 = vmatprep.subr.mxu0 0.0
        %3983 = vmatpush2.msra.mxu0 0.0
        %3984 = vmatprep.subr.mxu0 0.0
        %3985 = vmatpush2.msra.mxu0 0.0
        %3986 = vmatprep.subr.mxu0 0.0
        %3987 = vmatpush2.msra.mxu0 0.0
        %3988 = vmatprep.subr.mxu0 0.0
        %3989 = vmatpush2.msra.mxu0 0.0
        %3990 = vmatprep.subr.mxu0 0.0
        %3991 = vmatpush2.msra.mxu0 0.0
        %3992 = vmatprep.subr.mxu0 0.0
        %3993 = vmatpush2.msra.mxu0 0.0
        %3994 = vmatprep.subr.mxu0 0.0
        %3995 = vmatpush2.msra.mxu0 0.0
        %3996 = vmatprep.subr.mxu0 0.0
        %3997 = vmatpush2.msra.mxu0 0.0
        %3998 = vmatprep.subr.mxu0 0.0
        %3999 = vmatpush2.msra.mxu0 0.0
        %4000 = vmatprep.subr.mxu0 0.0
        %4001 = vmatpush2.msra.mxu0 0.0
        %4002 = vmatprep.subr.mxu0 0.0
        %4003 = vmatpush2.msra.mxu0 0.0
        %4004 = vmatprep.subr.mxu0 0.0
        %4005 = vmatpush2.msra.mxu0 0.0
        %4006 = vmatprep.mubr.f32.mxu0 0.0
        %4007 = vmatmul.mubr.f32.gmra.mxu0 %v3940
        %v4008 = vpop.f32.mrf.mxu0
        %v4009 = vadd.f32 0.0, %v4008
        %v4010 = vpop.f32.mrf.mxu0
        %4011 = vdwg.mxu0
        %v4013 = vsel %vm2039, %v3788, 0
        %4015 = vmatprep.subr.mxu0 0.0
        %4016 = vmatpush1.msra.mxu0 0.0
        %4017 = vmatprep.subr.mxu0 0.0
        %4018 = vmatpush1.msra.mxu0 0.0
        %4019 = vmatprep.subr.mxu0 0.0
        %4020 = vmatpush1.msra.mxu0 0.0
        %4021 = vmatprep.subr.mxu0 0.0
        %4022 = vmatpush1.msra.mxu0 0.0
        %4023 = vmatprep.subr.mxu0 0.0
        %4024 = vmatpush1.msra.mxu0 0.0
        %4025 = vmatprep.subr.mxu0 0.0
        %4026 = vmatpush1.msra.mxu0 0.0
        %4027 = vmatprep.subr.mxu0 0.0
        %4028 = vmatpush1.msra.mxu0 0.0
        %4029 = vmatprep.subr.mxu0 0.0
        %4030 = vmatpush1.msra.mxu0 0.0
        %4031 = vmatprep.subr.mxu0 0.0
        %4032 = vmatpush1.msra.mxu0 0.0
        %4033 = vmatprep.subr.mxu0 0.0
        %4034 = vmatpush1.msra.mxu0 0.0
        %4035 = vmatprep.subr.mxu0 0.0
        %4036 = vmatpush1.msra.mxu0 0.0
        %4037 = vmatprep.subr.mxu0 0.0
        %4038 = vmatpush1.msra.mxu0 0.0
        %4039 = vmatprep.subr.mxu0 0.0
        %4040 = vmatpush1.msra.mxu0 0.0
        %4041 = vmatprep.subr.mxu0 0.0
        %4042 = vmatpush1.msra.mxu0 0.0
        %4043 = vmatprep.subr.mxu0 0.0
        %4044 = vmatpush1.msra.mxu0 0.0
        %4045 = vmatprep.subr.mxu0 0.0
        %4046 = vmatpush1.msra.mxu0 %v3140
        %4047 = vmatprep.subr.mxu0 0.0
        %4048 = vmatpush2.msra.mxu0 0.0
        %4049 = vmatprep.subr.mxu0 0.0
        %4050 = vmatpush2.msra.mxu0 0.0
        %4051 = vmatprep.subr.mxu0 0.0
        %4052 = vmatpush2.msra.mxu0 0.0
        %4053 = vmatprep.subr.mxu0 0.0
        %4054 = vmatpush2.msra.mxu0 0.0
        %4055 = vmatprep.subr.mxu0 0.0
        %4056 = vmatpush2.msra.mxu0 0.0
        %4057 = vmatprep.subr.mxu0 0.0
        %4058 = vmatpush2.msra.mxu0 0.0
        %4059 = vmatprep.subr.mxu0 0.0
        %4060 = vmatpush2.msra.mxu0 0.0
        %4061 = vmatprep.subr.mxu0 0.0
        %4062 = vmatpush2.msra.mxu0 0.0
        %4063 = vmatprep.subr.mxu0 0.0
        %4064 = vmatpush2.msra.mxu0 0.0
        %4065 = vmatprep.subr.mxu0 0.0
        %4066 = vmatpush2.msra.mxu0 0.0
        %4067 = vmatprep.subr.mxu0 0.0
        %4068 = vmatpush2.msra.mxu0 0.0
        %4069 = vmatprep.subr.mxu0 0.0
        %4070 = vmatpush2.msra.mxu0 0.0
        %4071 = vmatprep.subr.mxu0 0.0
        %4072 = vmatpush2.msra.mxu0 0.0
        %4073 = vmatprep.subr.mxu0 0.0
        %4074 = vmatpush2.msra.mxu0 0.0
        %4075 = vmatprep.subr.mxu0 0.0
        %4076 = vmatpush2.msra.mxu0 0.0
        %4077 = vmatprep.subr.mxu0 0.0
        %4078 = vmatpush2.msra.mxu0 0.0
        %4079 = vmatprep.mubr.f32.mxu0 0.0
        %4080 = vmatmul.mubr.f32.gmra.mxu0 %v4013
        %v4081 = vpop.f32.mrf.mxu0
        %v4082 = vadd.f32 0.0, %v4081
        %v4083 = vpop.f32.mrf.mxu0
        %4084 = vdwg.mxu0
        %v4086 = vsel %vm2039, %v3789, 0
        %4088 = vmatprep.subr.mxu0 0.0
        %4089 = vmatpush1.msra.mxu0 0.0
        %4090 = vmatprep.subr.mxu0 0.0
        %4091 = vmatpush1.msra.mxu0 0.0
        %4092 = vmatprep.subr.mxu0 0.0
        %4093 = vmatpush1.msra.mxu0 0.0
        %4094 = vmatprep.subr.mxu0 0.0
        %4095 = vmatpush1.msra.mxu0 0.0
        %4096 = vmatprep.subr.mxu0 0.0
        %4097 = vmatpush1.msra.mxu0 0.0
        %4098 = vmatprep.subr.mxu0 0.0
        %4099 = vmatpush1.msra.mxu0 0.0
        %4100 = vmatprep.subr.mxu0 0.0
        %4101 = vmatpush1.msra.mxu0 0.0
        %4102 = vmatprep.subr.mxu0 0.0
        %4103 = vmatpush1.msra.mxu0 0.0
        %4104 = vmatprep.subr.mxu0 0.0
        %4105 = vmatpush1.msra.mxu0 0.0
        %4106 = vmatprep.subr.mxu0 0.0
        %4107 = vmatpush1.msra.mxu0 0.0
        %4108 = vmatprep.subr.mxu0 0.0
        %4109 = vmatpush1.msra.mxu0 0.0
        %4110 = vmatprep.subr.mxu0 0.0
        %4111 = vmatpush1.msra.mxu0 0.0
        %4112 = vmatprep.subr.mxu0 0.0
        %4113 = vmatpush1.msra.mxu0 0.0
        %4114 = vmatprep.subr.mxu0 0.0
        %4115 = vmatpush1.msra.mxu0 0.0
        %4116 = vmatprep.subr.mxu0 0.0
        %4117 = vmatpush1.msra.mxu0 0.0
        %4118 = vmatprep.subr.mxu0 0.0
        %4119 = vmatpush1.msra.mxu0 %v3141
        %4120 = vmatprep.subr.mxu0 0.0
        %4121 = vmatpush2.msra.mxu0 0.0
        %4122 = vmatprep.subr.mxu0 0.0
        %4123 = vmatpush2.msra.mxu0 0.0
        %4124 = vmatprep.subr.mxu0 0.0
        %4125 = vmatpush2.msra.mxu0 0.0
        %4126 = vmatprep.subr.mxu0 0.0
        %4127 = vmatpush2.msra.mxu0 0.0
        %4128 = vmatprep.subr.mxu0 0.0
        %4129 = vmatpush2.msra.mxu0 0.0
        %4130 = vmatprep.subr.mxu0 0.0
        %4131 = vmatpush2.msra.mxu0 0.0
        %4132 = vmatprep.subr.mxu0 0.0
        %4133 = vmatpush2.msra.mxu0 0.0
        %4134 = vmatprep.subr.mxu0 0.0
        %4135 = vmatpush2.msra.mxu0 0.0
        %4136 = vmatprep.subr.mxu0 0.0
        %4137 = vmatpush2.msra.mxu0 0.0
        %4138 = vmatprep.subr.mxu0 0.0
        %4139 = vmatpush2.msra.mxu0 0.0
        %4140 = vmatprep.subr.mxu0 0.0
        %4141 = vmatpush2.msra.mxu0 0.0
        %4142 = vmatprep.subr.mxu0 0.0
        %4143 = vmatpush2.msra.mxu0 0.0
        %4144 = vmatprep.subr.mxu0 0.0
        %4145 = vmatpush2.msra.mxu0 0.0
        %4146 = vmatprep.subr.mxu0 0.0
        %4147 = vmatpush2.msra.mxu0 0.0
        %4148 = vmatprep.subr.mxu0 0.0
        %4149 = vmatpush2.msra.mxu0 0.0
        %4150 = vmatprep.subr.mxu0 0.0
        %4151 = vmatpush2.msra.mxu0 0.0
        %4152 = vmatprep.mubr.f32.mxu0 0.0
        %4153 = vmatmul.mubr.f32.gmra.mxu0 %v4086
        %v4154 = vpop.f32.mrf.mxu0
        %v4155 = vadd.f32 0.0, %v4154
        %v4156 = vpop.f32.mrf.mxu0
        %4157 = vdwg.mxu0
        %v4159 = vsel %vm2039, %v3790, 0
        %4161 = vmatprep.subr.mxu0 0.0
        %4162 = vmatpush1.msra.mxu0 0.0
        %4163 = vmatprep.subr.mxu0 0.0
        %4164 = vmatpush1.msra.mxu0 0.0
        %4165 = vmatprep.subr.mxu0 0.0
        %4166 = vmatpush1.msra.mxu0 0.0
        %4167 = vmatprep.subr.mxu0 0.0
        %4168 = vmatpush1.msra.mxu0 0.0
        %4169 = vmatprep.subr.mxu0 0.0
        %4170 = vmatpush1.msra.mxu0 0.0
        %4171 = vmatprep.subr.mxu0 0.0
        %4172 = vmatpush1.msra.mxu0 0.0
        %4173 = vmatprep.subr.mxu0 0.0
        %4174 = vmatpush1.msra.mxu0 0.0
        %4175 = vmatprep.subr.mxu0 0.0
        %4176 = vmatpush1.msra.mxu0 0.0
        %4177 = vmatprep.subr.mxu0 0.0
        %4178 = vmatpush1.msra.mxu0 0.0
        %4179 = vmatprep.subr.mxu0 0.0
        %4180 = vmatpush1.msra.mxu0 0.0
        %4181 = vmatprep.subr.mxu0 0.0
        %4182 = vmatpush1.msra.mxu0 0.0
        %4183 = vmatprep.subr.mxu0 0.0
        %4184 = vmatpush1.msra.mxu0 0.0
        %4185 = vmatprep.subr.mxu0 0.0
        %4186 = vmatpush1.msra.mxu0 0.0
        %4187 = vmatprep.subr.mxu0 0.0
        %4188 = vmatpush1.msra.mxu0 0.0
        %4189 = vmatprep.subr.mxu0 0.0
        %4190 = vmatpush1.msra.mxu0 0.0
        %4191 = vmatprep.subr.mxu0 0.0
        %4192 = vmatpush1.msra.mxu0 %v3142
        %4193 = vmatprep.subr.mxu0 0.0
        %4194 = vmatpush2.msra.mxu0 0.0
        %4195 = vmatprep.subr.mxu0 0.0
        %4196 = vmatpush2.msra.mxu0 0.0
        %4197 = vmatprep.subr.mxu0 0.0
        %4198 = vmatpush2.msra.mxu0 0.0
        %4199 = vmatprep.subr.mxu0 0.0
        %4200 = vmatpush2.msra.mxu0 0.0
        %4201 = vmatprep.subr.mxu0 0.0
        %4202 = vmatpush2.msra.mxu0 0.0
        %4203 = vmatprep.subr.mxu0 0.0
        %4204 = vmatpush2.msra.mxu0 0.0
        %4205 = vmatprep.subr.mxu0 0.0
        %4206 = vmatpush2.msra.mxu0 0.0
        %4207 = vmatprep.subr.mxu0 0.0
        %4208 = vmatpush2.msra.mxu0 0.0
        %4209 = vmatprep.subr.mxu0 0.0
        %4210 = vmatpush2.msra.mxu0 0.0
        %4211 = vmatprep.subr.mxu0 0.0
        %4212 = vmatpush2.msra.mxu0 0.0
        %4213 = vmatprep.subr.mxu0 0.0
        %4214 = vmatpush2.msra.mxu0 0.0
        %4215 = vmatprep.subr.mxu0 0.0
        %4216 = vmatpush2.msra.mxu0 0.0
        %4217 = vmatprep.subr.mxu0 0.0
        %4218 = vmatpush2.msra.mxu0 0.0
        %4219 = vmatprep.subr.mxu0 0.0
        %4220 = vmatpush2.msra.mxu0 0.0
        %4221 = vmatprep.subr.mxu0 0.0
        %4222 = vmatpush2.msra.mxu0 0.0
        %4223 = vmatprep.subr.mxu0 0.0
        %4224 = vmatpush2.msra.mxu0 0.0
        %4225 = vmatprep.mubr.f32.mxu0 0.0
        %4226 = vmatmul.mubr.f32.gmra.mxu0 %v4159
        %v4227 = vpop.f32.mrf.mxu0
        %v4228 = vadd.f32 0.0, %v4227
        %v4229 = vpop.f32.mrf.mxu0
        %4230 = vdwg.mxu0
        %v4232 = vsel %vm2039, %v3791, 0
        %4234 = vmatprep.subr.mxu0 0.0
        %4235 = vmatpush1.msra.mxu0 0.0
        %4236 = vmatprep.subr.mxu0 0.0
        %4237 = vmatpush1.msra.mxu0 0.0
        %4238 = vmatprep.subr.mxu0 0.0
        %4239 = vmatpush1.msra.mxu0 0.0
        %4240 = vmatprep.subr.mxu0 0.0
        %4241 = vmatpush1.msra.mxu0 0.0
        %4242 = vmatprep.subr.mxu0 0.0
        %4243 = vmatpush1.msra.mxu0 0.0
        %4244 = vmatprep.subr.mxu0 0.0
        %4245 = vmatpush1.msra.mxu0 0.0
        %4246 = vmatprep.subr.mxu0 0.0
        %4247 = vmatpush1.msra.mxu0 0.0
        %4248 = vmatprep.subr.mxu0 0.0
        %4249 = vmatpush1.msra.mxu0 0.0
        %4250 = vmatprep.subr.mxu0 0.0
        %4251 = vmatpush1.msra.mxu0 0.0
        %4252 = vmatprep.subr.mxu0 0.0
        %4253 = vmatpush1.msra.mxu0 0.0
        %4254 = vmatprep.subr.mxu0 0.0
        %4255 = vmatpush1.msra.mxu0 0.0
        %4256 = vmatprep.subr.mxu0 0.0
        %4257 = vmatpush1.msra.mxu0 0.0
        %4258 = vmatprep.subr.mxu0 0.0
        %4259 = vmatpush1.msra.mxu0 0.0
        %4260 = vmatprep.subr.mxu0 0.0
        %4261 = vmatpush1.msra.mxu0 0.0
        %4262 = vmatprep.subr.mxu0 0.0
        %4263 = vmatpush1.msra.mxu0 0.0
        %4264 = vmatprep.subr.mxu0 0.0
        %4265 = vmatpush1.msra.mxu0 %v3143
        %4266 = vmatprep.subr.mxu0 0.0
        %4267 = vmatpush2.msra.mxu0 0.0
        %4268 = vmatprep.subr.mxu0 0.0
        %4269 = vmatpush2.msra.mxu0 0.0
        %4270 = vmatprep.subr.mxu0 0.0
        %4271 = vmatpush2.msra.mxu0 0.0
        %4272 = vmatprep.subr.mxu0 0.0
        %4273 = vmatpush2.msra.mxu0 0.0
        %4274 = vmatprep.subr.mxu0 0.0
        %4275 = vmatpush2.msra.mxu0 0.0
        %4276 = vmatprep.subr.mxu0 0.0
        %4277 = vmatpush2.msra.mxu0 0.0
        %4278 = vmatprep.subr.mxu0 0.0
        %4279 = vmatpush2.msra.mxu0 0.0
        %4280 = vmatprep.subr.mxu0 0.0
        %4281 = vmatpush2.msra.mxu0 0.0
        %4282 = vmatprep.subr.mxu0 0.0
        %4283 = vmatpush2.msra.mxu0 0.0
        %4284 = vmatprep.subr.mxu0 0.0
        %4285 = vmatpush2.msra.mxu0 0.0
        %4286 = vmatprep.subr.mxu0 0.0
        %4287 = vmatpush2.msra.mxu0 0.0
        %4288 = vmatprep.subr.mxu0 0.0
        %4289 = vmatpush2.msra.mxu0 0.0
        %4290 = vmatprep.subr.mxu0 0.0
        %4291 = vmatpush2.msra.mxu0 0.0
        %4292 = vmatprep.subr.mxu0 0.0
        %4293 = vmatpush2.msra.mxu0 0.0
        %4294 = vmatprep.subr.mxu0 0.0
        %4295 = vmatpush2.msra.mxu0 0.0
        %4296 = vmatprep.subr.mxu0 0.0
        %4297 = vmatpush2.msra.mxu0 0.0
        %4298 = vmatprep.mubr.f32.mxu0 0.0
        %4299 = vmatmul.mubr.f32.gmra.mxu0 %v4232
        %v4300 = vpop.f32.mrf.mxu0
        %v4301 = vadd.f32 0.0, %v4300
        %v4302 = vpop.f32.mrf.mxu0
        %4303 = vdwg.mxu0
        %v4305 = vsel %vm2039, %v3792, 0
        %4307 = vmatprep.subr.mxu0 0.0
        %4308 = vmatpush1.msra.mxu0 0.0
        %4309 = vmatprep.subr.mxu0 0.0
        %4310 = vmatpush1.msra.mxu0 0.0
        %4311 = vmatprep.subr.mxu0 0.0
        %4312 = vmatpush1.msra.mxu0 0.0
        %4313 = vmatprep.subr.mxu0 0.0
        %4314 = vmatpush1.msra.mxu0 0.0
        %4315 = vmatprep.subr.mxu0 0.0
        %4316 = vmatpush1.msra.mxu0 0.0
        %4317 = vmatprep.subr.mxu0 0.0
        %4318 = vmatpush1.msra.mxu0 0.0
        %4319 = vmatprep.subr.mxu0 0.0
        %4320 = vmatpush1.msra.mxu0 0.0
        %4321 = vmatprep.subr.mxu0 0.0
        %4322 = vmatpush1.msra.mxu0 0.0
        %4323 = vmatprep.subr.mxu0 0.0
        %4324 = vmatpush1.msra.mxu0 0.0
        %4325 = vmatprep.subr.mxu0 0.0
        %4326 = vmatpush1.msra.mxu0 0.0
        %4327 = vmatprep.subr.mxu0 0.0
        %4328 = vmatpush1.msra.mxu0 0.0
        %4329 = vmatprep.subr.mxu0 0.0
        %4330 = vmatpush1.msra.mxu0 0.0
        %4331 = vmatprep.subr.mxu0 0.0
        %4332 = vmatpush1.msra.mxu0 0.0
        %4333 = vmatprep.subr.mxu0 0.0
        %4334 = vmatpush1.msra.mxu0 0.0
        %4335 = vmatprep.subr.mxu0 0.0
        %4336 = vmatpush1.msra.mxu0 0.0
        %4337 = vmatprep.subr.mxu0 0.0
        %4338 = vmatpush1.msra.mxu0 %v3144
        %4339 = vmatprep.subr.mxu0 0.0
        %4340 = vmatpush2.msra.mxu0 0.0
        %4341 = vmatprep.subr.mxu0 0.0
        %4342 = vmatpush2.msra.mxu0 0.0
        %4343 = vmatprep.subr.mxu0 0.0
        %4344 = vmatpush2.msra.mxu0 0.0
        %4345 = vmatprep.subr.mxu0 0.0
        %4346 = vmatpush2.msra.mxu0 0.0
        %4347 = vmatprep.subr.mxu0 0.0
        %4348 = vmatpush2.msra.mxu0 0.0
        %4349 = vmatprep.subr.mxu0 0.0
        %4350 = vmatpush2.msra.mxu0 0.0
        %4351 = vmatprep.subr.mxu0 0.0
        %4352 = vmatpush2.msra.mxu0 0.0
        %4353 = vmatprep.subr.mxu0 0.0
        %4354 = vmatpush2.msra.mxu0 0.0
        %4355 = vmatprep.subr.mxu0 0.0
        %4356 = vmatpush2.msra.mxu0 0.0
        %4357 = vmatprep.subr.mxu0 0.0
        %4358 = vmatpush2.msra.mxu0 0.0
        %4359 = vmatprep.subr.mxu0 0.0
        %4360 = vmatpush2.msra.mxu0 0.0
        %4361 = vmatprep.subr.mxu0 0.0
        %4362 = vmatpush2.msra.mxu0 0.0
        %4363 = vmatprep.subr.mxu0 0.0
        %4364 = vmatpush2.msra.mxu0 0.0
        %4365 = vmatprep.subr.mxu0 0.0
        %4366 = vmatpush2.msra.mxu0 0.0
        %4367 = vmatprep.subr.mxu0 0.0
        %4368 = vmatpush2.msra.mxu0 0.0
        %4369 = vmatprep.subr.mxu0 0.0
        %4370 = vmatpush2.msra.mxu0 0.0
        %4371 = vmatprep.mubr.f32.mxu0 0.0
        %4372 = vmatmul.mubr.f32.gmra.mxu0 %v4305
        %v4373 = vpop.f32.mrf.mxu0
        %v4374 = vadd.f32 0.0, %v4373
        %v4375 = vpop.f32.mrf.mxu0
        %4376 = vdwg.mxu0
        %v4377 = vadd.f32 %v3863, %v3936
        %v4378 = vadd.f32 %v4377, %v4009
        %v4379 = vadd.f32 %v4378, %v4082
        %v4380 = vadd.f32 %v4379, %v4155
        %v4381 = vadd.f32 %v4380, %v4228
        %v4382 = vadd.f32 %v4381, %v4301
        %v4383 = vadd.f32 %v4382, %v4374
        %v4384 = vadd.f32 %v2932, %v4383
        %4385 = vadd.xlane.f32.xlu0 %v4384
        %v4386 = vpop.xlane.xlu0 %4385
        %v4387 = vmul.f32 %v4386, %v2722
        %v4388 = vsub.f32 %v4384, %v4387
        %v4389 = vmul.f32 %v4388, %v4388
        %4390 = vadd.xlane.f32.xlu0 %v4389
        %v4391 = vpop.xlane.xlu0 %4390
        %v4392 = vmul.f32 %v4391, %v2722
        %v4393 = vadd.f32 %v4392, 1e-05
        %v4394 = vrsqrt.pop %v4393
        %v4395 = vmul.f32 %v4388, %v4394
        %v4397 = vlaneseq
        %v4398 = vshrl.u32 %v4397, 7
        %v4399 = vsub.s32 0, %v4398
        %v4400 = vrot.slane %v3124, %v4399
        %v4402 = vmul.f32 %v4395, %v4400
        %v4404 = vlaneseq
        %v4405 = vshrl.u32 %v4404, 7
        %v4406 = vsub.s32 0, %v4405
        %v4407 = vrot.slane %v3125, %v4406
        %v4409 = vadd.f32 %v4402, %v4407
        %v4411 = vlaneseq
        %v4412 = vshrl.u32 %v4411, 7
        %v4413 = vsub.s32 0, %v4412
        %v4414 = vrot.slane %v3123, %v4413
        %4416 = vmatprep.subr.mxu0 0.0
        %4417 = vmatpush1.msra.mxu0 %v3122
        %4418 = vmatprep.subr.mxu0 0.0
        %4419 = vmatpush1.msra.mxu0 %v3121
        %4420 = vmatprep.subr.mxu0 0.0
        %4421 = vmatpush1.msra.mxu0 %v3120
        %4422 = vmatprep.subr.mxu0 0.0
        %4423 = vmatpush1.msra.mxu0 %v3119
        %4424 = vmatprep.subr.mxu0 0.0
        %4425 = vmatpush1.msra.mxu0 %v3118
        %4426 = vmatprep.subr.mxu0 0.0
        %4427 = vmatpush1.msra.mxu0 %v3117
        %4428 = vmatprep.subr.mxu0 0.0
        %4429 = vmatpush1.msra.mxu0 %v3116
        %4430 = vmatprep.subr.mxu0 0.0
        %4431 = vmatpush1.msra.mxu0 %v3115
        %4432 = vmatprep.subr.mxu0 0.0
        %4433 = vmatpush1.msra.mxu0 %v3114
        %4434 = vmatprep.subr.mxu0 0.0
        %4435 = vmatpush1.msra.mxu0 %v3113
        %4436 = vmatprep.subr.mxu0 0.0
        %4437 = vmatpush1.msra.mxu0 %v3112
        %4438 = vmatprep.subr.mxu0 0.0
        %4439 = vmatpush1.msra.mxu0 %v3111
        %4440 = vmatprep.subr.mxu0 0.0
        %4441 = vmatpush1.msra.mxu0 %v3110
        %4442 = vmatprep.subr.mxu0 0.0
        %4443 = vmatpush1.msra.mxu0 %v3109
        %4444 = vmatprep.subr.mxu0 0.0
        %4445 = vmatpush1.msra.mxu0 %v3108
        %4446 = vmatprep.subr.mxu0 0.0
        %4447 = vmatpush1.msra.mxu0 %v3107
        %4448 = vmatprep.subr.mxu0 0.0
        %4449 = vmatpush2.msra.mxu0 0.0
        %4450 = vmatprep.subr.mxu0 0.0
        %4451 = vmatpush2.msra.mxu0 0.0
        %4452 = vmatprep.subr.mxu0 0.0
        %4453 = vmatpush2.msra.mxu0 0.0
        %4454 = vmatprep.subr.mxu0 0.0
        %4455 = vmatpush2.msra.mxu0 0.0
        %4456 = vmatprep.subr.mxu0 0.0
        %4457 = vmatpush2.msra.mxu0 0.0
        %4458 = vmatprep.subr.mxu0 0.0
        %4459 = vmatpush2.msra.mxu0 0.0
        %4460 = vmatprep.subr.mxu0 0.0
        %4461 = vmatpush2.msra.mxu0 0.0
        %4462 = vmatprep.subr.mxu0 0.0
        %4463 = vmatpush2.msra.mxu0 0.0
        %4464 = vmatprep.subr.mxu0 0.0
        %4465 = vmatpush2.msra.mxu0 0.0
        %4466 = vmatprep.subr.mxu0 0.0
        %4467 = vmatpush2.msra.mxu0 0.0
        %4468 = vmatprep.subr.mxu0 0.0
        %4469 = vmatpush2.msra.mxu0 0.0
        %4470 = vmatprep.subr.mxu0 0.0
        %4471 = vmatpush2.msra.mxu0 0.0
        %4472 = vmatprep.subr.mxu0 0.0
        %4473 = vmatpush2.msra.mxu0 0.0
        %4474 = vmatprep.subr.mxu0 0.0
        %4475 = vmatpush2.msra.mxu0 0.0
        %4476 = vmatprep.subr.mxu0 0.0
        %4477 = vmatpush2.msra.mxu0 0.0
        %4478 = vmatprep.subr.mxu0 0.0
        %4479 = vmatpush2.msra.mxu0 0.0
        %4480 = vmatprep.mubr.f32.mxu0 0.0
        %4481 = vmatmul.mubr.f32.gmra.mxu0 %v4409
        %v4482 = vpop.f32.mrf.mxu0
        %v4483 = vadd.f32 %v4414, %v4482
        %v4484 = vpop.f32.mrf.mxu0
        %4485 = vdwg.mxu0
        %v4486 = vmax.f32 %v4483, 0.0
        %v4487 = vadd.f32 %v4409, %v4486
        %4488 = vadd.xlane.f32.xlu0 %v4487
        %v4489 = vpop.xlane.xlu0 %4488
        %v4490 = vmul.f32 %v4489, %v2722
        %v4491 = vsub.f32 %v4487, %v4490
        %v4492 = vmul.f32 %v4491, %v4491
        %4493 = vadd.xlane.f32.xlu0 %v4492
        %v4494 = vpop.xlane.xlu0 %4493
        %v4495 = vmul.f32 %v4494, %v2722
        %v4496 = vadd.f32 %v4495, 1e-05
        %v4497 = vrsqrt.pop %v4496
        %v4498 = vmul.f32 %v4491, %v4497
        %v4500 = vlaneseq
        %v4501 = vshrl.u32 %v4500, 7
        %v4502 = vsub.s32 0, %v4501
        %v4503 = vrot.slane %v3126, %v4502
        %v4505 = vmul.f32 %v4498, %v4503
        %v4507 = vlaneseq
        %v4508 = vshrl.u32 %v4507, 7
        %v4509 = vsub.s32 0, %v4508
        %v4510 = vrot.slane %v3127, %v4509
        %v4512 = vadd.f32 %v4505, %v4510
        %4513 = vst [vmem:[%s877] sm:$0xff] %v4512
        %s4514 = sand.u32 %s654, 1
        %s4515 = scalar_lea.sflag [#allocation4], %s4514
        %s4516 = sand.u32 %s654, 1
        %s4517 = smul.addr %s4516, 8
        %s4518 = scalar_lea.vmem [#allocation5], %s4517
        // Predicated region
        $region137: #{cross_attn_encoder.1} parent=131 // pred_check
          %p4519 = pneg %p664
        $region138: #{cross_attn_encoder.1} parent=131 // pred_check_branch
          %4521 = sbr.rel (%p4519) target = $region140
        $region139: #{cross_attn_encoder.1} parent=131 // pred_region
          %s4523 = ssub.s32 128, 128
          %4524 = vsyncadd %s4515, %s4523
          %s4525 = smul.addr %s43, 128
          %s4526 = scalar_lea.hbm %s28, %s4525
          %s4528 = sshll.u32 %s4518, 4
          %s4529 = int_to_ptr.vmem [resolvable:$true] %s4528
          %4531 = dma.vmem_to_hbm [thread:$0]  %s4529, 128, %s4526, %s4515
        $region140: #{cross_attn_encoder.1} parent=131 // pred_fallthru
          _
      $region132: #{cross_attn_encoder.1} parent=5 // pred_fallthru
        _
      %p4532 = scmp.le.s32.totalorder 2, %s38
      // Predicated region
      $region141: #{cross_attn_encoder.1} parent=5 // pred_check
        %p4533 = pneg %p4532
      $region142: #{cross_attn_encoder.1} parent=5 // pred_check_branch
        %4535 = sbr.rel (%p4533) target = $region144
      $region143: #{cross_attn_encoder.1} parent=5 // pred_region
        %s4536 = ssub.s32 %s38, 2
        // Predicated region
        $region145: #{cross_attn_encoder.1} parent=143 // pred_check
          %p4537 = pneg %p670
        $region146: #{cross_attn_encoder.1} parent=143 // pred_check_branch
          %4539 = sbr.rel (%p4537) target = $region148
        $region147: #{cross_attn_encoder.1} parent=143 // pred_region
          %s4540 = sand.u32 %s655, 1
          %s4541 = scalar_lea.sflag [#allocation4], %s4540
          %s4542 = sand.u32 %s655, 1
          %s4543 = smul.addr %s4542, 8
          %s4544 = scalar_lea.vmem [#allocation5], %s4543
          %4545 = dma.done %s4541, 128
        $region148: #{cross_attn_encoder.1} parent=143 // pred_fallthru
          _
      $region144: #{cross_attn_encoder.1} parent=5 // pred_fallthru
        _
    $region6: #{cross_attn_encoder.1} parent=1 // loop_footer
      %s42 = sadd.s32 1, %s38
    $region7: #{cross_attn_encoder.1} parent=1 // loop_footer_branch
      %37 = sbr.rel target = $region3
    $region8: #{cross_attn_encoder.1} parent=1 // loop_exit
      _
    %4546 = vsyncpa [#allocation3], 1
    %s4547 = scalar_lea.sflag [#allocation3], 1
    %4548 = vsyncpa %s4547, 1
    %4549 = vsyncpa [#allocation4], 1
    %s4550 = scalar_lea.sflag [#allocation4], 1
    %4551 = vsyncpa %s4550, 1

</llo_original>
